<compile_context>
chip_gen: v6e
topology: v6e:2x2x1
jax: 0.10.0
libtpu: 0.0.40
codegen_flags: <defaults>
</compile_context>

<pallas_src>
import math

import jax
import jax.numpy as jnp
from jax.experimental import pallas as pl
from jax.experimental.pallas import tpu as pltpu


# ----------------------------------------------------------------------------
# Fused Pallas kernel: hoisted input projection -> serial LSTM recurrence ->
# batched output projection + LayerNorm.  Single invocation, everything VMEM.
# ----------------------------------------------------------------------------
def _encoder_kernel(x_ref, wih_ref, whh_ref, b_ref, wp_ref, bp_ref,
                    gamma_ref, beta_ref,
                    out_ref, hn_ref, cn_ref,
                    gx_ref):
    S, B, E = x_ref.shape
    H = whh_ref.shape[-1]

    # ---- Phase 1: input projection for ALL timesteps, hoisted off the serial
    # path.  One matmul per gate => no sub-vreg lane slicing anywhere. Bias is
    # added here once (not re-broadcast per timestep).
    x_flat = x_ref[...].reshape(S * B, E)
    for k in range(4):  # static unroll over gates i, f, g, o
        gx = jnp.dot(x_flat, wih_ref[k],
                     preferred_element_type=jnp.float32) + b_ref[k]
        gx_ref[k] = gx.reshape(S, B, H)

    # Hoist the recurrent weight loads out of the loop.
    whh_i = whh_ref[0]
    whh_f = whh_ref[1]
    whh_g = whh_ref[2]
    whh_o = whh_ref[3]

    # ---- Phase 2: serial LSTM recurrence over time.  Only h @ W_hh^T plus the
    # gate nonlinearities sit on the critical path.  Per-step h is staged into
    # out_ref (overwritten by the proj+LN epilogue below).
    def step(s, carry):
        h, c = carry
        zi = gx_ref[0, s] + jnp.dot(h, whh_i, preferred_element_type=jnp.float32)
        zf = gx_ref[1, s] + jnp.dot(h, whh_f, preferred_element_type=jnp.float32)
        zg = gx_ref[2, s] + jnp.dot(h, whh_g, preferred_element_type=jnp.float32)
        zo = gx_ref[3, s] + jnp.dot(h, whh_o, preferred_element_type=jnp.float32)
        i_g = jax.nn.sigmoid(zi)
        f_g = jax.nn.sigmoid(zf)
        g_g = jnp.tanh(zg)
        o_g = jax.nn.sigmoid(zo)
        c_new = f_g * c + i_g * g_g
        h_new = o_g * jnp.tanh(c_new)
        out_ref[s] = h_new
        return h_new, c_new

    h = jnp.zeros((B, H), jnp.float32)
    c = jnp.zeros((B, H), jnp.float32)
    if S <= 32:
        # Short sequence: fully unroll with static indices (best scheduling).
        for s in range(S):
            h, c = step(s, (h, c))
    else:
        h, c = jax.lax.fori_loop(0, S, step, (h, c))

    # Final hidden state written once in the epilogue.
    hn_ref[0] = h
    cn_ref[0] = c

    # ---- Phase 3: batched output projection + LayerNorm (no recurrence), one
    # MXU pass + one LN pass over all S*B rows, single batched writeback.
    h_all = out_ref[...].reshape(S * B, H)
    proj = jnp.dot(h_all, wp_ref[...],
                   preferred_element_type=jnp.float32) + bp_ref[...]
    mu = jnp.mean(proj, axis=-1, keepdims=True)
    var = jnp.mean(jnp.square(proj - mu), axis=-1, keepdims=True)
    xhat = (proj - mu) * jax.lax.rsqrt(var + 1e-5)
    out_ref[...] = (xhat * gamma_ref[...] + beta_ref[...]).reshape(S, B, H)


def encoder_core_pallas(x_tm, wih_t, whh_t, b, wp_t, bp, gamma, beta):
    """x_tm: (S, B, E) time-major embedded+PE input.

    wih_t: (4, E, H) per-gate input weights (transposed, gate order i,f,g,o)
    whh_t: (4, H, H) per-gate hidden weights (transposed)
    b:     (4, 1, H) per-gate combined bias (b_ih + b_hh)
    wp_t:  (H, H) output-projection weight (transposed), bp: (1, H)
    gamma/beta: (1, H) LayerNorm affine.
    Returns (out_tm (S,B,H), h_n (1,B,H), c_n (1,B,H)).
    """
    S, B, E = x_tm.shape
    H = whh_t.shape[-1]
    vmem = pl.BlockSpec(memory_space=pltpu.MemorySpace.VMEM)

    return pl.pallas_call(
        _encoder_kernel,
        out_shape=(
            jax.ShapeDtypeStruct((S, B, H), jnp.float32),
            jax.ShapeDtypeStruct((1, B, H), jnp.float32),
            jax.ShapeDtypeStruct((1, B, H), jnp.float32),
        ),
        in_specs=[vmem] * 8,
        out_specs=(vmem, vmem, vmem),
        scratch_shapes=[pltpu.VMEM((4, S, B, H), jnp.float32)],  # hoisted x@W_ih
    )(x_tm, wih_t, whh_t, b, wp_t, bp, gamma, beta)


# ----------------------------------------------------------------------------
# Parameter construction + glue (embedding lookup, PE add, transposes).
# ----------------------------------------------------------------------------
def make_positional_encoding(dim, max_len=5000):
    position = jnp.arange(max_len, dtype=jnp.float32)[:, None]
    div_term = jnp.exp(jnp.arange(0, dim, 2, dtype=jnp.float32)
                       * (-math.log(10000.0) / dim))
    pe = jnp.zeros((max_len, 1, dim), dtype=jnp.float32)
    pe = pe.at[:, 0, 0::2].set(jnp.sin(position * div_term))
    pe = pe.at[:, 0, 1::2].set(jnp.cos(position * div_term))
    return pe


def init_params(key, vocab_size, embed_dim, hidden_dim):
    ks = jax.random.split(key, 8)
    H, E = hidden_dim, embed_dim
    scale_ih = 1.0 / math.sqrt(H)
    return {
        "embedding": jax.random.normal(ks[0], (vocab_size, E), jnp.float32),
        "w_ih": jax.random.uniform(ks[1], (4 * H, E), jnp.float32, -scale_ih, scale_ih),
        "w_hh": jax.random.uniform(ks[2], (4 * H, H), jnp.float32, -scale_ih, scale_ih),
        "b_ih": jax.random.uniform(ks[3], (4 * H,), jnp.float32, -scale_ih, scale_ih),
        "b_hh": jax.random.uniform(ks[4], (4 * H,), jnp.float32, -scale_ih, scale_ih),
        "w_proj": jax.random.uniform(ks[5], (H, H), jnp.float32, -scale_ih, scale_ih),
        "b_proj": jax.random.uniform(ks[6], (H,), jnp.float32, -scale_ih, scale_ih),
        "ln_gamma": jnp.ones((H,), jnp.float32),
        "ln_beta": jnp.zeros((H,), jnp.float32),
        "pe": make_positional_encoding(E),
    }


def sequence_encoder_forward(ids, params):
    """ids: (B, S) int32 token ids.  Returns (outputs (B,S,H), (h_n, c_n))."""
    # Embedding gather + positional encoding stay in XLA (trivially parallel).
    emb = params["embedding"][ids]                    # (B, S, E)
    S = ids.shape[1]
    emb = emb + params["pe"][:S]                      # exact PyTorch broadcast semantics
    x_tm = jnp.swapaxes(emb, 0, 1)                    # (S, B, E) time-major

    H = params["w_hh"].shape[1]
    E = params["w_ih"].shape[1]
    # Pre-split weights per gate (PyTorch gate order i, f, g, o) and transpose.
    wih_t = jnp.transpose(params["w_ih"].reshape(4, H, E), (0, 2, 1))   # (4, E, H)
    whh_t = jnp.transpose(params["w_hh"].reshape(4, H, H), (0, 2, 1))   # (4, H, H)
    b = (params["b_ih"] + params["b_hh"]).reshape(4, 1, H)              # (4, 1, H)

    out_tm, h_n, c_n = encoder_core_pallas(
        x_tm, wih_t, whh_t, b,
        params["w_proj"].T,                           # (H, H)
        params["b_proj"].reshape(1, H),
        params["ln_gamma"].reshape(1, H),
        params["ln_beta"].reshape(1, H),
    )
    outputs = jnp.swapaxes(out_tm, 0, 1)              # back to (B, S, H)
    return outputs, (h_n, c_n)


# ----------------------------------------------------------------------------
# Pure-JAX reference for validation.
# ----------------------------------------------------------------------------
def reference_forward(ids, params):
    emb = params["embedding"][ids]
    emb = emb + params["pe"][:ids.shape[1]]
    B = emb.shape[0]
    H = params["w_hh"].shape[1]
    hi = jax.lax.Precision.HIGHEST

    def step(carry, x_t):
        h, c = carry
        gates = (jnp.dot(x_t, params["w_ih"].T, precision=hi) + params["b_ih"]
                 + jnp.dot(h, params["w_hh"].T, precision=hi) + params["b_hh"])
        i, f, g, o = jnp.split(gates, 4, axis=-1)
        i, f, g, o = jax.nn.sigmoid(i), jax.nn.sigmoid(f), jnp.tanh(g), jax.nn.sigmoid(o)
        c = f * c + i * g
        h = o * jnp.tanh(c)
        return (h, c), h

    init = (jnp.zeros((B, H)), jnp.zeros((B, H)))
    (h_n, c_n), hs = jax.lax.scan(step, init, jnp.swapaxes(emb, 0, 1))
    outputs = jnp.swapaxes(hs, 0, 1)                  # (B, S, H)
    proj = jnp.dot(outputs, params["w_proj"].T, precision=hi) + params["b_proj"]
    mu = jnp.mean(proj, axis=-1, keepdims=True)
    var = jnp.mean(jnp.square(proj - mu), axis=-1, keepdims=True)
    out = (proj - mu) * jax.lax.rsqrt(var + 1e-5) * params["ln_gamma"] + params["ln_beta"]
    return out, (h_n[None], c_n[None])


if __name__ == "__main__":
    vocab_size, embed_dim, hidden_dim = 50, 16, 32
    batch, seq = 8, 8     # B == S required by the original module's PE broadcast

    key = jax.random.PRNGKey(0)
    k_params, k_ids = jax.random.split(key)
    params = init_params(k_params, vocab_size, embed_dim, hidden_dim)
    ids = jax.random.randint(k_ids, (batch, seq), 0, vocab_size, dtype=jnp.int32)

    fwd = jax.jit(sequence_encoder_forward)
    outputs, (h_n, c_n) = jax.block_until_ready(fwd(ids, params))

    ref_out, (ref_h, ref_c) = reference_forward(ids, params)
    assert outputs.shape == (batch, seq, hidden_dim)
    assert h_n.shape == (1, batch, hidden_dim) and c_n.shape == (1, batch, hidden_dim)
    assert jnp.allclose(outputs, ref_out, atol=2e-3, rtol=2e-3), "outputs mismatch"
    assert jnp.allclose(h_n, ref_h, atol=2e-3, rtol=2e-3), "h_n mismatch"
    assert jnp.allclose(c_n, ref_c, atol=2e-3, rtol=2e-3), "c_n mismatch"

    print("KERNEL_OK")
</pallas_src>

<mosaic_0001>
module attributes {stable_mosaic.version = 11 : i64} {
  func.func @_encoder_kernel(%arg0: memref<8x8x16xf32, #tpu.memory_space<vmem>>, %arg1: memref<4x16x32xf32, #tpu.memory_space<vmem>>, %arg2: memref<4x32x32xf32, #tpu.memory_space<vmem>>, %arg3: memref<4x1x32xf32, #tpu.memory_space<vmem>>, %arg4: memref<32x32xf32, #tpu.memory_space<vmem>>, %arg5: memref<1x32xf32, #tpu.memory_space<vmem>>, %arg6: memref<1x32xf32, #tpu.memory_space<vmem>>, %arg7: memref<1x32xf32, #tpu.memory_space<vmem>>, %arg8: memref<8x8x32xf32, #tpu.memory_space<vmem>>, %arg9: memref<1x8x32xf32, #tpu.memory_space<vmem>>, %arg10: memref<1x8x32xf32, #tpu.memory_space<vmem>>, %arg11: memref<4x8x8x32xf32, #tpu.memory_space<vmem>>) attributes {dimension_semantics = [], scalar_prefetch = 0 : i64, scratch_operands = 1 : i64, tpu.core_type = #tpu.core_type<tc>} {
    %c0 = arith.constant 0 : index
    %c0_0 = arith.constant 0 : index
    %c0_1 = arith.constant 0 : index
    %0 = vector.load %arg0[%c0, %c0_0, %c0_1] : memref<8x8x16xf32, #tpu.memory_space<vmem>>, vector<8x8x16xf32>
    %1 = vector.shape_cast %0 : vector<8x8x16xf32> to vector<64x16xf32>
    %c0_2 = arith.constant 0 : index
    %c0_3 = arith.constant 0 : index
    %c0_4 = arith.constant 0 : index
    %2 = vector.load %arg1[%c0_2, %c0_3, %c0_4] : memref<4x16x32xf32, #tpu.memory_space<vmem>>, vector<1x16x32xf32>
    %3 = vector.shape_cast %2 : vector<1x16x32xf32> to vector<16x32xf32>
    %cst = arith.constant dense<0.000000e+00> : vector<64x32xf32>
    %4 = tpu.matmul %1, %3, %cst {dimension_numbers = #tpu.dot_dimension_numbers<[1], [0], [0], [1], [0, 0, 1, 1], [], []>} : vector<64x16xf32>, vector<16x32xf32>, vector<64x32xf32> -> vector<64x32xf32>
    %c0_5 = arith.constant 0 : index
    %c0_6 = arith.constant 0 : index
    %c0_7 = arith.constant 0 : index
    %5 = vector.load %arg3[%c0_5, %c0_6, %c0_7] : memref<4x1x32xf32, #tpu.memory_space<vmem>>, vector<1x1x32xf32>
    %6 = vector.shape_cast %5 : vector<1x1x32xf32> to vector<1x32xf32>
    %7 = vector.broadcast %6 : vector<1x32xf32> to vector<64x32xf32>
    %8 = arith.addf %4, %7 : vector<64x32xf32>
    %9 = vector.shape_cast %8 : vector<64x32xf32> to vector<8x8x32xf32>
    %c0_8 = arith.constant 0 : index
    %c0_9 = arith.constant 0 : index
    %c0_10 = arith.constant 0 : index
    %c0_11 = arith.constant 0 : index
    %10 = vector.load %arg11[%c0_8, %c0_9, %c0_10, %c0_11] : memref<4x8x8x32xf32, #tpu.memory_space<vmem>>, vector<1x8x8x32xf32>
    %11 = vector.shape_cast %10 : vector<1x8x8x32xf32> to vector<8x8x32xf32>
    %12 = vector.shape_cast %9 : vector<8x8x32xf32> to vector<1x8x8x32xf32>
    tpu.vector_store %arg11[%c0_8, %c0_9, %c0_10, %c0_11], %12 {strides = array<i32>} : memref<4x8x8x32xf32, #tpu.memory_space<vmem>>, vector<1x8x8x32xf32>,
    %c1 = arith.constant 1 : index
    %c0_12 = arith.constant 0 : index
    %c0_13 = arith.constant 0 : index
    %13 = vector.load %arg1[%c1, %c0_12, %c0_13] : memref<4x16x32xf32, #tpu.memory_space<vmem>>, vector<1x16x32xf32>
    %14 = vector.shape_cast %13 : vector<1x16x32xf32> to vector<16x32xf32>
    %cst_14 = arith.constant dense<0.000000e+00> : vector<64x32xf32>
    %15 = tpu.matmul %1, %14, %cst_14 {dimension_numbers = #tpu.dot_dimension_numbers<[1], [0], [0], [1], [0, 0, 1, 1], [], []>} : vector<64x16xf32>, vector<16x32xf32>, vector<64x32xf32> -> vector<64x32xf32>
    %c1_15 = arith.constant 1 : index
    %c0_16 = arith.constant 0 : index
    %c0_17 = arith.constant 0 : index
    %16 = vector.load %arg3[%c1_15, %c0_16, %c0_17] : memref<4x1x32xf32, #tpu.memory_space<vmem>>, vector<1x1x32xf32>
    %17 = vector.shape_cast %16 : vector<1x1x32xf32> to vector<1x32xf32>
    %18 = vector.broadcast %17 : vector<1x32xf32> to vector<64x32xf32>
    %19 = arith.addf %15, %18 : vector<64x32xf32>
    %20 = vector.shape_cast %19 : vector<64x32xf32> to vector<8x8x32xf32>
    %c1_18 = arith.constant 1 : index
    %c0_19 = arith.constant 0 : index
    %c0_20 = arith.constant 0 : index
    %c0_21 = arith.constant 0 : index
    %21 = vector.load %arg11[%c1_18, %c0_19, %c0_20, %c0_21] : memref<4x8x8x32xf32, #tpu.memory_space<vmem>>, vector<1x8x8x32xf32>
    %22 = vector.shape_cast %21 : vector<1x8x8x32xf32> to vector<8x8x32xf32>
    %23 = vector.shape_cast %20 : vector<8x8x32xf32> to vector<1x8x8x32xf32>
    tpu.vector_store %arg11[%c1_18, %c0_19, %c0_20, %c0_21], %23 {strides = array<i32>} : memref<4x8x8x32xf32, #tpu.memory_space<vmem>>, vector<1x8x8x32xf32>,
    %c2 = arith.constant 2 : index
    %c0_22 = arith.constant 0 : index
    %c0_23 = arith.constant 0 : index
    %24 = vector.load %arg1[%c2, %c0_22, %c0_23] : memref<4x16x32xf32, #tpu.memory_space<vmem>>, vector<1x16x32xf32>
    %25 = vector.shape_cast %24 : vector<1x16x32xf32> to vector<16x32xf32>
    %cst_24 = arith.constant dense<0.000000e+00> : vector<64x32xf32>
    %26 = tpu.matmul %1, %25, %cst_24 {dimension_numbers = #tpu.dot_dimension_numbers<[1], [0], [0], [1], [0, 0, 1, 1], [], []>} : vector<64x16xf32>, vector<16x32xf32>, vector<64x32xf32> -> vector<64x32xf32>
    %c2_25 = arith.constant 2 : index
    %c0_26 = arith.constant 0 : index
    %c0_27 = arith.constant 0 : index
    %27 = vector.load %arg3[%c2_25, %c0_26, %c0_27] : memref<4x1x32xf32, #tpu.memory_space<vmem>>, vector<1x1x32xf32>
    %28 = vector.shape_cast %27 : vector<1x1x32xf32> to vector<1x32xf32>
    %29 = vector.broadcast %28 : vector<1x32xf32> to vector<64x32xf32>
    %30 = arith.addf %26, %29 : vector<64x32xf32>
    %31 = vector.shape_cast %30 : vector<64x32xf32> to vector<8x8x32xf32>
    %c2_28 = arith.constant 2 : index
    %c0_29 = arith.constant 0 : index
    %c0_30 = arith.constant 0 : index
    %c0_31 = arith.constant 0 : index
    %32 = vector.load %arg11[%c2_28, %c0_29, %c0_30, %c0_31] : memref<4x8x8x32xf32, #tpu.memory_space<vmem>>, vector<1x8x8x32xf32>
    %33 = vector.shape_cast %32 : vector<1x8x8x32xf32> to vector<8x8x32xf32>
    %34 = vector.shape_cast %31 : vector<8x8x32xf32> to vector<1x8x8x32xf32>
    tpu.vector_store %arg11[%c2_28, %c0_29, %c0_30, %c0_31], %34 {strides = array<i32>} : memref<4x8x8x32xf32, #tpu.memory_space<vmem>>, vector<1x8x8x32xf32>,
    %c3 = arith.constant 3 : index
    %c0_32 = arith.constant 0 : index
    %c0_33 = arith.constant 0 : index
    %35 = vector.load %arg1[%c3, %c0_32, %c0_33] : memref<4x16x32xf32, #tpu.memory_space<vmem>>, vector<1x16x32xf32>
    %36 = vector.shape_cast %35 : vector<1x16x32xf32> to vector<16x32xf32>
    %cst_34 = arith.constant dense<0.000000e+00> : vector<64x32xf32>
    %37 = tpu.matmul %1, %36, %cst_34 {dimension_numbers = #tpu.dot_dimension_numbers<[1], [0], [0], [1], [0, 0, 1, 1], [], []>} : vector<64x16xf32>, vector<16x32xf32>, vector<64x32xf32> -> vector<64x32xf32>
    %c3_35 = arith.constant 3 : index
    %c0_36 = arith.constant 0 : index
    %c0_37 = arith.constant 0 : index
    %38 = vector.load %arg3[%c3_35, %c0_36, %c0_37] : memref<4x1x32xf32, #tpu.memory_space<vmem>>, vector<1x1x32xf32>
    %39 = vector.shape_cast %38 : vector<1x1x32xf32> to vector<1x32xf32>
    %40 = vector.broadcast %39 : vector<1x32xf32> to vector<64x32xf32>
    %41 = arith.addf %37, %40 : vector<64x32xf32>
    %42 = vector.shape_cast %41 : vector<64x32xf32> to vector<8x8x32xf32>
    %c3_38 = arith.constant 3 : index
    %c0_39 = arith.constant 0 : index
    %c0_40 = arith.constant 0 : index
    %c0_41 = arith.constant 0 : index
    %43 = vector.load %arg11[%c3_38, %c0_39, %c0_40, %c0_41] : memref<4x8x8x32xf32, #tpu.memory_space<vmem>>, vector<1x8x8x32xf32>
    %44 = vector.shape_cast %43 : vector<1x8x8x32xf32> to vector<8x8x32xf32>
    %45 = vector.shape_cast %42 : vector<8x8x32xf32> to vector<1x8x8x32xf32>
    tpu.vector_store %arg11[%c3_38, %c0_39, %c0_40, %c0_41], %45 {strides = array<i32>} : memref<4x8x8x32xf32, #tpu.memory_space<vmem>>, vector<1x8x8x32xf32>,
    %c0_42 = arith.constant 0 : index
    %c0_43 = arith.constant 0 : index
    %c0_44 = arith.constant 0 : index
    %46 = vector.load %arg2[%c0_42, %c0_43, %c0_44] : memref<4x32x32xf32, #tpu.memory_space<vmem>>, vector<1x32x32xf32>
    %47 = vector.shape_cast %46 : vector<1x32x32xf32> to vector<32x32xf32>
    %c1_45 = arith.constant 1 : index
    %c0_46 = arith.constant 0 : index
    %c0_47 = arith.constant 0 : index
    %48 = vector.load %arg2[%c1_45, %c0_46, %c0_47] : memref<4x32x32xf32, #tpu.memory_space<vmem>>, vector<1x32x32xf32>
    %49 = vector.shape_cast %48 : vector<1x32x32xf32> to vector<32x32xf32>
    %c2_48 = arith.constant 2 : index
    %c0_49 = arith.constant 0 : index
    %c0_50 = arith.constant 0 : index
    %50 = vector.load %arg2[%c2_48, %c0_49, %c0_50] : memref<4x32x32xf32, #tpu.memory_space<vmem>>, vector<1x32x32xf32>
    %51 = vector.shape_cast %50 : vector<1x32x32xf32> to vector<32x32xf32>
    %c3_51 = arith.constant 3 : index
    %c0_52 = arith.constant 0 : index
    %c0_53 = arith.constant 0 : index
    %52 = vector.load %arg2[%c3_51, %c0_52, %c0_53] : memref<4x32x32xf32, #tpu.memory_space<vmem>>, vector<1x32x32xf32>
    %53 = vector.shape_cast %52 : vector<1x32x32xf32> to vector<32x32xf32>
    %cst_54 = arith.constant 0.000000e+00 : f32
    %54 = vector.broadcast %cst_54 : f32 to vector<8x32xf32>
    %cst_55 = arith.constant 0.000000e+00 : f32
    %55 = vector.broadcast %cst_55 : f32 to vector<8x32xf32>
    %c0_56 = arith.constant 0 : index
    %c0_57 = arith.constant 0 : index
    %c0_58 = arith.constant 0 : index
    %c0_59 = arith.constant 0 : index
    %56 = vector.load %arg11[%c0_56, %c0_57, %c0_58, %c0_59] : memref<4x8x8x32xf32, #tpu.memory_space<vmem>>, vector<1x1x8x32xf32>
    %57 = vector.shape_cast %56 : vector<1x1x8x32xf32> to vector<8x32xf32>
    %cst_60 = arith.constant dense<0.000000e+00> : vector<8x32xf32>
    %58 = tpu.matmul %54, %47, %cst_60 {dimension_numbers = #tpu.dot_dimension_numbers<[1], [0], [0], [1], [0, 0, 1, 1], [], []>} : vector<8x32xf32>, vector<32x32xf32>, vector<8x32xf32> -> vector<8x32xf32>
    %59 = arith.addf %57, %58 : vector<8x32xf32>
    %c1_61 = arith.constant 1 : index
    %c0_62 = arith.constant 0 : index
    %c0_63 = arith.constant 0 : index
    %c0_64 = arith.constant 0 : index
    %60 = vector.load %arg11[%c1_61, %c0_62, %c0_63, %c0_64] : memref<4x8x8x32xf32, #tpu.memory_space<vmem>>, vector<1x1x8x32xf32>
    %61 = vector.shape_cast %60 : vector<1x1x8x32xf32> to vector<8x32xf32>
    %cst_65 = arith.constant dense<0.000000e+00> : vector<8x32xf32>
    %62 = tpu.matmul %54, %49, %cst_65 {dimension_numbers = #tpu.dot_dimension_numbers<[1], [0], [0], [1], [0, 0, 1, 1], [], []>} : vector<8x32xf32>, vector<32x32xf32>, vector<8x32xf32> -> vector<8x32xf32>
    %63 = arith.addf %61, %62 : vector<8x32xf32>
    %c2_66 = arith.constant 2 : index
    %c0_67 = arith.constant 0 : index
    %c0_68 = arith.constant 0 : index
    %c0_69 = arith.constant 0 : index
    %64 = vector.load %arg11[%c2_66, %c0_67, %c0_68, %c0_69] : memref<4x8x8x32xf32, #tpu.memory_space<vmem>>, vector<1x1x8x32xf32>
    %65 = vector.shape_cast %64 : vector<1x1x8x32xf32> to vector<8x32xf32>
    %cst_70 = arith.constant dense<0.000000e+00> : vector<8x32xf32>
    %66 = tpu.matmul %54, %51, %cst_70 {dimension_numbers = #tpu.dot_dimension_numbers<[1], [0], [0], [1], [0, 0, 1, 1], [], []>} : vector<8x32xf32>, vector<32x32xf32>, vector<8x32xf32> -> vector<8x32xf32>
    %67 = arith.addf %65, %66 : vector<8x32xf32>
    %c3_71 = arith.constant 3 : index
    %c0_72 = arith.constant 0 : index
    %c0_73 = arith.constant 0 : index
    %c0_74 = arith.constant 0 : index
    %68 = vector.load %arg11[%c3_71, %c0_72, %c0_73, %c0_74] : memref<4x8x8x32xf32, #tpu.memory_space<vmem>>, vector<1x1x8x32xf32>
    %69 = vector.shape_cast %68 : vector<1x1x8x32xf32> to vector<8x32xf32>
    %cst_75 = arith.constant dense<0.000000e+00> : vector<8x32xf32>
    %70 = tpu.matmul %54, %53, %cst_75 {dimension_numbers = #tpu.dot_dimension_numbers<[1], [0], [0], [1], [0, 0, 1, 1], [], []>} : vector<8x32xf32>, vector<32x32xf32>, vector<8x32xf32> -> vector<8x32xf32>
    %71 = arith.addf %69, %70 : vector<8x32xf32>
    %72 = arith.negf %59 : vector<8x32xf32>
    %73 = math.exp %72 : vector<8x32xf32>
    %cst_76 = arith.constant 1.000000e+00 : f32
    %74 = vector.broadcast %cst_76 : f32 to vector<8x32xf32>
    %75 = arith.addf %74, %73 : vector<8x32xf32>
    %76 = arith.divf %74, %75 : vector<8x32xf32>
    %77 = arith.negf %63 : vector<8x32xf32>
    %78 = math.exp %77 : vector<8x32xf32>
    %cst_77 = arith.constant 1.000000e+00 : f32
    %79 = vector.broadcast %cst_77 : f32 to vector<8x32xf32>
    %80 = arith.addf %79, %78 : vector<8x32xf32>
    %81 = arith.divf %79, %80 : vector<8x32xf32>
    %82 = math.tanh %67 : vector<8x32xf32>
    %83 = arith.negf %71 : vector<8x32xf32>
    %84 = math.exp %83 : vector<8x32xf32>
    %cst_78 = arith.constant 1.000000e+00 : f32
    %85 = vector.broadcast %cst_78 : f32 to vector<8x32xf32>
    %86 = arith.addf %85, %84 : vector<8x32xf32>
    %87 = arith.divf %85, %86 : vector<8x32xf32>
    %88 = arith.mulf %81, %55 : vector<8x32xf32>
    %89 = arith.mulf %76, %82 : vector<8x32xf32>
    %90 = arith.addf %88, %89 : vector<8x32xf32>
    %91 = math.tanh %90 : vector<8x32xf32>
    %92 = arith.mulf %87, %91 : vector<8x32xf32>
    %c0_79 = arith.constant 0 : index
    %c0_80 = arith.constant 0 : index
    %c0_81 = arith.constant 0 : index
    %93 = vector.load %arg8[%c0_79, %c0_80, %c0_81] : memref<8x8x32xf32, #tpu.memory_space<vmem>>, vector<1x8x32xf32>
    %94 = vector.shape_cast %93 : vector<1x8x32xf32> to vector<8x32xf32>
    %95 = vector.shape_cast %92 : vector<8x32xf32> to vector<1x8x32xf32>
    tpu.vector_store %arg8[%c0_79, %c0_80, %c0_81], %95 {strides = array<i32>} : memref<8x8x32xf32, #tpu.memory_space<vmem>>, vector<1x8x32xf32>,
    %c0_82 = arith.constant 0 : index
    %c1_83 = arith.constant 1 : index
    %c0_84 = arith.constant 0 : index
    %c0_85 = arith.constant 0 : index
    %96 = vector.load %arg11[%c0_82, %c1_83, %c0_84, %c0_85] : memref<4x8x8x32xf32, #tpu.memory_space<vmem>>, vector<1x1x8x32xf32>
    %97 = vector.shape_cast %96 : vector<1x1x8x32xf32> to vector<8x32xf32>
    %cst_86 = arith.constant dense<0.000000e+00> : vector<8x32xf32>
    %98 = tpu.matmul %92, %47, %cst_86 {dimension_numbers = #tpu.dot_dimension_numbers<[1], [0], [0], [1], [0, 0, 1, 1], [], []>} : vector<8x32xf32>, vector<32x32xf32>, vector<8x32xf32> -> vector<8x32xf32>
    %99 = arith.addf %97, %98 : vector<8x32xf32>
    %c1_87 = arith.constant 1 : index
    %c1_88 = arith.constant 1 : index
    %c0_89 = arith.constant 0 : index
    %c0_90 = arith.constant 0 : index
    %100 = vector.load %arg11[%c1_87, %c1_88, %c0_89, %c0_90] : memref<4x8x8x32xf32, #tpu.memory_space<vmem>>, vector<1x1x8x32xf32>
    %101 = vector.shape_cast %100 : vector<1x1x8x32xf32> to vector<8x32xf32>
    %cst_91 = arith.constant dense<0.000000e+00> : vector<8x32xf32>
    %102 = tpu.matmul %92, %49, %cst_91 {dimension_numbers = #tpu.dot_dimension_numbers<[1], [0], [0], [1], [0, 0, 1, 1], [], []>} : vector<8x32xf32>, vector<32x32xf32>, vector<8x32xf32> -> vector<8x32xf32>
    %103 = arith.addf %101, %102 : vector<8x32xf32>
    %c2_92 = arith.constant 2 : index
    %c1_93 = arith.constant 1 : index
    %c0_94 = arith.constant 0 : index
    %c0_95 = arith.constant 0 : index
    %104 = vector.load %arg11[%c2_92, %c1_93, %c0_94, %c0_95] : memref<4x8x8x32xf32, #tpu.memory_space<vmem>>, vector<1x1x8x32xf32>
    %105 = vector.shape_cast %104 : vector<1x1x8x32xf32> to vector<8x32xf32>
    %cst_96 = arith.constant dense<0.000000e+00> : vector<8x32xf32>
    %106 = tpu.matmul %92, %51, %cst_96 {dimension_numbers = #tpu.dot_dimension_numbers<[1], [0], [0], [1], [0, 0, 1, 1], [], []>} : vector<8x32xf32>, vector<32x32xf32>, vector<8x32xf32> -> vector<8x32xf32>
    %107 = arith.addf %105, %106 : vector<8x32xf32>
    %c3_97 = arith.constant 3 : index
    %c1_98 = arith.constant 1 : index
    %c0_99 = arith.constant 0 : index
    %c0_100 = arith.constant 0 : index
    %108 = vector.load %arg11[%c3_97, %c1_98, %c0_99, %c0_100] : memref<4x8x8x32xf32, #tpu.memory_space<vmem>>, vector<1x1x8x32xf32>
    %109 = vector.shape_cast %108 : vector<1x1x8x32xf32> to vector<8x32xf32>
    %cst_101 = arith.constant dense<0.000000e+00> : vector<8x32xf32>
    %110 = tpu.matmul %92, %53, %cst_101 {dimension_numbers = #tpu.dot_dimension_numbers<[1], [0], [0], [1], [0, 0, 1, 1], [], []>} : vector<8x32xf32>, vector<32x32xf32>, vector<8x32xf32> -> vector<8x32xf32>
    %111 = arith.addf %109, %110 : vector<8x32xf32>
    %112 = arith.negf %99 : vector<8x32xf32>
    %113 = math.exp %112 : vector<8x32xf32>
    %cst_102 = arith.constant 1.000000e+00 : f32
    %114 = vector.broadcast %cst_102 : f32 to vector<8x32xf32>
    %115 = arith.addf %114, %113 : vector<8x32xf32>
    %116 = arith.divf %114, %115 : vector<8x32xf32>
    %117 = arith.negf %103 : vector<8x32xf32>
    %118 = math.exp %117 : vector<8x32xf32>
    %cst_103 = arith.constant 1.000000e+00 : f32
    %119 = vector.broadcast %cst_103 : f32 to vector<8x32xf32>
    %120 = arith.addf %119, %118 : vector<8x32xf32>
    %121 = arith.divf %119, %120 : vector<8x32xf32>
    %122 = math.tanh %107 : vector<8x32xf32>
    %123 = arith.negf %111 : vector<8x32xf32>
    %124 = math.exp %123 : vector<8x32xf32>
    %cst_104 = arith.constant 1.000000e+00 : f32
    %125 = vector.broadcast %cst_104 : f32 to vector<8x32xf32>
    %126 = arith.addf %125, %124 : vector<8x32xf32>
    %127 = arith.divf %125, %126 : vector<8x32xf32>
    %128 = arith.mulf %121, %90 : vector<8x32xf32>
    %129 = arith.mulf %116, %122 : vector<8x32xf32>
    %130 = arith.addf %128, %129 : vector<8x32xf32>
    %131 = math.tanh %130 : vector<8x32xf32>
    %132 = arith.mulf %127, %131 : vector<8x32xf32>
    %c1_105 = arith.constant 1 : index
    %c0_106 = arith.constant 0 : index
    %c0_107 = arith.constant 0 : index
    %133 = vector.load %arg8[%c1_105, %c0_106, %c0_107] : memref<8x8x32xf32, #tpu.memory_space<vmem>>, vector<1x8x32xf32>
    %134 = vector.shape_cast %133 : vector<1x8x32xf32> to vector<8x32xf32>
    %135 = vector.shape_cast %132 : vector<8x32xf32> to vector<1x8x32xf32>
    tpu.vector_store %arg8[%c1_105, %c0_106, %c0_107], %135 {strides = array<i32>} : memref<8x8x32xf32, #tpu.memory_space<vmem>>, vector<1x8x32xf32>,
    %c0_108 = arith.constant 0 : index
    %c2_109 = arith.constant 2 : index
    %c0_110 = arith.constant 0 : index
    %c0_111 = arith.constant 0 : index
    %136 = vector.load %arg11[%c0_108, %c2_109, %c0_110, %c0_111] : memref<4x8x8x32xf32, #tpu.memory_space<vmem>>, vector<1x1x8x32xf32>
    %137 = vector.shape_cast %136 : vector<1x1x8x32xf32> to vector<8x32xf32>
    %cst_112 = arith.constant dense<0.000000e+00> : vector<8x32xf32>
    %138 = tpu.matmul %132, %47, %cst_112 {dimension_numbers = #tpu.dot_dimension_numbers<[1], [0], [0], [1], [0, 0, 1, 1], [], []>} : vector<8x32xf32>, vector<32x32xf32>, vector<8x32xf32> -> vector<8x32xf32>
    %139 = arith.addf %137, %138 : vector<8x32xf32>
    %c1_113 = arith.constant 1 : index
    %c2_114 = arith.constant 2 : index
    %c0_115 = arith.constant 0 : index
    %c0_116 = arith.constant 0 : index
    %140 = vector.load %arg11[%c1_113, %c2_114, %c0_115, %c0_116] : memref<4x8x8x32xf32, #tpu.memory_space<vmem>>, vector<1x1x8x32xf32>
    %141 = vector.shape_cast %140 : vector<1x1x8x32xf32> to vector<8x32xf32>
    %cst_117 = arith.constant dense<0.000000e+00> : vector<8x32xf32>
    %142 = tpu.matmul %132, %49, %cst_117 {dimension_numbers = #tpu.dot_dimension_numbers<[1], [0], [0], [1], [0, 0, 1, 1], [], []>} : vector<8x32xf32>, vector<32x32xf32>, vector<8x32xf32> -> vector<8x32xf32>
    %143 = arith.addf %141, %142 : vector<8x32xf32>
    %c2_118 = arith.constant 2 : index
    %c2_119 = arith.constant 2 : index
    %c0_120 = arith.constant 0 : index
    %c0_121 = arith.constant 0 : index
    %144 = vector.load %arg11[%c2_118, %c2_119, %c0_120, %c0_121] : memref<4x8x8x32xf32, #tpu.memory_space<vmem>>, vector<1x1x8x32xf32>
    %145 = vector.shape_cast %144 : vector<1x1x8x32xf32> to vector<8x32xf32>
    %cst_122 = arith.constant dense<0.000000e+00> : vector<8x32xf32>
    %146 = tpu.matmul %132, %51, %cst_122 {dimension_numbers = #tpu.dot_dimension_numbers<[1], [0], [0], [1], [0, 0, 1, 1], [], []>} : vector<8x32xf32>, vector<32x32xf32>, vector<8x32xf32> -> vector<8x32xf32>
    %147 = arith.addf %145, %146 : vector<8x32xf32>
    %c3_123 = arith.constant 3 : index
    %c2_124 = arith.constant 2 : index
    %c0_125 = arith.constant 0 : index
    %c0_126 = arith.constant 0 : index
    %148 = vector.load %arg11[%c3_123, %c2_124, %c0_125, %c0_126] : memref<4x8x8x32xf32, #tpu.memory_space<vmem>>, vector<1x1x8x32xf32>
    %149 = vector.shape_cast %148 : vector<1x1x8x32xf32> to vector<8x32xf32>
    %cst_127 = arith.constant dense<0.000000e+00> : vector<8x32xf32>
    %150 = tpu.matmul %132, %53, %cst_127 {dimension_numbers = #tpu.dot_dimension_numbers<[1], [0], [0], [1], [0, 0, 1, 1], [], []>} : vector<8x32xf32>, vector<32x32xf32>, vector<8x32xf32> -> vector<8x32xf32>
    %151 = arith.addf %149, %150 : vector<8x32xf32>
    %152 = arith.negf %139 : vector<8x32xf32>
    %153 = math.exp %152 : vector<8x32xf32>
    %cst_128 = arith.constant 1.000000e+00 : f32
    %154 = vector.broadcast %cst_128 : f32 to vector<8x32xf32>
    %155 = arith.addf %154, %153 : vector<8x32xf32>
    %156 = arith.divf %154, %155 : vector<8x32xf32>
    %157 = arith.negf %143 : vector<8x32xf32>
    %158 = math.exp %157 : vector<8x32xf32>
    %cst_129 = arith.constant 1.000000e+00 : f32
    %159 = vector.broadcast %cst_129 : f32 to vector<8x32xf32>
    %160 = arith.addf %159, %158 : vector<8x32xf32>
    %161 = arith.divf %159, %160 : vector<8x32xf32>
    %162 = math.tanh %147 : vector<8x32xf32>
    %163 = arith.negf %151 : vector<8x32xf32>
    %164 = math.exp %163 : vector<8x32xf32>
    %cst_130 = arith.constant 1.000000e+00 : f32
    %165 = vector.broadcast %cst_130 : f32 to vector<8x32xf32>
    %166 = arith.addf %165, %164 : vector<8x32xf32>
    %167 = arith.divf %165, %166 : vector<8x32xf32>
    %168 = arith.mulf %161, %130 : vector<8x32xf32>
    %169 = arith.mulf %156, %162 : vector<8x32xf32>
    %170 = arith.addf %168, %169 : vector<8x32xf32>
    %171 = math.tanh %170 : vector<8x32xf32>
    %172 = arith.mulf %167, %171 : vector<8x32xf32>
    %c2_131 = arith.constant 2 : index
    %c0_132 = arith.constant 0 : index
    %c0_133 = arith.constant 0 : index
    %173 = vector.load %arg8[%c2_131, %c0_132, %c0_133] : memref<8x8x32xf32, #tpu.memory_space<vmem>>, vector<1x8x32xf32>
    %174 = vector.shape_cast %173 : vector<1x8x32xf32> to vector<8x32xf32>
    %175 = vector.shape_cast %172 : vector<8x32xf32> to vector<1x8x32xf32>
    tpu.vector_store %arg8[%c2_131, %c0_132, %c0_133], %175 {strides = array<i32>} : memref<8x8x32xf32, #tpu.memory_space<vmem>>, vector<1x8x32xf32>,
    %c0_134 = arith.constant 0 : index
    %c3_135 = arith.constant 3 : index
    %c0_136 = arith.constant 0 : index
    %c0_137 = arith.constant 0 : index
    %176 = vector.load %arg11[%c0_134, %c3_135, %c0_136, %c0_137] : memref<4x8x8x32xf32, #tpu.memory_space<vmem>>, vector<1x1x8x32xf32>
    %177 = vector.shape_cast %176 : vector<1x1x8x32xf32> to vector<8x32xf32>
    %cst_138 = arith.constant dense<0.000000e+00> : vector<8x32xf32>
    %178 = tpu.matmul %172, %47, %cst_138 {dimension_numbers = #tpu.dot_dimension_numbers<[1], [0], [0], [1], [0, 0, 1, 1], [], []>} : vector<8x32xf32>, vector<32x32xf32>, vector<8x32xf32> -> vector<8x32xf32>
    %179 = arith.addf %177, %178 : vector<8x32xf32>
    %c1_139 = arith.constant 1 : index
    %c3_140 = arith.constant 3 : index
    %c0_141 = arith.constant 0 : index
    %c0_142 = arith.constant 0 : index
    %180 = vector.load %arg11[%c1_139, %c3_140, %c0_141, %c0_142] : memref<4x8x8x32xf32, #tpu.memory_space<vmem>>, vector<1x1x8x32xf32>
    %181 = vector.shape_cast %180 : vector<1x1x8x32xf32> to vector<8x32xf32>
    %cst_143 = arith.constant dense<0.000000e+00> : vector<8x32xf32>
    %182 = tpu.matmul %172, %49, %cst_143 {dimension_numbers = #tpu.dot_dimension_numbers<[1], [0], [0], [1], [0, 0, 1, 1], [], []>} : vector<8x32xf32>, vector<32x32xf32>, vector<8x32xf32> -> vector<8x32xf32>
    %183 = arith.addf %181, %182 : vector<8x32xf32>
    %c2_144 = arith.constant 2 : index
    %c3_145 = arith.constant 3 : index
    %c0_146 = arith.constant 0 : index
    %c0_147 = arith.constant 0 : index
    %184 = vector.load %arg11[%c2_144, %c3_145, %c0_146, %c0_147] : memref<4x8x8x32xf32, #tpu.memory_space<vmem>>, vector<1x1x8x32xf32>
    %185 = vector.shape_cast %184 : vector<1x1x8x32xf32> to vector<8x32xf32>
    %cst_148 = arith.constant dense<0.000000e+00> : vector<8x32xf32>
    %186 = tpu.matmul %172, %51, %cst_148 {dimension_numbers = #tpu.dot_dimension_numbers<[1], [0], [0], [1], [0, 0, 1, 1], [], []>} : vector<8x32xf32>, vector<32x32xf32>, vector<8x32xf32> -> vector<8x32xf32>
    %187 = arith.addf %185, %186 : vector<8x32xf32>
    %c3_149 = arith.constant 3 : index
    %c3_150 = arith.constant 3 : index
    %c0_151 = arith.constant 0 : index
    %c0_152 = arith.constant 0 : index
    %188 = vector.load %arg11[%c3_149, %c3_150, %c0_151, %c0_152] : memref<4x8x8x32xf32, #tpu.memory_space<vmem>>, vector<1x1x8x32xf32>
    %189 = vector.shape_cast %188 : vector<1x1x8x32xf32> to vector<8x32xf32>
    %cst_153 = arith.constant dense<0.000000e+00> : vector<8x32xf32>
    %190 = tpu.matmul %172, %53, %cst_153 {dimension_numbers = #tpu.dot_dimension_numbers<[1], [0], [0], [1], [0, 0, 1, 1], [], []>} : vector<8x32xf32>, vector<32x32xf32>, vector<8x32xf32> -> vector<8x32xf32>
    %191 = arith.addf %189, %190 : vector<8x32xf32>
    %192 = arith.negf %179 : vector<8x32xf32>
    %193 = math.exp %192 : vector<8x32xf32>
    %cst_154 = arith.constant 1.000000e+00 : f32
    %194 = vector.broadcast %cst_154 : f32 to vector<8x32xf32>
    %195 = arith.addf %194, %193 : vector<8x32xf32>
    %196 = arith.divf %194, %195 : vector<8x32xf32>
    %197 = arith.negf %183 : vector<8x32xf32>
    %198 = math.exp %197 : vector<8x32xf32>
    %cst_155 = arith.constant 1.000000e+00 : f32
    %199 = vector.broadcast %cst_155 : f32 to vector<8x32xf32>
    %200 = arith.addf %199, %198 : vector<8x32xf32>
    %201 = arith.divf %199, %200 : vector<8x32xf32>
    %202 = math.tanh %187 : vector<8x32xf32>
    %203 = arith.negf %191 : vector<8x32xf32>
    %204 = math.exp %203 : vector<8x32xf32>
    %cst_156 = arith.constant 1.000000e+00 : f32
    %205 = vector.broadcast %cst_156 : f32 to vector<8x32xf32>
    %206 = arith.addf %205, %204 : vector<8x32xf32>
    %207 = arith.divf %205, %206 : vector<8x32xf32>
    %208 = arith.mulf %201, %170 : vector<8x32xf32>
    %209 = arith.mulf %196, %202 : vector<8x32xf32>
    %210 = arith.addf %208, %209 : vector<8x32xf32>
    %211 = math.tanh %210 : vector<8x32xf32>
    %212 = arith.mulf %207, %211 : vector<8x32xf32>
    %c3_157 = arith.constant 3 : index
    %c0_158 = arith.constant 0 : index
    %c0_159 = arith.constant 0 : index
    %213 = vector.load %arg8[%c3_157, %c0_158, %c0_159] : memref<8x8x32xf32, #tpu.memory_space<vmem>>, vector<1x8x32xf32>
    %214 = vector.shape_cast %213 : vector<1x8x32xf32> to vector<8x32xf32>
    %215 = vector.shape_cast %212 : vector<8x32xf32> to vector<1x8x32xf32>
    tpu.vector_store %arg8[%c3_157, %c0_158, %c0_159], %215 {strides = array<i32>} : memref<8x8x32xf32, #tpu.memory_space<vmem>>, vector<1x8x32xf32>,
    %c0_160 = arith.constant 0 : index
    %c4 = arith.constant 4 : index
    %c0_161 = arith.constant 0 : index
    %c0_162 = arith.constant 0 : index
    %216 = vector.load %arg11[%c0_160, %c4, %c0_161, %c0_162] : memref<4x8x8x32xf32, #tpu.memory_space<vmem>>, vector<1x1x8x32xf32>
    %217 = vector.shape_cast %216 : vector<1x1x8x32xf32> to vector<8x32xf32>
    %cst_163 = arith.constant dense<0.000000e+00> : vector<8x32xf32>
    %218 = tpu.matmul %212, %47, %cst_163 {dimension_numbers = #tpu.dot_dimension_numbers<[1], [0], [0], [1], [0, 0, 1, 1], [], []>} : vector<8x32xf32>, vector<32x32xf32>, vector<8x32xf32> -> vector<8x32xf32>
    %219 = arith.addf %217, %218 : vector<8x32xf32>
    %c1_164 = arith.constant 1 : index
    %c4_165 = arith.constant 4 : index
    %c0_166 = arith.constant 0 : index
    %c0_167 = arith.constant 0 : index
    %220 = vector.load %arg11[%c1_164, %c4_165, %c0_166, %c0_167] : memref<4x8x8x32xf32, #tpu.memory_space<vmem>>, vector<1x1x8x32xf32>
    %221 = vector.shape_cast %220 : vector<1x1x8x32xf32> to vector<8x32xf32>
    %cst_168 = arith.constant dense<0.000000e+00> : vector<8x32xf32>
    %222 = tpu.matmul %212, %49, %cst_168 {dimension_numbers = #tpu.dot_dimension_numbers<[1], [0], [0], [1], [0, 0, 1, 1], [], []>} : vector<8x32xf32>, vector<32x32xf32>, vector<8x32xf32> -> vector<8x32xf32>
    %223 = arith.addf %221, %222 : vector<8x32xf32>
    %c2_169 = arith.constant 2 : index
    %c4_170 = arith.constant 4 : index
    %c0_171 = arith.constant 0 : index
    %c0_172 = arith.constant 0 : index
    %224 = vector.load %arg11[%c2_169, %c4_170, %c0_171, %c0_172] : memref<4x8x8x32xf32, #tpu.memory_space<vmem>>, vector<1x1x8x32xf32>
    %225 = vector.shape_cast %224 : vector<1x1x8x32xf32> to vector<8x32xf32>
    %cst_173 = arith.constant dense<0.000000e+00> : vector<8x32xf32>
    %226 = tpu.matmul %212, %51, %cst_173 {dimension_numbers = #tpu.dot_dimension_numbers<[1], [0], [0], [1], [0, 0, 1, 1], [], []>} : vector<8x32xf32>, vector<32x32xf32>, vector<8x32xf32> -> vector<8x32xf32>
    %227 = arith.addf %225, %226 : vector<8x32xf32>
    %c3_174 = arith.constant 3 : index
    %c4_175 = arith.constant 4 : index
    %c0_176 = arith.constant 0 : index
    %c0_177 = arith.constant 0 : index
    %228 = vector.load %arg11[%c3_174, %c4_175, %c0_176, %c0_177] : memref<4x8x8x32xf32, #tpu.memory_space<vmem>>, vector<1x1x8x32xf32>
    %229 = vector.shape_cast %228 : vector<1x1x8x32xf32> to vector<8x32xf32>
    %cst_178 = arith.constant dense<0.000000e+00> : vector<8x32xf32>
    %230 = tpu.matmul %212, %53, %cst_178 {dimension_numbers = #tpu.dot_dimension_numbers<[1], [0], [0], [1], [0, 0, 1, 1], [], []>} : vector<8x32xf32>, vector<32x32xf32>, vector<8x32xf32> -> vector<8x32xf32>
    %231 = arith.addf %229, %230 : vector<8x32xf32>
    %232 = arith.negf %219 : vector<8x32xf32>
    %233 = math.exp %232 : vector<8x32xf32>
    %cst_179 = arith.constant 1.000000e+00 : f32
    %234 = vector.broadcast %cst_179 : f32 to vector<8x32xf32>
    %235 = arith.addf %234, %233 : vector<8x32xf32>
    %236 = arith.divf %234, %235 : vector<8x32xf32>
    %237 = arith.negf %223 : vector<8x32xf32>
    %238 = math.exp %237 : vector<8x32xf32>
    %cst_180 = arith.constant 1.000000e+00 : f32
    %239 = vector.broadcast %cst_180 : f32 to vector<8x32xf32>
    %240 = arith.addf %239, %238 : vector<8x32xf32>
    %241 = arith.divf %239, %240 : vector<8x32xf32>
    %242 = math.tanh %227 : vector<8x32xf32>
    %243 = arith.negf %231 : vector<8x32xf32>
    %244 = math.exp %243 : vector<8x32xf32>
    %cst_181 = arith.constant 1.000000e+00 : f32
    %245 = vector.broadcast %cst_181 : f32 to vector<8x32xf32>
    %246 = arith.addf %245, %244 : vector<8x32xf32>
    %247 = arith.divf %245, %246 : vector<8x32xf32>
    %248 = arith.mulf %241, %210 : vector<8x32xf32>
    %249 = arith.mulf %236, %242 : vector<8x32xf32>
    %250 = arith.addf %248, %249 : vector<8x32xf32>
    %251 = math.tanh %250 : vector<8x32xf32>
    %252 = arith.mulf %247, %251 : vector<8x32xf32>
    %c4_182 = arith.constant 4 : index
    %c0_183 = arith.constant 0 : index
    %c0_184 = arith.constant 0 : index
    %253 = vector.load %arg8[%c4_182, %c0_183, %c0_184] : memref<8x8x32xf32, #tpu.memory_space<vmem>>, vector<1x8x32xf32>
    %254 = vector.shape_cast %253 : vector<1x8x32xf32> to vector<8x32xf32>
    %255 = vector.shape_cast %252 : vector<8x32xf32> to vector<1x8x32xf32>
    tpu.vector_store %arg8[%c4_182, %c0_183, %c0_184], %255 {strides = array<i32>} : memref<8x8x32xf32, #tpu.memory_space<vmem>>, vector<1x8x32xf32>,
    %c0_185 = arith.constant 0 : index
    %c5 = arith.constant 5 : index
    %c0_186 = arith.constant 0 : index
    %c0_187 = arith.constant 0 : index
    %256 = vector.load %arg11[%c0_185, %c5, %c0_186, %c0_187] : memref<4x8x8x32xf32, #tpu.memory_space<vmem>>, vector<1x1x8x32xf32>
    %257 = vector.shape_cast %256 : vector<1x1x8x32xf32> to vector<8x32xf32>
    %cst_188 = arith.constant dense<0.000000e+00> : vector<8x32xf32>
    %258 = tpu.matmul %252, %47, %cst_188 {dimension_numbers = #tpu.dot_dimension_numbers<[1], [0], [0], [1], [0, 0, 1, 1], [], []>} : vector<8x32xf32>, vector<32x32xf32>, vector<8x32xf32> -> vector<8x32xf32>
    %259 = arith.addf %257, %258 : vector<8x32xf32>
    %c1_189 = arith.constant 1 : index
    %c5_190 = arith.constant 5 : index
    %c0_191 = arith.constant 0 : index
    %c0_192 = arith.constant 0 : index
    %260 = vector.load %arg11[%c1_189, %c5_190, %c0_191, %c0_192] : memref<4x8x8x32xf32, #tpu.memory_space<vmem>>, vector<1x1x8x32xf32>
    %261 = vector.shape_cast %260 : vector<1x1x8x32xf32> to vector<8x32xf32>
    %cst_193 = arith.constant dense<0.000000e+00> : vector<8x32xf32>
    %262 = tpu.matmul %252, %49, %cst_193 {dimension_numbers = #tpu.dot_dimension_numbers<[1], [0], [0], [1], [0, 0, 1, 1], [], []>} : vector<8x32xf32>, vector<32x32xf32>, vector<8x32xf32> -> vector<8x32xf32>
    %263 = arith.addf %261, %262 : vector<8x32xf32>
    %c2_194 = arith.constant 2 : index
    %c5_195 = arith.constant 5 : index
    %c0_196 = arith.constant 0 : index
    %c0_197 = arith.constant 0 : index
    %264 = vector.load %arg11[%c2_194, %c5_195, %c0_196, %c0_197] : memref<4x8x8x32xf32, #tpu.memory_space<vmem>>, vector<1x1x8x32xf32>
    %265 = vector.shape_cast %264 : vector<1x1x8x32xf32> to vector<8x32xf32>
    %cst_198 = arith.constant dense<0.000000e+00> : vector<8x32xf32>
    %266 = tpu.matmul %252, %51, %cst_198 {dimension_numbers = #tpu.dot_dimension_numbers<[1], [0], [0], [1], [0, 0, 1, 1], [], []>} : vector<8x32xf32>, vector<32x32xf32>, vector<8x32xf32> -> vector<8x32xf32>
    %267 = arith.addf %265, %266 : vector<8x32xf32>
    %c3_199 = arith.constant 3 : index
    %c5_200 = arith.constant 5 : index
    %c0_201 = arith.constant 0 : index
    %c0_202 = arith.constant 0 : index
    %268 = vector.load %arg11[%c3_199, %c5_200, %c0_201, %c0_202] : memref<4x8x8x32xf32, #tpu.memory_space<vmem>>, vector<1x1x8x32xf32>
    %269 = vector.shape_cast %268 : vector<1x1x8x32xf32> to vector<8x32xf32>
    %cst_203 = arith.constant dense<0.000000e+00> : vector<8x32xf32>
    %270 = tpu.matmul %252, %53, %cst_203 {dimension_numbers = #tpu.dot_dimension_numbers<[1], [0], [0], [1], [0, 0, 1, 1], [], []>} : vector<8x32xf32>, vector<32x32xf32>, vector<8x32xf32> -> vector<8x32xf32>
    %271 = arith.addf %269, %270 : vector<8x32xf32>
    %272 = arith.negf %259 : vector<8x32xf32>
    %273 = math.exp %272 : vector<8x32xf32>
    %cst_204 = arith.constant 1.000000e+00 : f32
    %274 = vector.broadcast %cst_204 : f32 to vector<8x32xf32>
    %275 = arith.addf %274, %273 : vector<8x32xf32>
    %276 = arith.divf %274, %275 : vector<8x32xf32>
    %277 = arith.negf %263 : vector<8x32xf32>
    %278 = math.exp %277 : vector<8x32xf32>
    %cst_205 = arith.constant 1.000000e+00 : f32
    %279 = vector.broadcast %cst_205 : f32 to vector<8x32xf32>
    %280 = arith.addf %279, %278 : vector<8x32xf32>
    %281 = arith.divf %279, %280 : vector<8x32xf32>
    %282 = math.tanh %267 : vector<8x32xf32>
    %283 = arith.negf %271 : vector<8x32xf32>
    %284 = math.exp %283 : vector<8x32xf32>
    %cst_206 = arith.constant 1.000000e+00 : f32
    %285 = vector.broadcast %cst_206 : f32 to vector<8x32xf32>
    %286 = arith.addf %285, %284 : vector<8x32xf32>
    %287 = arith.divf %285, %286 : vector<8x32xf32>
    %288 = arith.mulf %281, %250 : vector<8x32xf32>
    %289 = arith.mulf %276, %282 : vector<8x32xf32>
    %290 = arith.addf %288, %289 : vector<8x32xf32>
    %291 = math.tanh %290 : vector<8x32xf32>
    %292 = arith.mulf %287, %291 : vector<8x32xf32>
    %c5_207 = arith.constant 5 : index
    %c0_208 = arith.constant 0 : index
    %c0_209 = arith.constant 0 : index
    %293 = vector.load %arg8[%c5_207, %c0_208, %c0_209] : memref<8x8x32xf32, #tpu.memory_space<vmem>>, vector<1x8x32xf32>
    %294 = vector.shape_cast %293 : vector<1x8x32xf32> to vector<8x32xf32>
    %295 = vector.shape_cast %292 : vector<8x32xf32> to vector<1x8x32xf32>
    tpu.vector_store %arg8[%c5_207, %c0_208, %c0_209], %295 {strides = array<i32>} : memref<8x8x32xf32, #tpu.memory_space<vmem>>, vector<1x8x32xf32>,
    %c0_210 = arith.constant 0 : index
    %c6 = arith.constant 6 : index
    %c0_211 = arith.constant 0 : index
    %c0_212 = arith.constant 0 : index
    %296 = vector.load %arg11[%c0_210, %c6, %c0_211, %c0_212] : memref<4x8x8x32xf32, #tpu.memory_space<vmem>>, vector<1x1x8x32xf32>
    %297 = vector.shape_cast %296 : vector<1x1x8x32xf32> to vector<8x32xf32>
    %cst_213 = arith.constant dense<0.000000e+00> : vector<8x32xf32>
    %298 = tpu.matmul %292, %47, %cst_213 {dimension_numbers = #tpu.dot_dimension_numbers<[1], [0], [0], [1], [0, 0, 1, 1], [], []>} : vector<8x32xf32>, vector<32x32xf32>, vector<8x32xf32> -> vector<8x32xf32>
    %299 = arith.addf %297, %298 : vector<8x32xf32>
    %c1_214 = arith.constant 1 : index
    %c6_215 = arith.constant 6 : index
    %c0_216 = arith.constant 0 : index
    %c0_217 = arith.constant 0 : index
    %300 = vector.load %arg11[%c1_214, %c6_215, %c0_216, %c0_217] : memref<4x8x8x32xf32, #tpu.memory_space<vmem>>, vector<1x1x8x32xf32>
    %301 = vector.shape_cast %300 : vector<1x1x8x32xf32> to vector<8x32xf32>
    %cst_218 = arith.constant dense<0.000000e+00> : vector<8x32xf32>
    %302 = tpu.matmul %292, %49, %cst_218 {dimension_numbers = #tpu.dot_dimension_numbers<[1], [0], [0], [1], [0, 0, 1, 1], [], []>} : vector<8x32xf32>, vector<32x32xf32>, vector<8x32xf32> -> vector<8x32xf32>
    %303 = arith.addf %301, %302 : vector<8x32xf32>
    %c2_219 = arith.constant 2 : index
    %c6_220 = arith.constant 6 : index
    %c0_221 = arith.constant 0 : index
    %c0_222 = arith.constant 0 : index
    %304 = vector.load %arg11[%c2_219, %c6_220, %c0_221, %c0_222] : memref<4x8x8x32xf32, #tpu.memory_space<vmem>>, vector<1x1x8x32xf32>
    %305 = vector.shape_cast %304 : vector<1x1x8x32xf32> to vector<8x32xf32>
    %cst_223 = arith.constant dense<0.000000e+00> : vector<8x32xf32>
    %306 = tpu.matmul %292, %51, %cst_223 {dimension_numbers = #tpu.dot_dimension_numbers<[1], [0], [0], [1], [0, 0, 1, 1], [], []>} : vector<8x32xf32>, vector<32x32xf32>, vector<8x32xf32> -> vector<8x32xf32>
    %307 = arith.addf %305, %306 : vector<8x32xf32>
    %c3_224 = arith.constant 3 : index
    %c6_225 = arith.constant 6 : index
    %c0_226 = arith.constant 0 : index
    %c0_227 = arith.constant 0 : index
    %308 = vector.load %arg11[%c3_224, %c6_225, %c0_226, %c0_227] : memref<4x8x8x32xf32, #tpu.memory_space<vmem>>, vector<1x1x8x32xf32>
    %309 = vector.shape_cast %308 : vector<1x1x8x32xf32> to vector<8x32xf32>
    %cst_228 = arith.constant dense<0.000000e+00> : vector<8x32xf32>
    %310 = tpu.matmul %292, %53, %cst_228 {dimension_numbers = #tpu.dot_dimension_numbers<[1], [0], [0], [1], [0, 0, 1, 1], [], []>} : vector<8x32xf32>, vector<32x32xf32>, vector<8x32xf32> -> vector<8x32xf32>
    %311 = arith.addf %309, %310 : vector<8x32xf32>
    %312 = arith.negf %299 : vector<8x32xf32>
    %313 = math.exp %312 : vector<8x32xf32>
    %cst_229 = arith.constant 1.000000e+00 : f32
    %314 = vector.broadcast %cst_229 : f32 to vector<8x32xf32>
    %315 = arith.addf %314, %313 : vector<8x32xf32>
    %316 = arith.divf %314, %315 : vector<8x32xf32>
    %317 = arith.negf %303 : vector<8x32xf32>
    %318 = math.exp %317 : vector<8x32xf32>
    %cst_230 = arith.constant 1.000000e+00 : f32
    %319 = vector.broadcast %cst_230 : f32 to vector<8x32xf32>
    %320 = arith.addf %319, %318 : vector<8x32xf32>
    %321 = arith.divf %319, %320 : vector<8x32xf32>
    %322 = math.tanh %307 : vector<8x32xf32>
    %323 = arith.negf %311 : vector<8x32xf32>
    %324 = math.exp %323 : vector<8x32xf32>
    %cst_231 = arith.constant 1.000000e+00 : f32
    %325 = vector.broadcast %cst_231 : f32 to vector<8x32xf32>
    %326 = arith.addf %325, %324 : vector<8x32xf32>
    %327 = arith.divf %325, %326 : vector<8x32xf32>
    %328 = arith.mulf %321, %290 : vector<8x32xf32>
    %329 = arith.mulf %316, %322 : vector<8x32xf32>
    %330 = arith.addf %328, %329 : vector<8x32xf32>
    %331 = math.tanh %330 : vector<8x32xf32>
    %332 = arith.mulf %327, %331 : vector<8x32xf32>
    %c6_232 = arith.constant 6 : index
    %c0_233 = arith.constant 0 : index
    %c0_234 = arith.constant 0 : index
    %333 = vector.load %arg8[%c6_232, %c0_233, %c0_234] : memref<8x8x32xf32, #tpu.memory_space<vmem>>, vector<1x8x32xf32>
    %334 = vector.shape_cast %333 : vector<1x8x32xf32> to vector<8x32xf32>
    %335 = vector.shape_cast %332 : vector<8x32xf32> to vector<1x8x32xf32>
    tpu.vector_store %arg8[%c6_232, %c0_233, %c0_234], %335 {strides = array<i32>} : memref<8x8x32xf32, #tpu.memory_space<vmem>>, vector<1x8x32xf32>,
    %c0_235 = arith.constant 0 : index
    %c7 = arith.constant 7 : index
    %c0_236 = arith.constant 0 : index
    %c0_237 = arith.constant 0 : index
    %336 = vector.load %arg11[%c0_235, %c7, %c0_236, %c0_237] : memref<4x8x8x32xf32, #tpu.memory_space<vmem>>, vector<1x1x8x32xf32>
    %337 = vector.shape_cast %336 : vector<1x1x8x32xf32> to vector<8x32xf32>
    %cst_238 = arith.constant dense<0.000000e+00> : vector<8x32xf32>
    %338 = tpu.matmul %332, %47, %cst_238 {dimension_numbers = #tpu.dot_dimension_numbers<[1], [0], [0], [1], [0, 0, 1, 1], [], []>} : vector<8x32xf32>, vector<32x32xf32>, vector<8x32xf32> -> vector<8x32xf32>
    %339 = arith.addf %337, %338 : vector<8x32xf32>
    %c1_239 = arith.constant 1 : index
    %c7_240 = arith.constant 7 : index
    %c0_241 = arith.constant 0 : index
    %c0_242 = arith.constant 0 : index
    %340 = vector.load %arg11[%c1_239, %c7_240, %c0_241, %c0_242] : memref<4x8x8x32xf32, #tpu.memory_space<vmem>>, vector<1x1x8x32xf32>
    %341 = vector.shape_cast %340 : vector<1x1x8x32xf32> to vector<8x32xf32>
    %cst_243 = arith.constant dense<0.000000e+00> : vector<8x32xf32>
    %342 = tpu.matmul %332, %49, %cst_243 {dimension_numbers = #tpu.dot_dimension_numbers<[1], [0], [0], [1], [0, 0, 1, 1], [], []>} : vector<8x32xf32>, vector<32x32xf32>, vector<8x32xf32> -> vector<8x32xf32>
    %343 = arith.addf %341, %342 : vector<8x32xf32>
    %c2_244 = arith.constant 2 : index
    %c7_245 = arith.constant 7 : index
    %c0_246 = arith.constant 0 : index
    %c0_247 = arith.constant 0 : index
    %344 = vector.load %arg11[%c2_244, %c7_245, %c0_246, %c0_247] : memref<4x8x8x32xf32, #tpu.memory_space<vmem>>, vector<1x1x8x32xf32>
    %345 = vector.shape_cast %344 : vector<1x1x8x32xf32> to vector<8x32xf32>
    %cst_248 = arith.constant dense<0.000000e+00> : vector<8x32xf32>
    %346 = tpu.matmul %332, %51, %cst_248 {dimension_numbers = #tpu.dot_dimension_numbers<[1], [0], [0], [1], [0, 0, 1, 1], [], []>} : vector<8x32xf32>, vector<32x32xf32>, vector<8x32xf32> -> vector<8x32xf32>
    %347 = arith.addf %345, %346 : vector<8x32xf32>
    %c3_249 = arith.constant 3 : index
    %c7_250 = arith.constant 7 : index
    %c0_251 = arith.constant 0 : index
    %c0_252 = arith.constant 0 : index
    %348 = vector.load %arg11[%c3_249, %c7_250, %c0_251, %c0_252] : memref<4x8x8x32xf32, #tpu.memory_space<vmem>>, vector<1x1x8x32xf32>
    %349 = vector.shape_cast %348 : vector<1x1x8x32xf32> to vector<8x32xf32>
    %cst_253 = arith.constant dense<0.000000e+00> : vector<8x32xf32>
    %350 = tpu.matmul %332, %53, %cst_253 {dimension_numbers = #tpu.dot_dimension_numbers<[1], [0], [0], [1], [0, 0, 1, 1], [], []>} : vector<8x32xf32>, vector<32x32xf32>, vector<8x32xf32> -> vector<8x32xf32>
    %351 = arith.addf %349, %350 : vector<8x32xf32>
    %352 = arith.negf %339 : vector<8x32xf32>
    %353 = math.exp %352 : vector<8x32xf32>
    %cst_254 = arith.constant 1.000000e+00 : f32
    %354 = vector.broadcast %cst_254 : f32 to vector<8x32xf32>
    %355 = arith.addf %354, %353 : vector<8x32xf32>
    %356 = arith.divf %354, %355 : vector<8x32xf32>
    %357 = arith.negf %343 : vector<8x32xf32>
    %358 = math.exp %357 : vector<8x32xf32>
    %cst_255 = arith.constant 1.000000e+00 : f32
    %359 = vector.broadcast %cst_255 : f32 to vector<8x32xf32>
    %360 = arith.addf %359, %358 : vector<8x32xf32>
    %361 = arith.divf %359, %360 : vector<8x32xf32>
    %362 = math.tanh %347 : vector<8x32xf32>
    %363 = arith.negf %351 : vector<8x32xf32>
    %364 = math.exp %363 : vector<8x32xf32>
    %cst_256 = arith.constant 1.000000e+00 : f32
    %365 = vector.broadcast %cst_256 : f32 to vector<8x32xf32>
    %366 = arith.addf %365, %364 : vector<8x32xf32>
    %367 = arith.divf %365, %366 : vector<8x32xf32>
    %368 = arith.mulf %361, %330 : vector<8x32xf32>
    %369 = arith.mulf %356, %362 : vector<8x32xf32>
    %370 = arith.addf %368, %369 : vector<8x32xf32>
    %371 = math.tanh %370 : vector<8x32xf32>
    %372 = arith.mulf %367, %371 : vector<8x32xf32>
    %c7_257 = arith.constant 7 : index
    %c0_258 = arith.constant 0 : index
    %c0_259 = arith.constant 0 : index
    %373 = vector.load %arg8[%c7_257, %c0_258, %c0_259] : memref<8x8x32xf32, #tpu.memory_space<vmem>>, vector<1x8x32xf32>
    %374 = vector.shape_cast %373 : vector<1x8x32xf32> to vector<8x32xf32>
    %375 = vector.shape_cast %372 : vector<8x32xf32> to vector<1x8x32xf32>
    tpu.vector_store %arg8[%c7_257, %c0_258, %c0_259], %375 {strides = array<i32>} : memref<8x8x32xf32, #tpu.memory_space<vmem>>, vector<1x8x32xf32>,
    %c0_260 = arith.constant 0 : index
    %c0_261 = arith.constant 0 : index
    %c0_262 = arith.constant 0 : index
    %376 = vector.load %arg9[%c0_260, %c0_261, %c0_262] : memref<1x8x32xf32, #tpu.memory_space<vmem>>, vector<1x8x32xf32>
    %377 = vector.shape_cast %376 : vector<1x8x32xf32> to vector<8x32xf32>
    %378 = vector.shape_cast %372 : vector<8x32xf32> to vector<1x8x32xf32>
    tpu.vector_store %arg9[%c0_260, %c0_261, %c0_262], %378 {strides = array<i32>} : memref<1x8x32xf32, #tpu.memory_space<vmem>>, vector<1x8x32xf32>,
    %c0_263 = arith.constant 0 : index
    %c0_264 = arith.constant 0 : index
    %c0_265 = arith.constant 0 : index
    %379 = vector.load %arg10[%c0_263, %c0_264, %c0_265] : memref<1x8x32xf32, #tpu.memory_space<vmem>>, vector<1x8x32xf32>
    %380 = vector.shape_cast %379 : vector<1x8x32xf32> to vector<8x32xf32>
    %381 = vector.shape_cast %370 : vector<8x32xf32> to vector<1x8x32xf32>
    tpu.vector_store %arg10[%c0_263, %c0_264, %c0_265], %381 {strides = array<i32>} : memref<1x8x32xf32, #tpu.memory_space<vmem>>, vector<1x8x32xf32>,
    %c0_266 = arith.constant 0 : index
    %c0_267 = arith.constant 0 : index
    %c0_268 = arith.constant 0 : index
    %382 = vector.load %arg8[%c0_266, %c0_267, %c0_268] : memref<8x8x32xf32, #tpu.memory_space<vmem>>, vector<8x8x32xf32>
    %383 = vector.shape_cast %382 : vector<8x8x32xf32> to vector<64x32xf32>
    %c0_269 = arith.constant 0 : index
    %c0_270 = arith.constant 0 : index
    %384 = vector.load %arg4[%c0_269, %c0_270] : memref<32x32xf32, #tpu.memory_space<vmem>>, vector<32x32xf32>
    %cst_271 = arith.constant dense<0.000000e+00> : vector<64x32xf32>
    %385 = tpu.matmul %383, %384, %cst_271 {dimension_numbers = #tpu.dot_dimension_numbers<[1], [0], [0], [1], [0, 0, 1, 1], [], []>} : vector<64x32xf32>, vector<32x32xf32>, vector<64x32xf32> -> vector<64x32xf32>
    %c0_272 = arith.constant 0 : index
    %c0_273 = arith.constant 0 : index
    %386 = vector.load %arg5[%c0_272, %c0_273] : memref<1x32xf32, #tpu.memory_space<vmem>>, vector<1x32xf32>
    %387 = vector.broadcast %386 : vector<1x32xf32> to vector<64x32xf32>
    %388 = arith.addf %385, %387 : vector<64x32xf32>
    %cst_274 = arith.constant dense<0.000000e+00> : vector<64xf32>
    %389 = vector.multi_reduction <add>, %388, %cst_274 [1] : vector<64x32xf32> to vector<64xf32>
    %390 = vector.shape_cast %389 : vector<64xf32> to vector<64x1xf32>
    %cst_275 = arith.constant 3.200000e+01 : f32
    %391 = vector.broadcast %cst_275 : f32 to vector<64x1xf32>
    %392 = arith.divf %390, %391 : vector<64x1xf32>
    %393 = vector.broadcast %392 : vector<64x1xf32> to vector<64x32xf32>
    %394 = arith.subf %388, %393 : vector<64x32xf32>
    %395 = arith.mulf %394, %394 : vector<64x32xf32>
    %cst_276 = arith.constant dense<0.000000e+00> : vector<64xf32>
    %396 = vector.multi_reduction <add>, %395, %cst_276 [1] : vector<64x32xf32> to vector<64xf32>
    %397 = vector.shape_cast %396 : vector<64xf32> to vector<64x1xf32>
    %cst_277 = arith.constant 3.200000e+01 : f32
    %398 = vector.broadcast %cst_277 : f32 to vector<64x1xf32>
    %399 = arith.divf %397, %398 : vector<64x1xf32>
    %400 = vector.broadcast %392 : vector<64x1xf32> to vector<64x32xf32>
    %401 = arith.subf %388, %400 : vector<64x32xf32>
    %cst_278 = arith.constant 9.99999974E-6 : f32
    %402 = vector.broadcast %cst_278 : f32 to vector<64x1xf32>
    %403 = arith.addf %399, %402 : vector<64x1xf32>
    %404 = math.rsqrt %403 : vector<64x1xf32>
    %405 = vector.broadcast %404 : vector<64x1xf32> to vector<64x32xf32>
    %406 = arith.mulf %401, %405 : vector<64x32xf32>
    %c0_279 = arith.constant 0 : index
    %c0_280 = arith.constant 0 : index
    %407 = vector.load %arg6[%c0_279, %c0_280] : memref<1x32xf32, #tpu.memory_space<vmem>>, vector<1x32xf32>
    %408 = vector.broadcast %407 : vector<1x32xf32> to vector<64x32xf32>
    %409 = arith.mulf %406, %408 : vector<64x32xf32>
    %c0_281 = arith.constant 0 : index
    %c0_282 = arith.constant 0 : index
    %410 = vector.load %arg7[%c0_281, %c0_282] : memref<1x32xf32, #tpu.memory_space<vmem>>, vector<1x32xf32>
    %411 = vector.broadcast %410 : vector<1x32xf32> to vector<64x32xf32>
    %412 = arith.addf %409, %411 : vector<64x32xf32>
    %413 = vector.shape_cast %412 : vector<64x32xf32> to vector<8x8x32xf32>
    %c0_283 = arith.constant 0 : index
    %c0_284 = arith.constant 0 : index
    %c0_285 = arith.constant 0 : index
    %414 = vector.load %arg8[%c0_283, %c0_284, %c0_285] : memref<8x8x32xf32, #tpu.memory_space<vmem>>, vector<8x8x32xf32>
    tpu.vector_store %arg8[%c0_283, %c0_284, %c0_285], %413 {strides = array<i32>} : memref<8x8x32xf32, #tpu.memory_space<vmem>>, vector<8x8x32xf32>,
    return
  }
}

</mosaic_0001>

<llo_original>
// kernel: sequence_encoder_forward.1
$region0: #{sequence_encoder_forward.1}
  #allocation0 [shape = 'u32[]', space=smem, size = 0x4, offset = 0x4, fixed_abs, tag = 'smem constant byte address 0x4 - core index']
  #allocation1 [shape = 'u32[144,128]{1,0:T(1,128)}', space=vmem, size = 0x12000, scoped, tag = 'internal scratch']
  #allocation2 [shape = 'f32[4,8,8,32]{3,2,1,0:T(8,128)}', space=vmem, size = 0x20000, scoped, tag = 'scratch operand']
  %s0 = inlined_call_operand.vmem [shape: f32[8,8,16], index: 0, kind: input, shape index: {}]
  %s1 = inlined_call_operand.vmem [shape: f32[4,16,32], index: 1, kind: input, shape index: {}]
  %s2 = inlined_call_operand.vmem [shape: f32[4,32,32], index: 2, kind: input, shape index: {}]
  %s3 = inlined_call_operand.vmem [shape: f32[4,1,32], index: 3, kind: input, shape index: {}]
  %s4 = inlined_call_operand.vmem [shape: f32[32,32], index: 4, kind: input, shape index: {}]
  %s5 = inlined_call_operand.vmem [shape: f32[1,32], index: 5, kind: input, shape index: {}]
  %s6 = inlined_call_operand.vmem [shape: f32[1,32], index: 6, kind: input, shape index: {}]
  %s7 = inlined_call_operand.vmem [shape: f32[1,32], index: 7, kind: input, shape index: {}]
  %s8 = inlined_call_operand.vmem [shape: f32[8,8,32], index: 8, kind: output, shape index: {0}]
  %s9 = inlined_call_operand.hbm [shape: f32[1,8,32], index: 9, kind: output, shape index: {1}]
  %s10 = inlined_call_operand.hbm [shape: f32[1,8,32], index: 10, kind: output, shape index: {2}]
  %11 = xla_tuple %s8, %s9, %s10
  %s12 = sld [smem:[#allocation0]]
  $region58: #{sequence_encoder_forward.1} parent=0
    _
  %s14 = ssub.s32 1, %s12
  %s15 = scalar_select 0, %s14, %s12
  $region1: #{sequence_encoder_forward.1} parent=0
    #allocation3 [shape = 'u8[4096]{0}', space=vmem, size = 0x1000, scoped, tag = 'output window, operand 1, single buffered']
    #allocation4 [shape = 's32[1]{0}', space=sflag, size = 0x4, scoped, tag = 'scoped memory for sequence_encoder_forward.1']
    #allocation5 [shape = 'u8[4096]{0}', space=vmem, size = 0x1000, scoped, tag = 'output window, operand 2, single buffered']
    #allocation6 [shape = 's32[1]{0}', space=sflag, size = 0x4, scoped, tag = 'scoped memory for sequence_encoder_forward.1']
    %16 = vsyncpa [#allocation4], 0
    %17 = vsyncpa [#allocation6], 0
    // Predicated region
    $region2: #{sequence_encoder_forward.1} parent=1 // pred_check
      _
    $region3: #{sequence_encoder_forward.1} parent=1 // pred_check_branch
      %19 = sbr.rel (0) target = $region5
    $region4: #{sequence_encoder_forward.1} parent=1 // pred_region
      _
    $region5: #{sequence_encoder_forward.1} parent=1 // pred_fallthru
      _
    // Predicated region
    $region6: #{sequence_encoder_forward.1} parent=1 // pred_check
      _
    $region7: #{sequence_encoder_forward.1} parent=1 // pred_check_branch
      %21 = sbr.rel (0) target = $region9
    $region8: #{sequence_encoder_forward.1} parent=1 // pred_region
      _
    $region9: #{sequence_encoder_forward.1} parent=1 // pred_fallthru
      _
    // Predicated region
    $region10: #{sequence_encoder_forward.1} parent=1 // pred_check
      _
    $region11: #{sequence_encoder_forward.1} parent=1 // pred_check_branch
      %23 = sbr.rel (0) target = $region13
    $region12: #{sequence_encoder_forward.1} parent=1 // pred_region
      _
    $region13: #{sequence_encoder_forward.1} parent=1 // pred_fallthru
      _
    // Predicated region
    $region14: #{sequence_encoder_forward.1} parent=1 // pred_check
      _
    $region15: #{sequence_encoder_forward.1} parent=1 // pred_check_branch
      %25 = sbr.rel (0) target = $region17
    $region16: #{sequence_encoder_forward.1} parent=1 // pred_region
      _
    $region17: #{sequence_encoder_forward.1} parent=1 // pred_fallthru
      _
    // Predicated region
    $region18: #{sequence_encoder_forward.1} parent=1 // pred_check
      _
    $region19: #{sequence_encoder_forward.1} parent=1 // pred_check_branch
      %27 = sbr.rel (0) target = $region21
    $region20: #{sequence_encoder_forward.1} parent=1 // pred_region
      _
    $region21: #{sequence_encoder_forward.1} parent=1 // pred_fallthru
      _
    // Predicated region
    $region22: #{sequence_encoder_forward.1} parent=1 // pred_check
      _
    $region23: #{sequence_encoder_forward.1} parent=1 // pred_check_branch
      %29 = sbr.rel (0) target = $region25
    $region24: #{sequence_encoder_forward.1} parent=1 // pred_region
      _
    $region25: #{sequence_encoder_forward.1} parent=1 // pred_fallthru
      _
    // Predicated region
    $region26: #{sequence_encoder_forward.1} parent=1 // pred_check
      _
    $region27: #{sequence_encoder_forward.1} parent=1 // pred_check_branch
      %31 = sbr.rel (0) target = $region29
    $region28: #{sequence_encoder_forward.1} parent=1 // pred_region
      _
    $region29: #{sequence_encoder_forward.1} parent=1 // pred_fallthru
      _
    // Predicated region
    $region30: #{sequence_encoder_forward.1} parent=1 // pred_check
      _
    $region31: #{sequence_encoder_forward.1} parent=1 // pred_check_branch
      %33 = sbr.rel (0) target = $region33
    $region32: #{sequence_encoder_forward.1} parent=1 // pred_region
      _
    $region33: #{sequence_encoder_forward.1} parent=1 // pred_fallthru
      _
    %v34 = vld [vmem:[%s0] sm:$0xff]
    %v35 = vld [vmem:[%s0 + $0x8] sm:$0xff]
    %v36 = vld [vmem:[%s0 + $0x10] sm:$0xff]
    %v37 = vld [vmem:[%s0 + $0x18] sm:$0xff]
    %v38 = vld [vmem:[%s0 + $0x20] sm:$0xff]
    %v39 = vld [vmem:[%s0 + $0x28] sm:$0xff]
    %v40 = vld [vmem:[%s0 + $0x30] sm:$0xff]
    %v41 = vld [vmem:[%s0 + $0x38] sm:$0xff]
    %v42 = vld [vmem:[%s1] sm:$0xff]
    %v43 = vld [vmem:[%s1 + $0x8] sm:$0xff]
    %v44 = vld [vmem:[%s3] sm:$0x1]
    %v46 = vlaneseq
    %v47 = vshrl.u32 %v46, 7
    %v48 = vsub.s32 0, %v47
    %v49 = vrot.slane %v44, %v48
    %vm51 = vcmask 130048
    %v53 = vsel %vm51, %v34, 0
    %v56 = vsel %vm51, %v35, 0
    %v59 = vsel %vm51, %v36, 0
    %v62 = vsel %vm51, %v37, 0
    %v65 = vsel %vm51, %v38, 0
    %v68 = vsel %vm51, %v39, 0
    %v71 = vsel %vm51, %v40, 0
    %v74 = vsel %vm51, %v41, 0
    %76 = vmatprep.subr.mxu0 0.0
    %77 = vmatpush1.msra.mxu0 0.0
    %78 = vmatprep.subr.mxu0 0.0
    %79 = vmatpush1.msra.mxu0 0.0
    %80 = vmatprep.subr.mxu0 0.0
    %81 = vmatpush1.msra.mxu0 0.0
    %82 = vmatprep.subr.mxu0 0.0
    %83 = vmatpush1.msra.mxu0 0.0
    %84 = vmatprep.subr.mxu0 0.0
    %85 = vmatpush1.msra.mxu0 0.0
    %86 = vmatprep.subr.mxu0 0.0
    %87 = vmatpush1.msra.mxu0 0.0
    %88 = vmatprep.subr.mxu0 0.0
    %89 = vmatpush1.msra.mxu0 0.0
    %90 = vmatprep.subr.mxu0 0.0
    %91 = vmatpush1.msra.mxu0 0.0
    %92 = vmatprep.subr.mxu0 0.0
    %93 = vmatpush1.msra.mxu0 0.0
    %94 = vmatprep.subr.mxu0 0.0
    %95 = vmatpush1.msra.mxu0 0.0
    %96 = vmatprep.subr.mxu0 0.0
    %97 = vmatpush1.msra.mxu0 0.0
    %98 = vmatprep.subr.mxu0 0.0
    %99 = vmatpush1.msra.mxu0 0.0
    %100 = vmatprep.subr.mxu0 0.0
    %101 = vmatpush1.msra.mxu0 0.0
    %102 = vmatprep.subr.mxu0 0.0
    %103 = vmatpush1.msra.mxu0 0.0
    %104 = vmatprep.subr.mxu0 0.0
    %105 = vmatpush1.msra.mxu0 %v43
    %106 = vmatprep.subr.mxu0 0.0
    %107 = vmatpush1.msra.mxu0 %v42
    %108 = vmatprep.subr.mxu0 0.0
    %109 = vmatpush2.msra.mxu0 0.0
    %110 = vmatprep.subr.mxu0 0.0
    %111 = vmatpush2.msra.mxu0 0.0
    %112 = vmatprep.subr.mxu0 0.0
    %113 = vmatpush2.msra.mxu0 0.0
    %114 = vmatprep.subr.mxu0 0.0
    %115 = vmatpush2.msra.mxu0 0.0
    %116 = vmatprep.subr.mxu0 0.0
    %117 = vmatpush2.msra.mxu0 0.0
    %118 = vmatprep.subr.mxu0 0.0
    %119 = vmatpush2.msra.mxu0 0.0
    %120 = vmatprep.subr.mxu0 0.0
    %121 = vmatpush2.msra.mxu0 0.0
    %122 = vmatprep.subr.mxu0 0.0
    %123 = vmatpush2.msra.mxu0 0.0
    %124 = vmatprep.subr.mxu0 0.0
    %125 = vmatpush2.msra.mxu0 0.0
    %126 = vmatprep.subr.mxu0 0.0
    %127 = vmatpush2.msra.mxu0 0.0
    %128 = vmatprep.subr.mxu0 0.0
    %129 = vmatpush2.msra.mxu0 0.0
    %130 = vmatprep.subr.mxu0 0.0
    %131 = vmatpush2.msra.mxu0 0.0
    %132 = vmatprep.subr.mxu0 0.0
    %133 = vmatpush2.msra.mxu0 0.0
    %134 = vmatprep.subr.mxu0 0.0
    %135 = vmatpush2.msra.mxu0 0.0
    %136 = vmatprep.subr.mxu0 0.0
    %137 = vmatpush2.msra.mxu0 0.0
    %138 = vmatprep.subr.mxu0 0.0
    %139 = vmatpush2.msra.mxu0 0.0
    %140 = vmatprep.mubr.f32.mxu0 0.0
    %141 = vmatmul.mubr.f32.gmra.mxu0 %v53
    %v142 = vpop.f32.mrf.mxu0
    %v143 = vadd.f32 %v49, %v142
    %v144 = vpop.f32.mrf.mxu0
    %145 = vmatprep.mubr.f32.mxu0 0.0
    %146 = vmatmul.mubr.f32.gmra.mxu0 %v56
    %v147 = vpop.f32.mrf.mxu0
    %v148 = vadd.f32 %v49, %v147
    %v149 = vpop.f32.mrf.mxu0
    %150 = vmatprep.mubr.f32.mxu0 0.0
    %151 = vmatmul.mubr.f32.gmra.mxu0 %v59
    %v152 = vpop.f32.mrf.mxu0
    %v153 = vadd.f32 %v49, %v152
    %v154 = vpop.f32.mrf.mxu0
    %155 = vmatprep.mubr.f32.mxu0 0.0
    %156 = vmatmul.mubr.f32.gmra.mxu0 %v62
    %v157 = vpop.f32.mrf.mxu0
    %v158 = vadd.f32 %v49, %v157
    %v159 = vpop.f32.mrf.mxu0
    %160 = vmatprep.mubr.f32.mxu0 0.0
    %161 = vmatmul.mubr.f32.gmra.mxu0 %v65
    %v162 = vpop.f32.mrf.mxu0
    %v163 = vadd.f32 %v49, %v162
    %v164 = vpop.f32.mrf.mxu0
    %165 = vmatprep.mubr.f32.mxu0 0.0
    %166 = vmatmul.mubr.f32.gmra.mxu0 %v68
    %v167 = vpop.f32.mrf.mxu0
    %v168 = vadd.f32 %v49, %v167
    %v169 = vpop.f32.mrf.mxu0
    %170 = vmatprep.mubr.f32.mxu0 0.0
    %171 = vmatmul.mubr.f32.gmra.mxu0 %v71
    %v172 = vpop.f32.mrf.mxu0
    %v173 = vadd.f32 %v49, %v172
    %v174 = vpop.f32.mrf.mxu0
    %175 = vmatprep.mubr.f32.mxu0 0.0
    %176 = vmatmul.mubr.f32.gmra.mxu0 %v74
    %v177 = vpop.f32.mrf.mxu0
    %v178 = vadd.f32 %v49, %v177
    %v179 = vpop.f32.mrf.mxu0
    %180 = vdwg.mxu0
    %vm181 = vcmask 261120
    %182 = vst.msk [vmem:[#allocation2] sm:$0xff] %vm181, %v143
    %183 = vst.msk [vmem:[#allocation2 + $0x8] sm:$0xff] %vm181, %v148
    %184 = vst.msk [vmem:[#allocation2 + $0x10] sm:$0xff] %vm181, %v153
    %185 = vst.msk [vmem:[#allocation2 + $0x18] sm:$0xff] %vm181, %v158
    %186 = vst.msk [vmem:[#allocation2 + $0x20] sm:$0xff] %vm181, %v163
    %187 = vst.msk [vmem:[#allocation2 + $0x28] sm:$0xff] %vm181, %v168
    %188 = vst.msk [vmem:[#allocation2 + $0x30] sm:$0xff] %vm181, %v173
    %189 = vst.msk [vmem:[#allocation2 + $0x38] sm:$0xff] %vm181, %v178
    %s190 = scalar_lea.vmem %s1, 16
    %v191 = vld [vmem:[%s190] sm:$0xff]
    %v192 = vld [vmem:[%s190 + $0x8] sm:$0xff]
    %s193 = scalar_lea.vmem %s3, 1
    %v194 = vld [vmem:[%s193] sm:$0x1]
    %v196 = vlaneseq
    %v197 = vshrl.u32 %v196, 7
    %v198 = vsub.s32 0, %v197
    %v199 = vrot.slane %v194, %v198
    %201 = vmatprep.subr.mxu0 0.0
    %202 = vmatpush1.msra.mxu0 0.0
    %203 = vmatprep.subr.mxu0 0.0
    %204 = vmatpush1.msra.mxu0 0.0
    %205 = vmatprep.subr.mxu0 0.0
    %206 = vmatpush1.msra.mxu0 0.0
    %207 = vmatprep.subr.mxu0 0.0
    %208 = vmatpush1.msra.mxu0 0.0
    %209 = vmatprep.subr.mxu0 0.0
    %210 = vmatpush1.msra.mxu0 0.0
    %211 = vmatprep.subr.mxu0 0.0
    %212 = vmatpush1.msra.mxu0 0.0
    %213 = vmatprep.subr.mxu0 0.0
    %214 = vmatpush1.msra.mxu0 0.0
    %215 = vmatprep.subr.mxu0 0.0
    %216 = vmatpush1.msra.mxu0 0.0
    %217 = vmatprep.subr.mxu0 0.0
    %218 = vmatpush1.msra.mxu0 0.0
    %219 = vmatprep.subr.mxu0 0.0
    %220 = vmatpush1.msra.mxu0 0.0
    %221 = vmatprep.subr.mxu0 0.0
    %222 = vmatpush1.msra.mxu0 0.0
    %223 = vmatprep.subr.mxu0 0.0
    %224 = vmatpush1.msra.mxu0 0.0
    %225 = vmatprep.subr.mxu0 0.0
    %226 = vmatpush1.msra.mxu0 0.0
    %227 = vmatprep.subr.mxu0 0.0
    %228 = vmatpush1.msra.mxu0 0.0
    %229 = vmatprep.subr.mxu0 0.0
    %230 = vmatpush1.msra.mxu0 %v192
    %231 = vmatprep.subr.mxu0 0.0
    %232 = vmatpush1.msra.mxu0 %v191
    %233 = vmatprep.subr.mxu0 0.0
    %234 = vmatpush2.msra.mxu0 0.0
    %235 = vmatprep.subr.mxu0 0.0
    %236 = vmatpush2.msra.mxu0 0.0
    %237 = vmatprep.subr.mxu0 0.0
    %238 = vmatpush2.msra.mxu0 0.0
    %239 = vmatprep.subr.mxu0 0.0
    %240 = vmatpush2.msra.mxu0 0.0
    %241 = vmatprep.subr.mxu0 0.0
    %242 = vmatpush2.msra.mxu0 0.0
    %243 = vmatprep.subr.mxu0 0.0
    %244 = vmatpush2.msra.mxu0 0.0
    %245 = vmatprep.subr.mxu0 0.0
    %246 = vmatpush2.msra.mxu0 0.0
    %247 = vmatprep.subr.mxu0 0.0
    %248 = vmatpush2.msra.mxu0 0.0
    %249 = vmatprep.subr.mxu0 0.0
    %250 = vmatpush2.msra.mxu0 0.0
    %251 = vmatprep.subr.mxu0 0.0
    %252 = vmatpush2.msra.mxu0 0.0
    %253 = vmatprep.subr.mxu0 0.0
    %254 = vmatpush2.msra.mxu0 0.0
    %255 = vmatprep.subr.mxu0 0.0
    %256 = vmatpush2.msra.mxu0 0.0
    %257 = vmatprep.subr.mxu0 0.0
    %258 = vmatpush2.msra.mxu0 0.0
    %259 = vmatprep.subr.mxu0 0.0
    %260 = vmatpush2.msra.mxu0 0.0
    %261 = vmatprep.subr.mxu0 0.0
    %262 = vmatpush2.msra.mxu0 0.0
    %263 = vmatprep.subr.mxu0 0.0
    %264 = vmatpush2.msra.mxu0 0.0
    %265 = vmatprep.mubr.f32.mxu0 0.0
    %266 = vmatmul.mubr.f32.gmra.mxu0 %v53
    %v267 = vpop.f32.mrf.mxu0
    %v268 = vadd.f32 %v199, %v267
    %v269 = vpop.f32.mrf.mxu0
    %270 = vmatprep.mubr.f32.mxu0 0.0
    %271 = vmatmul.mubr.f32.gmra.mxu0 %v56
    %v272 = vpop.f32.mrf.mxu0
    %v273 = vadd.f32 %v199, %v272
    %v274 = vpop.f32.mrf.mxu0
    %275 = vmatprep.mubr.f32.mxu0 0.0
    %276 = vmatmul.mubr.f32.gmra.mxu0 %v59
    %v277 = vpop.f32.mrf.mxu0
    %v278 = vadd.f32 %v199, %v277
    %v279 = vpop.f32.mrf.mxu0
    %280 = vmatprep.mubr.f32.mxu0 0.0
    %281 = vmatmul.mubr.f32.gmra.mxu0 %v62
    %v282 = vpop.f32.mrf.mxu0
    %v283 = vadd.f32 %v199, %v282
    %v284 = vpop.f32.mrf.mxu0
    %285 = vmatprep.mubr.f32.mxu0 0.0
    %286 = vmatmul.mubr.f32.gmra.mxu0 %v65
    %v287 = vpop.f32.mrf.mxu0
    %v288 = vadd.f32 %v199, %v287
    %v289 = vpop.f32.mrf.mxu0
    %290 = vmatprep.mubr.f32.mxu0 0.0
    %291 = vmatmul.mubr.f32.gmra.mxu0 %v68
    %v292 = vpop.f32.mrf.mxu0
    %v293 = vadd.f32 %v199, %v292
    %v294 = vpop.f32.mrf.mxu0
    %295 = vmatprep.mubr.f32.mxu0 0.0
    %296 = vmatmul.mubr.f32.gmra.mxu0 %v71
    %v297 = vpop.f32.mrf.mxu0
    %v298 = vadd.f32 %v199, %v297
    %v299 = vpop.f32.mrf.mxu0
    %300 = vmatprep.mubr.f32.mxu0 0.0
    %301 = vmatmul.mubr.f32.gmra.mxu0 %v74
    %v302 = vpop.f32.mrf.mxu0
    %v303 = vadd.f32 %v199, %v302
    %v304 = vpop.f32.mrf.mxu0
    %305 = vdwg.mxu0
    %s306 = scalar_lea.vmem [#allocation2], 64
    %307 = vst.msk [vmem:[%s306] sm:$0xff] %vm181, %v268
    %308 = vst.msk [vmem:[%s306 + $0x8] sm:$0xff] %vm181, %v273
    %309 = vst.msk [vmem:[%s306 + $0x10] sm:$0xff] %vm181, %v278
    %310 = vst.msk [vmem:[%s306 + $0x18] sm:$0xff] %vm181, %v283
    %311 = vst.msk [vmem:[%s306 + $0x20] sm:$0xff] %vm181, %v288
    %312 = vst.msk [vmem:[%s306 + $0x28] sm:$0xff] %vm181, %v293
    %313 = vst.msk [vmem:[%s306 + $0x30] sm:$0xff] %vm181, %v298
    %314 = vst.msk [vmem:[%s306 + $0x38] sm:$0xff] %vm181, %v303
    %s315 = scalar_lea.vmem %s1, 32
    %v316 = vld [vmem:[%s315] sm:$0xff]
    %v317 = vld [vmem:[%s315 + $0x8] sm:$0xff]
    %s318 = scalar_lea.vmem %s3, 2
    %v319 = vld [vmem:[%s318] sm:$0x1]
    %v321 = vlaneseq
    %v322 = vshrl.u32 %v321, 7
    %v323 = vsub.s32 0, %v322
    %v324 = vrot.slane %v319, %v323
    %326 = vmatprep.subr.mxu0 0.0
    %327 = vmatpush1.msra.mxu0 0.0
    %328 = vmatprep.subr.mxu0 0.0
    %329 = vmatpush1.msra.mxu0 0.0
    %330 = vmatprep.subr.mxu0 0.0
    %331 = vmatpush1.msra.mxu0 0.0
    %332 = vmatprep.subr.mxu0 0.0
    %333 = vmatpush1.msra.mxu0 0.0
    %334 = vmatprep.subr.mxu0 0.0
    %335 = vmatpush1.msra.mxu0 0.0
    %336 = vmatprep.subr.mxu0 0.0
    %337 = vmatpush1.msra.mxu0 0.0
    %338 = vmatprep.subr.mxu0 0.0
    %339 = vmatpush1.msra.mxu0 0.0
    %340 = vmatprep.subr.mxu0 0.0
    %341 = vmatpush1.msra.mxu0 0.0
    %342 = vmatprep.subr.mxu0 0.0
    %343 = vmatpush1.msra.mxu0 0.0
    %344 = vmatprep.subr.mxu0 0.0
    %345 = vmatpush1.msra.mxu0 0.0
    %346 = vmatprep.subr.mxu0 0.0
    %347 = vmatpush1.msra.mxu0 0.0
    %348 = vmatprep.subr.mxu0 0.0
    %349 = vmatpush1.msra.mxu0 0.0
    %350 = vmatprep.subr.mxu0 0.0
    %351 = vmatpush1.msra.mxu0 0.0
    %352 = vmatprep.subr.mxu0 0.0
    %353 = vmatpush1.msra.mxu0 0.0
    %354 = vmatprep.subr.mxu0 0.0
    %355 = vmatpush1.msra.mxu0 %v317
    %356 = vmatprep.subr.mxu0 0.0
    %357 = vmatpush1.msra.mxu0 %v316
    %358 = vmatprep.subr.mxu0 0.0
    %359 = vmatpush2.msra.mxu0 0.0
    %360 = vmatprep.subr.mxu0 0.0
    %361 = vmatpush2.msra.mxu0 0.0
    %362 = vmatprep.subr.mxu0 0.0
    %363 = vmatpush2.msra.mxu0 0.0
    %364 = vmatprep.subr.mxu0 0.0
    %365 = vmatpush2.msra.mxu0 0.0
    %366 = vmatprep.subr.mxu0 0.0
    %367 = vmatpush2.msra.mxu0 0.0
    %368 = vmatprep.subr.mxu0 0.0
    %369 = vmatpush2.msra.mxu0 0.0
    %370 = vmatprep.subr.mxu0 0.0
    %371 = vmatpush2.msra.mxu0 0.0
    %372 = vmatprep.subr.mxu0 0.0
    %373 = vmatpush2.msra.mxu0 0.0
    %374 = vmatprep.subr.mxu0 0.0
    %375 = vmatpush2.msra.mxu0 0.0
    %376 = vmatprep.subr.mxu0 0.0
    %377 = vmatpush2.msra.mxu0 0.0
    %378 = vmatprep.subr.mxu0 0.0
    %379 = vmatpush2.msra.mxu0 0.0
    %380 = vmatprep.subr.mxu0 0.0
    %381 = vmatpush2.msra.mxu0 0.0
    %382 = vmatprep.subr.mxu0 0.0
    %383 = vmatpush2.msra.mxu0 0.0
    %384 = vmatprep.subr.mxu0 0.0
    %385 = vmatpush2.msra.mxu0 0.0
    %386 = vmatprep.subr.mxu0 0.0
    %387 = vmatpush2.msra.mxu0 0.0
    %388 = vmatprep.subr.mxu0 0.0
    %389 = vmatpush2.msra.mxu0 0.0
    %390 = vmatprep.mubr.f32.mxu0 0.0
    %391 = vmatmul.mubr.f32.gmra.mxu0 %v53
    %v392 = vpop.f32.mrf.mxu0
    %v393 = vadd.f32 %v324, %v392
    %v394 = vpop.f32.mrf.mxu0
    %395 = vmatprep.mubr.f32.mxu0 0.0
    %396 = vmatmul.mubr.f32.gmra.mxu0 %v56
    %v397 = vpop.f32.mrf.mxu0
    %v398 = vadd.f32 %v324, %v397
    %v399 = vpop.f32.mrf.mxu0
    %400 = vmatprep.mubr.f32.mxu0 0.0
    %401 = vmatmul.mubr.f32.gmra.mxu0 %v59
    %v402 = vpop.f32.mrf.mxu0
    %v403 = vadd.f32 %v324, %v402
    %v404 = vpop.f32.mrf.mxu0
    %405 = vmatprep.mubr.f32.mxu0 0.0
    %406 = vmatmul.mubr.f32.gmra.mxu0 %v62
    %v407 = vpop.f32.mrf.mxu0
    %v408 = vadd.f32 %v324, %v407
    %v409 = vpop.f32.mrf.mxu0
    %410 = vmatprep.mubr.f32.mxu0 0.0
    %411 = vmatmul.mubr.f32.gmra.mxu0 %v65
    %v412 = vpop.f32.mrf.mxu0
    %v413 = vadd.f32 %v324, %v412
    %v414 = vpop.f32.mrf.mxu0
    %415 = vmatprep.mubr.f32.mxu0 0.0
    %416 = vmatmul.mubr.f32.gmra.mxu0 %v68
    %v417 = vpop.f32.mrf.mxu0
    %v418 = vadd.f32 %v324, %v417
    %v419 = vpop.f32.mrf.mxu0
    %420 = vmatprep.mubr.f32.mxu0 0.0
    %421 = vmatmul.mubr.f32.gmra.mxu0 %v71
    %v422 = vpop.f32.mrf.mxu0
    %v423 = vadd.f32 %v324, %v422
    %v424 = vpop.f32.mrf.mxu0
    %425 = vmatprep.mubr.f32.mxu0 0.0
    %426 = vmatmul.mubr.f32.gmra.mxu0 %v74
    %v427 = vpop.f32.mrf.mxu0
    %v428 = vadd.f32 %v324, %v427
    %v429 = vpop.f32.mrf.mxu0
    %430 = vdwg.mxu0
    %s431 = scalar_lea.vmem [#allocation2], 128
    %432 = vst.msk [vmem:[%s431] sm:$0xff] %vm181, %v393
    %433 = vst.msk [vmem:[%s431 + $0x8] sm:$0xff] %vm181, %v398
    %434 = vst.msk [vmem:[%s431 + $0x10] sm:$0xff] %vm181, %v403
    %435 = vst.msk [vmem:[%s431 + $0x18] sm:$0xff] %vm181, %v408
    %436 = vst.msk [vmem:[%s431 + $0x20] sm:$0xff] %vm181, %v413
    %437 = vst.msk [vmem:[%s431 + $0x28] sm:$0xff] %vm181, %v418
    %438 = vst.msk [vmem:[%s431 + $0x30] sm:$0xff] %vm181, %v423
    %439 = vst.msk [vmem:[%s431 + $0x38] sm:$0xff] %vm181, %v428
    %s440 = scalar_lea.vmem %s1, 48
    %v441 = vld [vmem:[%s440] sm:$0xff]
    %v442 = vld [vmem:[%s440 + $0x8] sm:$0xff]
    %s443 = scalar_lea.vmem %s3, 3
    %v444 = vld [vmem:[%s443] sm:$0x1]
    %v446 = vlaneseq
    %v447 = vshrl.u32 %v446, 7
    %v448 = vsub.s32 0, %v447
    %v449 = vrot.slane %v444, %v448
    %451 = vmatprep.subr.mxu0 0.0
    %452 = vmatpush1.msra.mxu0 0.0
    %453 = vmatprep.subr.mxu0 0.0
    %454 = vmatpush1.msra.mxu0 0.0
    %455 = vmatprep.subr.mxu0 0.0
    %456 = vmatpush1.msra.mxu0 0.0
    %457 = vmatprep.subr.mxu0 0.0
    %458 = vmatpush1.msra.mxu0 0.0
    %459 = vmatprep.subr.mxu0 0.0
    %460 = vmatpush1.msra.mxu0 0.0
    %461 = vmatprep.subr.mxu0 0.0
    %462 = vmatpush1.msra.mxu0 0.0
    %463 = vmatprep.subr.mxu0 0.0
    %464 = vmatpush1.msra.mxu0 0.0
    %465 = vmatprep.subr.mxu0 0.0
    %466 = vmatpush1.msra.mxu0 0.0
    %467 = vmatprep.subr.mxu0 0.0
    %468 = vmatpush1.msra.mxu0 0.0
    %469 = vmatprep.subr.mxu0 0.0
    %470 = vmatpush1.msra.mxu0 0.0
    %471 = vmatprep.subr.mxu0 0.0
    %472 = vmatpush1.msra.mxu0 0.0
    %473 = vmatprep.subr.mxu0 0.0
    %474 = vmatpush1.msra.mxu0 0.0
    %475 = vmatprep.subr.mxu0 0.0
    %476 = vmatpush1.msra.mxu0 0.0
    %477 = vmatprep.subr.mxu0 0.0
    %478 = vmatpush1.msra.mxu0 0.0
    %479 = vmatprep.subr.mxu0 0.0
    %480 = vmatpush1.msra.mxu0 %v442
    %481 = vmatprep.subr.mxu0 0.0
    %482 = vmatpush1.msra.mxu0 %v441
    %483 = vmatprep.subr.mxu0 0.0
    %484 = vmatpush2.msra.mxu0 0.0
    %485 = vmatprep.subr.mxu0 0.0
    %486 = vmatpush2.msra.mxu0 0.0
    %487 = vmatprep.subr.mxu0 0.0
    %488 = vmatpush2.msra.mxu0 0.0
    %489 = vmatprep.subr.mxu0 0.0
    %490 = vmatpush2.msra.mxu0 0.0
    %491 = vmatprep.subr.mxu0 0.0
    %492 = vmatpush2.msra.mxu0 0.0
    %493 = vmatprep.subr.mxu0 0.0
    %494 = vmatpush2.msra.mxu0 0.0
    %495 = vmatprep.subr.mxu0 0.0
    %496 = vmatpush2.msra.mxu0 0.0
    %497 = vmatprep.subr.mxu0 0.0
    %498 = vmatpush2.msra.mxu0 0.0
    %499 = vmatprep.subr.mxu0 0.0
    %500 = vmatpush2.msra.mxu0 0.0
    %501 = vmatprep.subr.mxu0 0.0
    %502 = vmatpush2.msra.mxu0 0.0
    %503 = vmatprep.subr.mxu0 0.0
    %504 = vmatpush2.msra.mxu0 0.0
    %505 = vmatprep.subr.mxu0 0.0
    %506 = vmatpush2.msra.mxu0 0.0
    %507 = vmatprep.subr.mxu0 0.0
    %508 = vmatpush2.msra.mxu0 0.0
    %509 = vmatprep.subr.mxu0 0.0
    %510 = vmatpush2.msra.mxu0 0.0
    %511 = vmatprep.subr.mxu0 0.0
    %512 = vmatpush2.msra.mxu0 0.0
    %513 = vmatprep.subr.mxu0 0.0
    %514 = vmatpush2.msra.mxu0 0.0
    %515 = vmatprep.mubr.f32.mxu0 0.0
    %516 = vmatmul.mubr.f32.gmra.mxu0 %v53
    %v517 = vpop.f32.mrf.mxu0
    %v518 = vadd.f32 %v449, %v517
    %v519 = vpop.f32.mrf.mxu0
    %520 = vmatprep.mubr.f32.mxu0 0.0
    %521 = vmatmul.mubr.f32.gmra.mxu0 %v56
    %v522 = vpop.f32.mrf.mxu0
    %v523 = vadd.f32 %v449, %v522
    %v524 = vpop.f32.mrf.mxu0
    %525 = vmatprep.mubr.f32.mxu0 0.0
    %526 = vmatmul.mubr.f32.gmra.mxu0 %v59
    %v527 = vpop.f32.mrf.mxu0
    %v528 = vadd.f32 %v449, %v527
    %v529 = vpop.f32.mrf.mxu0
    %530 = vmatprep.mubr.f32.mxu0 0.0
    %531 = vmatmul.mubr.f32.gmra.mxu0 %v62
    %v532 = vpop.f32.mrf.mxu0
    %v533 = vadd.f32 %v449, %v532
    %v534 = vpop.f32.mrf.mxu0
    %535 = vmatprep.mubr.f32.mxu0 0.0
    %536 = vmatmul.mubr.f32.gmra.mxu0 %v65
    %v537 = vpop.f32.mrf.mxu0
    %v538 = vadd.f32 %v449, %v537
    %v539 = vpop.f32.mrf.mxu0
    %540 = vmatprep.mubr.f32.mxu0 0.0
    %541 = vmatmul.mubr.f32.gmra.mxu0 %v68
    %v542 = vpop.f32.mrf.mxu0
    %v543 = vadd.f32 %v449, %v542
    %v544 = vpop.f32.mrf.mxu0
    %545 = vmatprep.mubr.f32.mxu0 0.0
    %546 = vmatmul.mubr.f32.gmra.mxu0 %v71
    %v547 = vpop.f32.mrf.mxu0
    %v548 = vadd.f32 %v449, %v547
    %v549 = vpop.f32.mrf.mxu0
    %550 = vmatprep.mubr.f32.mxu0 0.0
    %551 = vmatmul.mubr.f32.gmra.mxu0 %v74
    %v552 = vpop.f32.mrf.mxu0
    %v553 = vadd.f32 %v449, %v552
    %v554 = vpop.f32.mrf.mxu0
    %555 = vdwg.mxu0
    %s556 = scalar_lea.vmem [#allocation2], 192
    %557 = vst.msk [vmem:[%s556] sm:$0xff] %vm181, %v518
    %558 = vst.msk [vmem:[%s556 + $0x8] sm:$0xff] %vm181, %v523
    %559 = vst.msk [vmem:[%s556 + $0x10] sm:$0xff] %vm181, %v528
    %560 = vst.msk [vmem:[%s556 + $0x18] sm:$0xff] %vm181, %v533
    %561 = vst.msk [vmem:[%s556 + $0x20] sm:$0xff] %vm181, %v538
    %562 = vst.msk [vmem:[%s556 + $0x28] sm:$0xff] %vm181, %v543
    %563 = vst.msk [vmem:[%s556 + $0x30] sm:$0xff] %vm181, %v548
    %564 = vst.msk [vmem:[%s556 + $0x38] sm:$0xff] %vm181, %v553
    %v565 = vld [vmem:[%s2] sm:$0xff]
    %v566 = vld [vmem:[%s2 + $0x8] sm:$0xff]
    %v567 = vld [vmem:[%s2 + $0x10] sm:$0xff]
    %v568 = vld [vmem:[%s2 + $0x18] sm:$0xff]
    %s569 = scalar_lea.vmem %s2, 32
    %v570 = vld [vmem:[%s569] sm:$0xff]
    %v571 = vld [vmem:[%s569 + $0x8] sm:$0xff]
    %v572 = vld [vmem:[%s569 + $0x10] sm:$0xff]
    %v573 = vld [vmem:[%s569 + $0x18] sm:$0xff]
    %s574 = scalar_lea.vmem %s2, 64
    %v575 = vld [vmem:[%s574] sm:$0xff]
    %v576 = vld [vmem:[%s574 + $0x8] sm:$0xff]
    %v577 = vld [vmem:[%s574 + $0x10] sm:$0xff]
    %v578 = vld [vmem:[%s574 + $0x18] sm:$0xff]
    %s579 = scalar_lea.vmem %s2, 96
    %v580 = vld [vmem:[%s579] sm:$0xff]
    %v581 = vld [vmem:[%s579 + $0x8] sm:$0xff]
    %v582 = vld [vmem:[%s579 + $0x10] sm:$0xff]
    %v583 = vld [vmem:[%s579 + $0x18] sm:$0xff]
    %v584 = vld [vmem:[#allocation2] sm:$0xff]
    %v586 = vsel %vm181, 0.0, 0
    %588 = vmatprep.subr.mxu0 0.0
    %589 = vmatpush1.msra.mxu0 0.0
    %590 = vmatprep.subr.mxu0 0.0
    %591 = vmatpush1.msra.mxu0 0.0
    %592 = vmatprep.subr.mxu0 0.0
    %593 = vmatpush1.msra.mxu0 0.0
    %594 = vmatprep.subr.mxu0 0.0
    %595 = vmatpush1.msra.mxu0 0.0
    %596 = vmatprep.subr.mxu0 0.0
    %597 = vmatpush1.msra.mxu0 0.0
    %598 = vmatprep.subr.mxu0 0.0
    %599 = vmatpush1.msra.mxu0 0.0
    %600 = vmatprep.subr.mxu0 0.0
    %601 = vmatpush1.msra.mxu0 0.0
    %602 = vmatprep.subr.mxu0 0.0
    %603 = vmatpush1.msra.mxu0 0.0
    %604 = vmatprep.subr.mxu0 0.0
    %605 = vmatpush1.msra.mxu0 0.0
    %606 = vmatprep.subr.mxu0 0.0
    %607 = vmatpush1.msra.mxu0 0.0
    %608 = vmatprep.subr.mxu0 0.0
    %609 = vmatpush1.msra.mxu0 0.0
    %610 = vmatprep.subr.mxu0 0.0
    %611 = vmatpush1.msra.mxu0 0.0
    %612 = vmatprep.subr.mxu0 0.0
    %613 = vmatpush1.msra.mxu0 %v568
    %614 = vmatprep.subr.mxu0 0.0
    %615 = vmatpush1.msra.mxu0 %v567
    %616 = vmatprep.subr.mxu0 0.0
    %617 = vmatpush1.msra.mxu0 %v566
    %618 = vmatprep.subr.mxu0 0.0
    %619 = vmatpush1.msra.mxu0 %v565
    %620 = vmatprep.subr.mxu0 0.0
    %621 = vmatpush2.msra.mxu0 0.0
    %622 = vmatprep.subr.mxu0 0.0
    %623 = vmatpush2.msra.mxu0 0.0
    %624 = vmatprep.subr.mxu0 0.0
    %625 = vmatpush2.msra.mxu0 0.0
    %626 = vmatprep.subr.mxu0 0.0
    %627 = vmatpush2.msra.mxu0 0.0
    %628 = vmatprep.subr.mxu0 0.0
    %629 = vmatpush2.msra.mxu0 0.0
    %630 = vmatprep.subr.mxu0 0.0
    %631 = vmatpush2.msra.mxu0 0.0
    %632 = vmatprep.subr.mxu0 0.0
    %633 = vmatpush2.msra.mxu0 0.0
    %634 = vmatprep.subr.mxu0 0.0
    %635 = vmatpush2.msra.mxu0 0.0
    %636 = vmatprep.subr.mxu0 0.0
    %637 = vmatpush2.msra.mxu0 0.0
    %638 = vmatprep.subr.mxu0 0.0
    %639 = vmatpush2.msra.mxu0 0.0
    %640 = vmatprep.subr.mxu0 0.0
    %641 = vmatpush2.msra.mxu0 0.0
    %642 = vmatprep.subr.mxu0 0.0
    %643 = vmatpush2.msra.mxu0 0.0
    %644 = vmatprep.subr.mxu0 0.0
    %645 = vmatpush2.msra.mxu0 0.0
    %646 = vmatprep.subr.mxu0 0.0
    %647 = vmatpush2.msra.mxu0 0.0
    %648 = vmatprep.subr.mxu0 0.0
    %649 = vmatpush2.msra.mxu0 0.0
    %650 = vmatprep.subr.mxu0 0.0
    %651 = vmatpush2.msra.mxu0 0.0
    %652 = vmatprep.mubr.f32.mxu0 0.0
    %653 = vmatmul.mubr.f32.gmra.mxu0 %v586
    %v654 = vpop.f32.mrf.mxu0
    %v655 = vadd.f32 0.0, %v654
    %v656 = vpop.f32.mrf.mxu0
    %657 = vdwg.mxu0
    %v658 = vadd.f32 %v584, %v655
    %v659 = vld [vmem:[%s306] sm:$0xff]
    %660 = vmatprep.subr.mxu0 0.0
    %661 = vmatpush1.msra.mxu0 0.0
    %662 = vmatprep.subr.mxu0 0.0
    %663 = vmatpush1.msra.mxu0 0.0
    %664 = vmatprep.subr.mxu0 0.0
    %665 = vmatpush1.msra.mxu0 0.0
    %666 = vmatprep.subr.mxu0 0.0
    %667 = vmatpush1.msra.mxu0 0.0
    %668 = vmatprep.subr.mxu0 0.0
    %669 = vmatpush1.msra.mxu0 0.0
    %670 = vmatprep.subr.mxu0 0.0
    %671 = vmatpush1.msra.mxu0 0.0
    %672 = vmatprep.subr.mxu0 0.0
    %673 = vmatpush1.msra.mxu0 0.0
    %674 = vmatprep.subr.mxu0 0.0
    %675 = vmatpush1.msra.mxu0 0.0
    %676 = vmatprep.subr.mxu0 0.0
    %677 = vmatpush1.msra.mxu0 0.0
    %678 = vmatprep.subr.mxu0 0.0
    %679 = vmatpush1.msra.mxu0 0.0
    %680 = vmatprep.subr.mxu0 0.0
    %681 = vmatpush1.msra.mxu0 0.0
    %682 = vmatprep.subr.mxu0 0.0
    %683 = vmatpush1.msra.mxu0 0.0
    %684 = vmatprep.subr.mxu0 0.0
    %685 = vmatpush1.msra.mxu0 %v573
    %686 = vmatprep.subr.mxu0 0.0
    %687 = vmatpush1.msra.mxu0 %v572
    %688 = vmatprep.subr.mxu0 0.0
    %689 = vmatpush1.msra.mxu0 %v571
    %690 = vmatprep.subr.mxu0 0.0
    %691 = vmatpush1.msra.mxu0 %v570
    %692 = vmatprep.subr.mxu0 0.0
    %693 = vmatpush2.msra.mxu0 0.0
    %694 = vmatprep.subr.mxu0 0.0
    %695 = vmatpush2.msra.mxu0 0.0
    %696 = vmatprep.subr.mxu0 0.0
    %697 = vmatpush2.msra.mxu0 0.0
    %698 = vmatprep.subr.mxu0 0.0
    %699 = vmatpush2.msra.mxu0 0.0
    %700 = vmatprep.subr.mxu0 0.0
    %701 = vmatpush2.msra.mxu0 0.0
    %702 = vmatprep.subr.mxu0 0.0
    %703 = vmatpush2.msra.mxu0 0.0
    %704 = vmatprep.subr.mxu0 0.0
    %705 = vmatpush2.msra.mxu0 0.0
    %706 = vmatprep.subr.mxu0 0.0
    %707 = vmatpush2.msra.mxu0 0.0
    %708 = vmatprep.subr.mxu0 0.0
    %709 = vmatpush2.msra.mxu0 0.0
    %710 = vmatprep.subr.mxu0 0.0
    %711 = vmatpush2.msra.mxu0 0.0
    %712 = vmatprep.subr.mxu0 0.0
    %713 = vmatpush2.msra.mxu0 0.0
    %714 = vmatprep.subr.mxu0 0.0
    %715 = vmatpush2.msra.mxu0 0.0
    %716 = vmatprep.subr.mxu0 0.0
    %717 = vmatpush2.msra.mxu0 0.0
    %718 = vmatprep.subr.mxu0 0.0
    %719 = vmatpush2.msra.mxu0 0.0
    %720 = vmatprep.subr.mxu0 0.0
    %721 = vmatpush2.msra.mxu0 0.0
    %722 = vmatprep.subr.mxu0 0.0
    %723 = vmatpush2.msra.mxu0 0.0
    %724 = vmatprep.mubr.f32.mxu0 0.0
    %725 = vmatmul.mubr.f32.gmra.mxu0 %v586
    %v726 = vpop.f32.mrf.mxu0
    %v727 = vadd.f32 0.0, %v726
    %v728 = vpop.f32.mrf.mxu0
    %729 = vdwg.mxu0
    %v730 = vadd.f32 %v659, %v727
    %v731 = vld [vmem:[%s431] sm:$0xff]
    %732 = vmatprep.subr.mxu0 0.0
    %733 = vmatpush1.msra.mxu0 0.0
    %734 = vmatprep.subr.mxu0 0.0
    %735 = vmatpush1.msra.mxu0 0.0
    %736 = vmatprep.subr.mxu0 0.0
    %737 = vmatpush1.msra.mxu0 0.0
    %738 = vmatprep.subr.mxu0 0.0
    %739 = vmatpush1.msra.mxu0 0.0
    %740 = vmatprep.subr.mxu0 0.0
    %741 = vmatpush1.msra.mxu0 0.0
    %742 = vmatprep.subr.mxu0 0.0
    %743 = vmatpush1.msra.mxu0 0.0
    %744 = vmatprep.subr.mxu0 0.0
    %745 = vmatpush1.msra.mxu0 0.0
    %746 = vmatprep.subr.mxu0 0.0
    %747 = vmatpush1.msra.mxu0 0.0
    %748 = vmatprep.subr.mxu0 0.0
    %749 = vmatpush1.msra.mxu0 0.0
    %750 = vmatprep.subr.mxu0 0.0
    %751 = vmatpush1.msra.mxu0 0.0
    %752 = vmatprep.subr.mxu0 0.0
    %753 = vmatpush1.msra.mxu0 0.0
    %754 = vmatprep.subr.mxu0 0.0
    %755 = vmatpush1.msra.mxu0 0.0
    %756 = vmatprep.subr.mxu0 0.0
    %757 = vmatpush1.msra.mxu0 %v578
    %758 = vmatprep.subr.mxu0 0.0
    %759 = vmatpush1.msra.mxu0 %v577
    %760 = vmatprep.subr.mxu0 0.0
    %761 = vmatpush1.msra.mxu0 %v576
    %762 = vmatprep.subr.mxu0 0.0
    %763 = vmatpush1.msra.mxu0 %v575
    %764 = vmatprep.subr.mxu0 0.0
    %765 = vmatpush2.msra.mxu0 0.0
    %766 = vmatprep.subr.mxu0 0.0
    %767 = vmatpush2.msra.mxu0 0.0
    %768 = vmatprep.subr.mxu0 0.0
    %769 = vmatpush2.msra.mxu0 0.0
    %770 = vmatprep.subr.mxu0 0.0
    %771 = vmatpush2.msra.mxu0 0.0
    %772 = vmatprep.subr.mxu0 0.0
    %773 = vmatpush2.msra.mxu0 0.0
    %774 = vmatprep.subr.mxu0 0.0
    %775 = vmatpush2.msra.mxu0 0.0
    %776 = vmatprep.subr.mxu0 0.0
    %777 = vmatpush2.msra.mxu0 0.0
    %778 = vmatprep.subr.mxu0 0.0
    %779 = vmatpush2.msra.mxu0 0.0
    %780 = vmatprep.subr.mxu0 0.0
    %781 = vmatpush2.msra.mxu0 0.0
    %782 = vmatprep.subr.mxu0 0.0
    %783 = vmatpush2.msra.mxu0 0.0
    %784 = vmatprep.subr.mxu0 0.0
    %785 = vmatpush2.msra.mxu0 0.0
    %786 = vmatprep.subr.mxu0 0.0
    %787 = vmatpush2.msra.mxu0 0.0
    %788 = vmatprep.subr.mxu0 0.0
    %789 = vmatpush2.msra.mxu0 0.0
    %790 = vmatprep.subr.mxu0 0.0
    %791 = vmatpush2.msra.mxu0 0.0
    %792 = vmatprep.subr.mxu0 0.0
    %793 = vmatpush2.msra.mxu0 0.0
    %794 = vmatprep.subr.mxu0 0.0
    %795 = vmatpush2.msra.mxu0 0.0
    %796 = vmatprep.mubr.f32.mxu0 0.0
    %797 = vmatmul.mubr.f32.gmra.mxu0 %v586
    %v798 = vpop.f32.mrf.mxu0
    %v799 = vadd.f32 0.0, %v798
    %v800 = vpop.f32.mrf.mxu0
    %801 = vdwg.mxu0
    %v802 = vadd.f32 %v731, %v799
    %v803 = vld [vmem:[%s556] sm:$0xff]
    %804 = vmatprep.subr.mxu0 0.0
    %805 = vmatpush1.msra.mxu0 0.0
    %806 = vmatprep.subr.mxu0 0.0
    %807 = vmatpush1.msra.mxu0 0.0
    %808 = vmatprep.subr.mxu0 0.0
    %809 = vmatpush1.msra.mxu0 0.0
    %810 = vmatprep.subr.mxu0 0.0
    %811 = vmatpush1.msra.mxu0 0.0
    %812 = vmatprep.subr.mxu0 0.0
    %813 = vmatpush1.msra.mxu0 0.0
    %814 = vmatprep.subr.mxu0 0.0
    %815 = vmatpush1.msra.mxu0 0.0
    %816 = vmatprep.subr.mxu0 0.0
    %817 = vmatpush1.msra.mxu0 0.0
    %818 = vmatprep.subr.mxu0 0.0
    %819 = vmatpush1.msra.mxu0 0.0
    %820 = vmatprep.subr.mxu0 0.0
    %821 = vmatpush1.msra.mxu0 0.0
    %822 = vmatprep.subr.mxu0 0.0
    %823 = vmatpush1.msra.mxu0 0.0
    %824 = vmatprep.subr.mxu0 0.0
    %825 = vmatpush1.msra.mxu0 0.0
    %826 = vmatprep.subr.mxu0 0.0
    %827 = vmatpush1.msra.mxu0 0.0
    %828 = vmatprep.subr.mxu0 0.0
    %829 = vmatpush1.msra.mxu0 %v583
    %830 = vmatprep.subr.mxu0 0.0
    %831 = vmatpush1.msra.mxu0 %v582
    %832 = vmatprep.subr.mxu0 0.0
    %833 = vmatpush1.msra.mxu0 %v581
    %834 = vmatprep.subr.mxu0 0.0
    %835 = vmatpush1.msra.mxu0 %v580
    %836 = vmatprep.subr.mxu0 0.0
    %837 = vmatpush2.msra.mxu0 0.0
    %838 = vmatprep.subr.mxu0 0.0
    %839 = vmatpush2.msra.mxu0 0.0
    %840 = vmatprep.subr.mxu0 0.0
    %841 = vmatpush2.msra.mxu0 0.0
    %842 = vmatprep.subr.mxu0 0.0
    %843 = vmatpush2.msra.mxu0 0.0
    %844 = vmatprep.subr.mxu0 0.0
    %845 = vmatpush2.msra.mxu0 0.0
    %846 = vmatprep.subr.mxu0 0.0
    %847 = vmatpush2.msra.mxu0 0.0
    %848 = vmatprep.subr.mxu0 0.0
    %849 = vmatpush2.msra.mxu0 0.0
    %850 = vmatprep.subr.mxu0 0.0
    %851 = vmatpush2.msra.mxu0 0.0
    %852 = vmatprep.subr.mxu0 0.0
    %853 = vmatpush2.msra.mxu0 0.0
    %854 = vmatprep.subr.mxu0 0.0
    %855 = vmatpush2.msra.mxu0 0.0
    %856 = vmatprep.subr.mxu0 0.0
    %857 = vmatpush2.msra.mxu0 0.0
    %858 = vmatprep.subr.mxu0 0.0
    %859 = vmatpush2.msra.mxu0 0.0
    %860 = vmatprep.subr.mxu0 0.0
    %861 = vmatpush2.msra.mxu0 0.0
    %862 = vmatprep.subr.mxu0 0.0
    %863 = vmatpush2.msra.mxu0 0.0
    %864 = vmatprep.subr.mxu0 0.0
    %865 = vmatpush2.msra.mxu0 0.0
    %866 = vmatprep.subr.mxu0 0.0
    %867 = vmatpush2.msra.mxu0 0.0
    %868 = vmatprep.mubr.f32.mxu0 0.0
    %869 = vmatmul.mubr.f32.gmra.mxu0 %v586
    %v870 = vpop.f32.mrf.mxu0
    %v871 = vadd.f32 0.0, %v870
    %v872 = vpop.f32.mrf.mxu0
    %873 = vdwg.mxu0
    %v874 = vadd.f32 %v803, %v871
    %v875 = vxor.u32 %v658, 2147483648
    %v876 = vmul.f32 %v875, 1.442695
    %v877 = vpow.pop %v876
    %v878 = vadd.f32 %v877, 1.0
    %v879 = vrcp.pop %v878
    %v880 = vmul.f32 1.0, %v879
    %v881 = vxor.u32 %v730, 2147483648
    %v882 = vmul.f32 %v881, 1.442695
    %v883 = vpow.pop %v882
    %v884 = vadd.f32 %v883, 1.0
    %v885 = vrcp.pop %v884
    %v886 = vmul.f32 1.0, %v885
    %v887 = vtanh.pop %v802
    %v888 = vxor.u32 %v874, 2147483648
    %v889 = vmul.f32 %v888, 1.442695
    %v890 = vpow.pop %v889
    %v891 = vadd.f32 %v890, 1.0
    %v892 = vrcp.pop %v891
    %v893 = vmul.f32 1.0, %v892
    %v894 = vmul.f32 %v886, 0.0
    %v895 = vmul.f32 %v880, %v887
    %v896 = vadd.f32 %v894, %v895
    %v897 = vtanh.pop %v896
    %v898 = vmul.f32 %v893, %v897
    %899 = vst.msk [vmem:[%s8] sm:$0xff] %vm181, %v898
    %s900 = scalar_lea.vmem [#allocation2], 8
    %v901 = vld [vmem:[%s900] sm:$0xff]
    %v903 = vsel %vm181, %v898, 0
    %905 = vmatprep.subr.mxu0 0.0
    %906 = vmatpush1.msra.mxu0 0.0
    %907 = vmatprep.subr.mxu0 0.0
    %908 = vmatpush1.msra.mxu0 0.0
    %909 = vmatprep.subr.mxu0 0.0
    %910 = vmatpush1.msra.mxu0 0.0
    %911 = vmatprep.subr.mxu0 0.0
    %912 = vmatpush1.msra.mxu0 0.0
    %913 = vmatprep.subr.mxu0 0.0
    %914 = vmatpush1.msra.mxu0 0.0
    %915 = vmatprep.subr.mxu0 0.0
    %916 = vmatpush1.msra.mxu0 0.0
    %917 = vmatprep.subr.mxu0 0.0
    %918 = vmatpush1.msra.mxu0 0.0
    %919 = vmatprep.subr.mxu0 0.0
    %920 = vmatpush1.msra.mxu0 0.0
    %921 = vmatprep.subr.mxu0 0.0
    %922 = vmatpush1.msra.mxu0 0.0
    %923 = vmatprep.subr.mxu0 0.0
    %924 = vmatpush1.msra.mxu0 0.0
    %925 = vmatprep.subr.mxu0 0.0
    %926 = vmatpush1.msra.mxu0 0.0
    %927 = vmatprep.subr.mxu0 0.0
    %928 = vmatpush1.msra.mxu0 0.0
    %929 = vmatprep.subr.mxu0 0.0
    %930 = vmatpush1.msra.mxu0 %v568
    %931 = vmatprep.subr.mxu0 0.0
    %932 = vmatpush1.msra.mxu0 %v567
    %933 = vmatprep.subr.mxu0 0.0
    %934 = vmatpush1.msra.mxu0 %v566
    %935 = vmatprep.subr.mxu0 0.0
    %936 = vmatpush1.msra.mxu0 %v565
    %937 = vmatprep.subr.mxu0 0.0
    %938 = vmatpush2.msra.mxu0 0.0
    %939 = vmatprep.subr.mxu0 0.0
    %940 = vmatpush2.msra.mxu0 0.0
    %941 = vmatprep.subr.mxu0 0.0
    %942 = vmatpush2.msra.mxu0 0.0
    %943 = vmatprep.subr.mxu0 0.0
    %944 = vmatpush2.msra.mxu0 0.0
    %945 = vmatprep.subr.mxu0 0.0
    %946 = vmatpush2.msra.mxu0 0.0
    %947 = vmatprep.subr.mxu0 0.0
    %948 = vmatpush2.msra.mxu0 0.0
    %949 = vmatprep.subr.mxu0 0.0
    %950 = vmatpush2.msra.mxu0 0.0
    %951 = vmatprep.subr.mxu0 0.0
    %952 = vmatpush2.msra.mxu0 0.0
    %953 = vmatprep.subr.mxu0 0.0
    %954 = vmatpush2.msra.mxu0 0.0
    %955 = vmatprep.subr.mxu0 0.0
    %956 = vmatpush2.msra.mxu0 0.0
    %957 = vmatprep.subr.mxu0 0.0
    %958 = vmatpush2.msra.mxu0 0.0
    %959 = vmatprep.subr.mxu0 0.0
    %960 = vmatpush2.msra.mxu0 0.0
    %961 = vmatprep.subr.mxu0 0.0
    %962 = vmatpush2.msra.mxu0 0.0
    %963 = vmatprep.subr.mxu0 0.0
    %964 = vmatpush2.msra.mxu0 0.0
    %965 = vmatprep.subr.mxu0 0.0
    %966 = vmatpush2.msra.mxu0 0.0
    %967 = vmatprep.subr.mxu0 0.0
    %968 = vmatpush2.msra.mxu0 0.0
    %969 = vmatprep.mubr.f32.mxu0 0.0
    %970 = vmatmul.mubr.f32.gmra.mxu0 %v903
    %v971 = vpop.f32.mrf.mxu0
    %v972 = vadd.f32 0.0, %v971
    %v973 = vpop.f32.mrf.mxu0
    %974 = vdwg.mxu0
    %v975 = vadd.f32 %v901, %v972
    %s976 = scalar_lea.vmem [#allocation2], 72
    %v977 = vld [vmem:[%s976] sm:$0xff]
    %978 = vmatprep.subr.mxu0 0.0
    %979 = vmatpush1.msra.mxu0 0.0
    %980 = vmatprep.subr.mxu0 0.0
    %981 = vmatpush1.msra.mxu0 0.0
    %982 = vmatprep.subr.mxu0 0.0
    %983 = vmatpush1.msra.mxu0 0.0
    %984 = vmatprep.subr.mxu0 0.0
    %985 = vmatpush1.msra.mxu0 0.0
    %986 = vmatprep.subr.mxu0 0.0
    %987 = vmatpush1.msra.mxu0 0.0
    %988 = vmatprep.subr.mxu0 0.0
    %989 = vmatpush1.msra.mxu0 0.0
    %990 = vmatprep.subr.mxu0 0.0
    %991 = vmatpush1.msra.mxu0 0.0
    %992 = vmatprep.subr.mxu0 0.0
    %993 = vmatpush1.msra.mxu0 0.0
    %994 = vmatprep.subr.mxu0 0.0
    %995 = vmatpush1.msra.mxu0 0.0
    %996 = vmatprep.subr.mxu0 0.0
    %997 = vmatpush1.msra.mxu0 0.0
    %998 = vmatprep.subr.mxu0 0.0
    %999 = vmatpush1.msra.mxu0 0.0
    %1000 = vmatprep.subr.mxu0 0.0
    %1001 = vmatpush1.msra.mxu0 0.0
    %1002 = vmatprep.subr.mxu0 0.0
    %1003 = vmatpush1.msra.mxu0 %v573
    %1004 = vmatprep.subr.mxu0 0.0
    %1005 = vmatpush1.msra.mxu0 %v572
    %1006 = vmatprep.subr.mxu0 0.0
    %1007 = vmatpush1.msra.mxu0 %v571
    %1008 = vmatprep.subr.mxu0 0.0
    %1009 = vmatpush1.msra.mxu0 %v570
    %1010 = vmatprep.subr.mxu0 0.0
    %1011 = vmatpush2.msra.mxu0 0.0
    %1012 = vmatprep.subr.mxu0 0.0
    %1013 = vmatpush2.msra.mxu0 0.0
    %1014 = vmatprep.subr.mxu0 0.0
    %1015 = vmatpush2.msra.mxu0 0.0
    %1016 = vmatprep.subr.mxu0 0.0
    %1017 = vmatpush2.msra.mxu0 0.0
    %1018 = vmatprep.subr.mxu0 0.0
    %1019 = vmatpush2.msra.mxu0 0.0
    %1020 = vmatprep.subr.mxu0 0.0
    %1021 = vmatpush2.msra.mxu0 0.0
    %1022 = vmatprep.subr.mxu0 0.0
    %1023 = vmatpush2.msra.mxu0 0.0
    %1024 = vmatprep.subr.mxu0 0.0
    %1025 = vmatpush2.msra.mxu0 0.0
    %1026 = vmatprep.subr.mxu0 0.0
    %1027 = vmatpush2.msra.mxu0 0.0
    %1028 = vmatprep.subr.mxu0 0.0
    %1029 = vmatpush2.msra.mxu0 0.0
    %1030 = vmatprep.subr.mxu0 0.0
    %1031 = vmatpush2.msra.mxu0 0.0
    %1032 = vmatprep.subr.mxu0 0.0
    %1033 = vmatpush2.msra.mxu0 0.0
    %1034 = vmatprep.subr.mxu0 0.0
    %1035 = vmatpush2.msra.mxu0 0.0
    %1036 = vmatprep.subr.mxu0 0.0
    %1037 = vmatpush2.msra.mxu0 0.0
    %1038 = vmatprep.subr.mxu0 0.0
    %1039 = vmatpush2.msra.mxu0 0.0
    %1040 = vmatprep.subr.mxu0 0.0
    %1041 = vmatpush2.msra.mxu0 0.0
    %1042 = vmatprep.mubr.f32.mxu0 0.0
    %1043 = vmatmul.mubr.f32.gmra.mxu0 %v903
    %v1044 = vpop.f32.mrf.mxu0
    %v1045 = vadd.f32 0.0, %v1044
    %v1046 = vpop.f32.mrf.mxu0
    %1047 = vdwg.mxu0
    %v1048 = vadd.f32 %v977, %v1045
    %s1049 = scalar_lea.vmem [#allocation2], 136
    %v1050 = vld [vmem:[%s1049] sm:$0xff]
    %1051 = vmatprep.subr.mxu0 0.0
    %1052 = vmatpush1.msra.mxu0 0.0
    %1053 = vmatprep.subr.mxu0 0.0
    %1054 = vmatpush1.msra.mxu0 0.0
    %1055 = vmatprep.subr.mxu0 0.0
    %1056 = vmatpush1.msra.mxu0 0.0
    %1057 = vmatprep.subr.mxu0 0.0
    %1058 = vmatpush1.msra.mxu0 0.0
    %1059 = vmatprep.subr.mxu0 0.0
    %1060 = vmatpush1.msra.mxu0 0.0
    %1061 = vmatprep.subr.mxu0 0.0
    %1062 = vmatpush1.msra.mxu0 0.0
    %1063 = vmatprep.subr.mxu0 0.0
    %1064 = vmatpush1.msra.mxu0 0.0
    %1065 = vmatprep.subr.mxu0 0.0
    %1066 = vmatpush1.msra.mxu0 0.0
    %1067 = vmatprep.subr.mxu0 0.0
    %1068 = vmatpush1.msra.mxu0 0.0
    %1069 = vmatprep.subr.mxu0 0.0
    %1070 = vmatpush1.msra.mxu0 0.0
    %1071 = vmatprep.subr.mxu0 0.0
    %1072 = vmatpush1.msra.mxu0 0.0
    %1073 = vmatprep.subr.mxu0 0.0
    %1074 = vmatpush1.msra.mxu0 0.0
    %1075 = vmatprep.subr.mxu0 0.0
    %1076 = vmatpush1.msra.mxu0 %v578
    %1077 = vmatprep.subr.mxu0 0.0
    %1078 = vmatpush1.msra.mxu0 %v577
    %1079 = vmatprep.subr.mxu0 0.0
    %1080 = vmatpush1.msra.mxu0 %v576
    %1081 = vmatprep.subr.mxu0 0.0
    %1082 = vmatpush1.msra.mxu0 %v575
    %1083 = vmatprep.subr.mxu0 0.0
    %1084 = vmatpush2.msra.mxu0 0.0
    %1085 = vmatprep.subr.mxu0 0.0
    %1086 = vmatpush2.msra.mxu0 0.0
    %1087 = vmatprep.subr.mxu0 0.0
    %1088 = vmatpush2.msra.mxu0 0.0
    %1089 = vmatprep.subr.mxu0 0.0
    %1090 = vmatpush2.msra.mxu0 0.0
    %1091 = vmatprep.subr.mxu0 0.0
    %1092 = vmatpush2.msra.mxu0 0.0
    %1093 = vmatprep.subr.mxu0 0.0
    %1094 = vmatpush2.msra.mxu0 0.0
    %1095 = vmatprep.subr.mxu0 0.0
    %1096 = vmatpush2.msra.mxu0 0.0
    %1097 = vmatprep.subr.mxu0 0.0
    %1098 = vmatpush2.msra.mxu0 0.0
    %1099 = vmatprep.subr.mxu0 0.0
    %1100 = vmatpush2.msra.mxu0 0.0
    %1101 = vmatprep.subr.mxu0 0.0
    %1102 = vmatpush2.msra.mxu0 0.0
    %1103 = vmatprep.subr.mxu0 0.0
    %1104 = vmatpush2.msra.mxu0 0.0
    %1105 = vmatprep.subr.mxu0 0.0
    %1106 = vmatpush2.msra.mxu0 0.0
    %1107 = vmatprep.subr.mxu0 0.0
    %1108 = vmatpush2.msra.mxu0 0.0
    %1109 = vmatprep.subr.mxu0 0.0
    %1110 = vmatpush2.msra.mxu0 0.0
    %1111 = vmatprep.subr.mxu0 0.0
    %1112 = vmatpush2.msra.mxu0 0.0
    %1113 = vmatprep.subr.mxu0 0.0
    %1114 = vmatpush2.msra.mxu0 0.0
    %1115 = vmatprep.mubr.f32.mxu0 0.0
    %1116 = vmatmul.mubr.f32.gmra.mxu0 %v903
    %v1117 = vpop.f32.mrf.mxu0
    %v1118 = vadd.f32 0.0, %v1117
    %v1119 = vpop.f32.mrf.mxu0
    %1120 = vdwg.mxu0
    %v1121 = vadd.f32 %v1050, %v1118
    %s1122 = scalar_lea.vmem [#allocation2], 200
    %v1123 = vld [vmem:[%s1122] sm:$0xff]
    %1124 = vmatprep.subr.mxu0 0.0
    %1125 = vmatpush1.msra.mxu0 0.0
    %1126 = vmatprep.subr.mxu0 0.0
    %1127 = vmatpush1.msra.mxu0 0.0
    %1128 = vmatprep.subr.mxu0 0.0
    %1129 = vmatpush1.msra.mxu0 0.0
    %1130 = vmatprep.subr.mxu0 0.0
    %1131 = vmatpush1.msra.mxu0 0.0
    %1132 = vmatprep.subr.mxu0 0.0
    %1133 = vmatpush1.msra.mxu0 0.0
    %1134 = vmatprep.subr.mxu0 0.0
    %1135 = vmatpush1.msra.mxu0 0.0
    %1136 = vmatprep.subr.mxu0 0.0
    %1137 = vmatpush1.msra.mxu0 0.0
    %1138 = vmatprep.subr.mxu0 0.0
    %1139 = vmatpush1.msra.mxu0 0.0
    %1140 = vmatprep.subr.mxu0 0.0
    %1141 = vmatpush1.msra.mxu0 0.0
    %1142 = vmatprep.subr.mxu0 0.0
    %1143 = vmatpush1.msra.mxu0 0.0
    %1144 = vmatprep.subr.mxu0 0.0
    %1145 = vmatpush1.msra.mxu0 0.0
    %1146 = vmatprep.subr.mxu0 0.0
    %1147 = vmatpush1.msra.mxu0 0.0
    %1148 = vmatprep.subr.mxu0 0.0
    %1149 = vmatpush1.msra.mxu0 %v583
    %1150 = vmatprep.subr.mxu0 0.0
    %1151 = vmatpush1.msra.mxu0 %v582
    %1152 = vmatprep.subr.mxu0 0.0
    %1153 = vmatpush1.msra.mxu0 %v581
    %1154 = vmatprep.subr.mxu0 0.0
    %1155 = vmatpush1.msra.mxu0 %v580
    %1156 = vmatprep.subr.mxu0 0.0
    %1157 = vmatpush2.msra.mxu0 0.0
    %1158 = vmatprep.subr.mxu0 0.0
    %1159 = vmatpush2.msra.mxu0 0.0
    %1160 = vmatprep.subr.mxu0 0.0
    %1161 = vmatpush2.msra.mxu0 0.0
    %1162 = vmatprep.subr.mxu0 0.0
    %1163 = vmatpush2.msra.mxu0 0.0
    %1164 = vmatprep.subr.mxu0 0.0
    %1165 = vmatpush2.msra.mxu0 0.0
    %1166 = vmatprep.subr.mxu0 0.0
    %1167 = vmatpush2.msra.mxu0 0.0
    %1168 = vmatprep.subr.mxu0 0.0
    %1169 = vmatpush2.msra.mxu0 0.0
    %1170 = vmatprep.subr.mxu0 0.0
    %1171 = vmatpush2.msra.mxu0 0.0
    %1172 = vmatprep.subr.mxu0 0.0
    %1173 = vmatpush2.msra.mxu0 0.0
    %1174 = vmatprep.subr.mxu0 0.0
    %1175 = vmatpush2.msra.mxu0 0.0
    %1176 = vmatprep.subr.mxu0 0.0
    %1177 = vmatpush2.msra.mxu0 0.0
    %1178 = vmatprep.subr.mxu0 0.0
    %1179 = vmatpush2.msra.mxu0 0.0
    %1180 = vmatprep.subr.mxu0 0.0
    %1181 = vmatpush2.msra.mxu0 0.0
    %1182 = vmatprep.subr.mxu0 0.0
    %1183 = vmatpush2.msra.mxu0 0.0
    %1184 = vmatprep.subr.mxu0 0.0
    %1185 = vmatpush2.msra.mxu0 0.0
    %1186 = vmatprep.subr.mxu0 0.0
    %1187 = vmatpush2.msra.mxu0 0.0
    %1188 = vmatprep.mubr.f32.mxu0 0.0
    %1189 = vmatmul.mubr.f32.gmra.mxu0 %v903
    %v1190 = vpop.f32.mrf.mxu0
    %v1191 = vadd.f32 0.0, %v1190
    %v1192 = vpop.f32.mrf.mxu0
    %1193 = vdwg.mxu0
    %v1194 = vadd.f32 %v1123, %v1191
    %v1195 = vxor.u32 %v975, 2147483648
    %v1196 = vmul.f32 %v1195, 1.442695
    %v1197 = vpow.pop %v1196
    %v1198 = vadd.f32 %v1197, 1.0
    %v1199 = vrcp.pop %v1198
    %v1200 = vmul.f32 1.0, %v1199
    %v1201 = vxor.u32 %v1048, 2147483648
    %v1202 = vmul.f32 %v1201, 1.442695
    %v1203 = vpow.pop %v1202
    %v1204 = vadd.f32 %v1203, 1.0
    %v1205 = vrcp.pop %v1204
    %v1206 = vmul.f32 1.0, %v1205
    %v1207 = vtanh.pop %v1121
    %v1208 = vxor.u32 %v1194, 2147483648
    %v1209 = vmul.f32 %v1208, 1.442695
    %v1210 = vpow.pop %v1209
    %v1211 = vadd.f32 %v1210, 1.0
    %v1212 = vrcp.pop %v1211
    %v1213 = vmul.f32 1.0, %v1212
    %v1214 = vmul.f32 %v1206, %v896
    %v1215 = vmul.f32 %v1200, %v1207
    %v1216 = vadd.f32 %v1214, %v1215
    %v1217 = vtanh.pop %v1216
    %v1218 = vmul.f32 %v1213, %v1217
    %s1219 = scalar_lea.vmem %s8, 8
    %1220 = vst.msk [vmem:[%s1219] sm:$0xff] %vm181, %v1218
    %s1221 = scalar_lea.vmem [#allocation2], 16
    %v1222 = vld [vmem:[%s1221] sm:$0xff]
    %v1224 = vsel %vm181, %v1218, 0
    %1226 = vmatprep.subr.mxu0 0.0
    %1227 = vmatpush1.msra.mxu0 0.0
    %1228 = vmatprep.subr.mxu0 0.0
    %1229 = vmatpush1.msra.mxu0 0.0
    %1230 = vmatprep.subr.mxu0 0.0
    %1231 = vmatpush1.msra.mxu0 0.0
    %1232 = vmatprep.subr.mxu0 0.0
    %1233 = vmatpush1.msra.mxu0 0.0
    %1234 = vmatprep.subr.mxu0 0.0
    %1235 = vmatpush1.msra.mxu0 0.0
    %1236 = vmatprep.subr.mxu0 0.0
    %1237 = vmatpush1.msra.mxu0 0.0
    %1238 = vmatprep.subr.mxu0 0.0
    %1239 = vmatpush1.msra.mxu0 0.0
    %1240 = vmatprep.subr.mxu0 0.0
    %1241 = vmatpush1.msra.mxu0 0.0
    %1242 = vmatprep.subr.mxu0 0.0
    %1243 = vmatpush1.msra.mxu0 0.0
    %1244 = vmatprep.subr.mxu0 0.0
    %1245 = vmatpush1.msra.mxu0 0.0
    %1246 = vmatprep.subr.mxu0 0.0
    %1247 = vmatpush1.msra.mxu0 0.0
    %1248 = vmatprep.subr.mxu0 0.0
    %1249 = vmatpush1.msra.mxu0 0.0
    %1250 = vmatprep.subr.mxu0 0.0
    %1251 = vmatpush1.msra.mxu0 %v568
    %1252 = vmatprep.subr.mxu0 0.0
    %1253 = vmatpush1.msra.mxu0 %v567
    %1254 = vmatprep.subr.mxu0 0.0
    %1255 = vmatpush1.msra.mxu0 %v566
    %1256 = vmatprep.subr.mxu0 0.0
    %1257 = vmatpush1.msra.mxu0 %v565
    %1258 = vmatprep.subr.mxu0 0.0
    %1259 = vmatpush2.msra.mxu0 0.0
    %1260 = vmatprep.subr.mxu0 0.0
    %1261 = vmatpush2.msra.mxu0 0.0
    %1262 = vmatprep.subr.mxu0 0.0
    %1263 = vmatpush2.msra.mxu0 0.0
    %1264 = vmatprep.subr.mxu0 0.0
    %1265 = vmatpush2.msra.mxu0 0.0
    %1266 = vmatprep.subr.mxu0 0.0
    %1267 = vmatpush2.msra.mxu0 0.0
    %1268 = vmatprep.subr.mxu0 0.0
    %1269 = vmatpush2.msra.mxu0 0.0
    %1270 = vmatprep.subr.mxu0 0.0
    %1271 = vmatpush2.msra.mxu0 0.0
    %1272 = vmatprep.subr.mxu0 0.0
    %1273 = vmatpush2.msra.mxu0 0.0
    %1274 = vmatprep.subr.mxu0 0.0
    %1275 = vmatpush2.msra.mxu0 0.0
    %1276 = vmatprep.subr.mxu0 0.0
    %1277 = vmatpush2.msra.mxu0 0.0
    %1278 = vmatprep.subr.mxu0 0.0
    %1279 = vmatpush2.msra.mxu0 0.0
    %1280 = vmatprep.subr.mxu0 0.0
    %1281 = vmatpush2.msra.mxu0 0.0
    %1282 = vmatprep.subr.mxu0 0.0
    %1283 = vmatpush2.msra.mxu0 0.0
    %1284 = vmatprep.subr.mxu0 0.0
    %1285 = vmatpush2.msra.mxu0 0.0
    %1286 = vmatprep.subr.mxu0 0.0
    %1287 = vmatpush2.msra.mxu0 0.0
    %1288 = vmatprep.subr.mxu0 0.0
    %1289 = vmatpush2.msra.mxu0 0.0
    %1290 = vmatprep.mubr.f32.mxu0 0.0
    %1291 = vmatmul.mubr.f32.gmra.mxu0 %v1224
    %v1292 = vpop.f32.mrf.mxu0
    %v1293 = vadd.f32 0.0, %v1292
    %v1294 = vpop.f32.mrf.mxu0
    %1295 = vdwg.mxu0
    %v1296 = vadd.f32 %v1222, %v1293
    %s1297 = scalar_lea.vmem [#allocation2], 80
    %v1298 = vld [vmem:[%s1297] sm:$0xff]
    %1299 = vmatprep.subr.mxu0 0.0
    %1300 = vmatpush1.msra.mxu0 0.0
    %1301 = vmatprep.subr.mxu0 0.0
    %1302 = vmatpush1.msra.mxu0 0.0
    %1303 = vmatprep.subr.mxu0 0.0
    %1304 = vmatpush1.msra.mxu0 0.0
    %1305 = vmatprep.subr.mxu0 0.0
    %1306 = vmatpush1.msra.mxu0 0.0
    %1307 = vmatprep.subr.mxu0 0.0
    %1308 = vmatpush1.msra.mxu0 0.0
    %1309 = vmatprep.subr.mxu0 0.0
    %1310 = vmatpush1.msra.mxu0 0.0
    %1311 = vmatprep.subr.mxu0 0.0
    %1312 = vmatpush1.msra.mxu0 0.0
    %1313 = vmatprep.subr.mxu0 0.0
    %1314 = vmatpush1.msra.mxu0 0.0
    %1315 = vmatprep.subr.mxu0 0.0
    %1316 = vmatpush1.msra.mxu0 0.0
    %1317 = vmatprep.subr.mxu0 0.0
    %1318 = vmatpush1.msra.mxu0 0.0
    %1319 = vmatprep.subr.mxu0 0.0
    %1320 = vmatpush1.msra.mxu0 0.0
    %1321 = vmatprep.subr.mxu0 0.0
    %1322 = vmatpush1.msra.mxu0 0.0
    %1323 = vmatprep.subr.mxu0 0.0
    %1324 = vmatpush1.msra.mxu0 %v573
    %1325 = vmatprep.subr.mxu0 0.0
    %1326 = vmatpush1.msra.mxu0 %v572
    %1327 = vmatprep.subr.mxu0 0.0
    %1328 = vmatpush1.msra.mxu0 %v571
    %1329 = vmatprep.subr.mxu0 0.0
    %1330 = vmatpush1.msra.mxu0 %v570
    %1331 = vmatprep.subr.mxu0 0.0
    %1332 = vmatpush2.msra.mxu0 0.0
    %1333 = vmatprep.subr.mxu0 0.0
    %1334 = vmatpush2.msra.mxu0 0.0
    %1335 = vmatprep.subr.mxu0 0.0
    %1336 = vmatpush2.msra.mxu0 0.0
    %1337 = vmatprep.subr.mxu0 0.0
    %1338 = vmatpush2.msra.mxu0 0.0
    %1339 = vmatprep.subr.mxu0 0.0
    %1340 = vmatpush2.msra.mxu0 0.0
    %1341 = vmatprep.subr.mxu0 0.0
    %1342 = vmatpush2.msra.mxu0 0.0
    %1343 = vmatprep.subr.mxu0 0.0
    %1344 = vmatpush2.msra.mxu0 0.0
    %1345 = vmatprep.subr.mxu0 0.0
    %1346 = vmatpush2.msra.mxu0 0.0
    %1347 = vmatprep.subr.mxu0 0.0
    %1348 = vmatpush2.msra.mxu0 0.0
    %1349 = vmatprep.subr.mxu0 0.0
    %1350 = vmatpush2.msra.mxu0 0.0
    %1351 = vmatprep.subr.mxu0 0.0
    %1352 = vmatpush2.msra.mxu0 0.0
    %1353 = vmatprep.subr.mxu0 0.0
    %1354 = vmatpush2.msra.mxu0 0.0
    %1355 = vmatprep.subr.mxu0 0.0
    %1356 = vmatpush2.msra.mxu0 0.0
    %1357 = vmatprep.subr.mxu0 0.0
    %1358 = vmatpush2.msra.mxu0 0.0
    %1359 = vmatprep.subr.mxu0 0.0
    %1360 = vmatpush2.msra.mxu0 0.0
    %1361 = vmatprep.subr.mxu0 0.0
    %1362 = vmatpush2.msra.mxu0 0.0
    %1363 = vmatprep.mubr.f32.mxu0 0.0
    %1364 = vmatmul.mubr.f32.gmra.mxu0 %v1224
    %v1365 = vpop.f32.mrf.mxu0
    %v1366 = vadd.f32 0.0, %v1365
    %v1367 = vpop.f32.mrf.mxu0
    %1368 = vdwg.mxu0
    %v1369 = vadd.f32 %v1298, %v1366
    %s1370 = scalar_lea.vmem [#allocation2], 144
    %v1371 = vld [vmem:[%s1370] sm:$0xff]
    %1372 = vmatprep.subr.mxu0 0.0
    %1373 = vmatpush1.msra.mxu0 0.0
    %1374 = vmatprep.subr.mxu0 0.0
    %1375 = vmatpush1.msra.mxu0 0.0
    %1376 = vmatprep.subr.mxu0 0.0
    %1377 = vmatpush1.msra.mxu0 0.0
    %1378 = vmatprep.subr.mxu0 0.0
    %1379 = vmatpush1.msra.mxu0 0.0
    %1380 = vmatprep.subr.mxu0 0.0
    %1381 = vmatpush1.msra.mxu0 0.0
    %1382 = vmatprep.subr.mxu0 0.0
    %1383 = vmatpush1.msra.mxu0 0.0
    %1384 = vmatprep.subr.mxu0 0.0
    %1385 = vmatpush1.msra.mxu0 0.0
    %1386 = vmatprep.subr.mxu0 0.0
    %1387 = vmatpush1.msra.mxu0 0.0
    %1388 = vmatprep.subr.mxu0 0.0
    %1389 = vmatpush1.msra.mxu0 0.0
    %1390 = vmatprep.subr.mxu0 0.0
    %1391 = vmatpush1.msra.mxu0 0.0
    %1392 = vmatprep.subr.mxu0 0.0
    %1393 = vmatpush1.msra.mxu0 0.0
    %1394 = vmatprep.subr.mxu0 0.0
    %1395 = vmatpush1.msra.mxu0 0.0
    %1396 = vmatprep.subr.mxu0 0.0
    %1397 = vmatpush1.msra.mxu0 %v578
    %1398 = vmatprep.subr.mxu0 0.0
    %1399 = vmatpush1.msra.mxu0 %v577
    %1400 = vmatprep.subr.mxu0 0.0
    %1401 = vmatpush1.msra.mxu0 %v576
    %1402 = vmatprep.subr.mxu0 0.0
    %1403 = vmatpush1.msra.mxu0 %v575
    %1404 = vmatprep.subr.mxu0 0.0
    %1405 = vmatpush2.msra.mxu0 0.0
    %1406 = vmatprep.subr.mxu0 0.0
    %1407 = vmatpush2.msra.mxu0 0.0
    %1408 = vmatprep.subr.mxu0 0.0
    %1409 = vmatpush2.msra.mxu0 0.0
    %1410 = vmatprep.subr.mxu0 0.0
    %1411 = vmatpush2.msra.mxu0 0.0
    %1412 = vmatprep.subr.mxu0 0.0
    %1413 = vmatpush2.msra.mxu0 0.0
    %1414 = vmatprep.subr.mxu0 0.0
    %1415 = vmatpush2.msra.mxu0 0.0
    %1416 = vmatprep.subr.mxu0 0.0
    %1417 = vmatpush2.msra.mxu0 0.0
    %1418 = vmatprep.subr.mxu0 0.0
    %1419 = vmatpush2.msra.mxu0 0.0
    %1420 = vmatprep.subr.mxu0 0.0
    %1421 = vmatpush2.msra.mxu0 0.0
    %1422 = vmatprep.subr.mxu0 0.0
    %1423 = vmatpush2.msra.mxu0 0.0
    %1424 = vmatprep.subr.mxu0 0.0
    %1425 = vmatpush2.msra.mxu0 0.0
    %1426 = vmatprep.subr.mxu0 0.0
    %1427 = vmatpush2.msra.mxu0 0.0
    %1428 = vmatprep.subr.mxu0 0.0
    %1429 = vmatpush2.msra.mxu0 0.0
    %1430 = vmatprep.subr.mxu0 0.0
    %1431 = vmatpush2.msra.mxu0 0.0
    %1432 = vmatprep.subr.mxu0 0.0
    %1433 = vmatpush2.msra.mxu0 0.0
    %1434 = vmatprep.subr.mxu0 0.0
    %1435 = vmatpush2.msra.mxu0 0.0
    %1436 = vmatprep.mubr.f32.mxu0 0.0
    %1437 = vmatmul.mubr.f32.gmra.mxu0 %v1224
    %v1438 = vpop.f32.mrf.mxu0
    %v1439 = vadd.f32 0.0, %v1438
    %v1440 = vpop.f32.mrf.mxu0
    %1441 = vdwg.mxu0
    %v1442 = vadd.f32 %v1371, %v1439
    %s1443 = scalar_lea.vmem [#allocation2], 208
    %v1444 = vld [vmem:[%s1443] sm:$0xff]
    %1445 = vmatprep.subr.mxu0 0.0
    %1446 = vmatpush1.msra.mxu0 0.0
    %1447 = vmatprep.subr.mxu0 0.0
    %1448 = vmatpush1.msra.mxu0 0.0
    %1449 = vmatprep.subr.mxu0 0.0
    %1450 = vmatpush1.msra.mxu0 0.0
    %1451 = vmatprep.subr.mxu0 0.0
    %1452 = vmatpush1.msra.mxu0 0.0
    %1453 = vmatprep.subr.mxu0 0.0
    %1454 = vmatpush1.msra.mxu0 0.0
    %1455 = vmatprep.subr.mxu0 0.0
    %1456 = vmatpush1.msra.mxu0 0.0
    %1457 = vmatprep.subr.mxu0 0.0
    %1458 = vmatpush1.msra.mxu0 0.0
    %1459 = vmatprep.subr.mxu0 0.0
    %1460 = vmatpush1.msra.mxu0 0.0
    %1461 = vmatprep.subr.mxu0 0.0
    %1462 = vmatpush1.msra.mxu0 0.0
    %1463 = vmatprep.subr.mxu0 0.0
    %1464 = vmatpush1.msra.mxu0 0.0
    %1465 = vmatprep.subr.mxu0 0.0
    %1466 = vmatpush1.msra.mxu0 0.0
    %1467 = vmatprep.subr.mxu0 0.0
    %1468 = vmatpush1.msra.mxu0 0.0
    %1469 = vmatprep.subr.mxu0 0.0
    %1470 = vmatpush1.msra.mxu0 %v583
    %1471 = vmatprep.subr.mxu0 0.0
    %1472 = vmatpush1.msra.mxu0 %v582
    %1473 = vmatprep.subr.mxu0 0.0
    %1474 = vmatpush1.msra.mxu0 %v581
    %1475 = vmatprep.subr.mxu0 0.0
    %1476 = vmatpush1.msra.mxu0 %v580
    %1477 = vmatprep.subr.mxu0 0.0
    %1478 = vmatpush2.msra.mxu0 0.0
    %1479 = vmatprep.subr.mxu0 0.0
    %1480 = vmatpush2.msra.mxu0 0.0
    %1481 = vmatprep.subr.mxu0 0.0
    %1482 = vmatpush2.msra.mxu0 0.0
    %1483 = vmatprep.subr.mxu0 0.0
    %1484 = vmatpush2.msra.mxu0 0.0
    %1485 = vmatprep.subr.mxu0 0.0
    %1486 = vmatpush2.msra.mxu0 0.0
    %1487 = vmatprep.subr.mxu0 0.0
    %1488 = vmatpush2.msra.mxu0 0.0
    %1489 = vmatprep.subr.mxu0 0.0
    %1490 = vmatpush2.msra.mxu0 0.0
    %1491 = vmatprep.subr.mxu0 0.0
    %1492 = vmatpush2.msra.mxu0 0.0
    %1493 = vmatprep.subr.mxu0 0.0
    %1494 = vmatpush2.msra.mxu0 0.0
    %1495 = vmatprep.subr.mxu0 0.0
    %1496 = vmatpush2.msra.mxu0 0.0
    %1497 = vmatprep.subr.mxu0 0.0
    %1498 = vmatpush2.msra.mxu0 0.0
    %1499 = vmatprep.subr.mxu0 0.0
    %1500 = vmatpush2.msra.mxu0 0.0
    %1501 = vmatprep.subr.mxu0 0.0
    %1502 = vmatpush2.msra.mxu0 0.0
    %1503 = vmatprep.subr.mxu0 0.0
    %1504 = vmatpush2.msra.mxu0 0.0
    %1505 = vmatprep.subr.mxu0 0.0
    %1506 = vmatpush2.msra.mxu0 0.0
    %1507 = vmatprep.subr.mxu0 0.0
    %1508 = vmatpush2.msra.mxu0 0.0
    %1509 = vmatprep.mubr.f32.mxu0 0.0
    %1510 = vmatmul.mubr.f32.gmra.mxu0 %v1224
    %v1511 = vpop.f32.mrf.mxu0
    %v1512 = vadd.f32 0.0, %v1511
    %v1513 = vpop.f32.mrf.mxu0
    %1514 = vdwg.mxu0
    %v1515 = vadd.f32 %v1444, %v1512
    %v1516 = vxor.u32 %v1296, 2147483648
    %v1517 = vmul.f32 %v1516, 1.442695
    %v1518 = vpow.pop %v1517
    %v1519 = vadd.f32 %v1518, 1.0
    %v1520 = vrcp.pop %v1519
    %v1521 = vmul.f32 1.0, %v1520
    %v1522 = vxor.u32 %v1369, 2147483648
    %v1523 = vmul.f32 %v1522, 1.442695
    %v1524 = vpow.pop %v1523
    %v1525 = vadd.f32 %v1524, 1.0
    %v1526 = vrcp.pop %v1525
    %v1527 = vmul.f32 1.0, %v1526
    %v1528 = vtanh.pop %v1442
    %v1529 = vxor.u32 %v1515, 2147483648
    %v1530 = vmul.f32 %v1529, 1.442695
    %v1531 = vpow.pop %v1530
    %v1532 = vadd.f32 %v1531, 1.0
    %v1533 = vrcp.pop %v1532
    %v1534 = vmul.f32 1.0, %v1533
    %v1535 = vmul.f32 %v1527, %v1216
    %v1536 = vmul.f32 %v1521, %v1528
    %v1537 = vadd.f32 %v1535, %v1536
    %v1538 = vtanh.pop %v1537
    %v1539 = vmul.f32 %v1534, %v1538
    %s1540 = scalar_lea.vmem %s8, 16
    %1541 = vst.msk [vmem:[%s1540] sm:$0xff] %vm181, %v1539
    %s1542 = scalar_lea.vmem [#allocation2], 24
    %v1543 = vld [vmem:[%s1542] sm:$0xff]
    %v1545 = vsel %vm181, %v1539, 0
    %1547 = vmatprep.subr.mxu0 0.0
    %1548 = vmatpush1.msra.mxu0 0.0
    %1549 = vmatprep.subr.mxu0 0.0
    %1550 = vmatpush1.msra.mxu0 0.0
    %1551 = vmatprep.subr.mxu0 0.0
    %1552 = vmatpush1.msra.mxu0 0.0
    %1553 = vmatprep.subr.mxu0 0.0
    %1554 = vmatpush1.msra.mxu0 0.0
    %1555 = vmatprep.subr.mxu0 0.0
    %1556 = vmatpush1.msra.mxu0 0.0
    %1557 = vmatprep.subr.mxu0 0.0
    %1558 = vmatpush1.msra.mxu0 0.0
    %1559 = vmatprep.subr.mxu0 0.0
    %1560 = vmatpush1.msra.mxu0 0.0
    %1561 = vmatprep.subr.mxu0 0.0
    %1562 = vmatpush1.msra.mxu0 0.0
    %1563 = vmatprep.subr.mxu0 0.0
    %1564 = vmatpush1.msra.mxu0 0.0
    %1565 = vmatprep.subr.mxu0 0.0
    %1566 = vmatpush1.msra.mxu0 0.0
    %1567 = vmatprep.subr.mxu0 0.0
    %1568 = vmatpush1.msra.mxu0 0.0
    %1569 = vmatprep.subr.mxu0 0.0
    %1570 = vmatpush1.msra.mxu0 0.0
    %1571 = vmatprep.subr.mxu0 0.0
    %1572 = vmatpush1.msra.mxu0 %v568
    %1573 = vmatprep.subr.mxu0 0.0
    %1574 = vmatpush1.msra.mxu0 %v567
    %1575 = vmatprep.subr.mxu0 0.0
    %1576 = vmatpush1.msra.mxu0 %v566
    %1577 = vmatprep.subr.mxu0 0.0
    %1578 = vmatpush1.msra.mxu0 %v565
    %1579 = vmatprep.subr.mxu0 0.0
    %1580 = vmatpush2.msra.mxu0 0.0
    %1581 = vmatprep.subr.mxu0 0.0
    %1582 = vmatpush2.msra.mxu0 0.0
    %1583 = vmatprep.subr.mxu0 0.0
    %1584 = vmatpush2.msra.mxu0 0.0
    %1585 = vmatprep.subr.mxu0 0.0
    %1586 = vmatpush2.msra.mxu0 0.0
    %1587 = vmatprep.subr.mxu0 0.0
    %1588 = vmatpush2.msra.mxu0 0.0
    %1589 = vmatprep.subr.mxu0 0.0
    %1590 = vmatpush2.msra.mxu0 0.0
    %1591 = vmatprep.subr.mxu0 0.0
    %1592 = vmatpush2.msra.mxu0 0.0
    %1593 = vmatprep.subr.mxu0 0.0
    %1594 = vmatpush2.msra.mxu0 0.0
    %1595 = vmatprep.subr.mxu0 0.0
    %1596 = vmatpush2.msra.mxu0 0.0
    %1597 = vmatprep.subr.mxu0 0.0
    %1598 = vmatpush2.msra.mxu0 0.0
    %1599 = vmatprep.subr.mxu0 0.0
    %1600 = vmatpush2.msra.mxu0 0.0
    %1601 = vmatprep.subr.mxu0 0.0
    %1602 = vmatpush2.msra.mxu0 0.0
    %1603 = vmatprep.subr.mxu0 0.0
    %1604 = vmatpush2.msra.mxu0 0.0
    %1605 = vmatprep.subr.mxu0 0.0
    %1606 = vmatpush2.msra.mxu0 0.0
    %1607 = vmatprep.subr.mxu0 0.0
    %1608 = vmatpush2.msra.mxu0 0.0
    %1609 = vmatprep.subr.mxu0 0.0
    %1610 = vmatpush2.msra.mxu0 0.0
    %1611 = vmatprep.mubr.f32.mxu0 0.0
    %1612 = vmatmul.mubr.f32.gmra.mxu0 %v1545
    %v1613 = vpop.f32.mrf.mxu0
    %v1614 = vadd.f32 0.0, %v1613
    %v1615 = vpop.f32.mrf.mxu0
    %1616 = vdwg.mxu0
    %v1617 = vadd.f32 %v1543, %v1614
    %s1618 = scalar_lea.vmem [#allocation2], 88
    %v1619 = vld [vmem:[%s1618] sm:$0xff]
    %1620 = vmatprep.subr.mxu0 0.0
    %1621 = vmatpush1.msra.mxu0 0.0
    %1622 = vmatprep.subr.mxu0 0.0
    %1623 = vmatpush1.msra.mxu0 0.0
    %1624 = vmatprep.subr.mxu0 0.0
    %1625 = vmatpush1.msra.mxu0 0.0
    %1626 = vmatprep.subr.mxu0 0.0
    %1627 = vmatpush1.msra.mxu0 0.0
    %1628 = vmatprep.subr.mxu0 0.0
    %1629 = vmatpush1.msra.mxu0 0.0
    %1630 = vmatprep.subr.mxu0 0.0
    %1631 = vmatpush1.msra.mxu0 0.0
    %1632 = vmatprep.subr.mxu0 0.0
    %1633 = vmatpush1.msra.mxu0 0.0
    %1634 = vmatprep.subr.mxu0 0.0
    %1635 = vmatpush1.msra.mxu0 0.0
    %1636 = vmatprep.subr.mxu0 0.0
    %1637 = vmatpush1.msra.mxu0 0.0
    %1638 = vmatprep.subr.mxu0 0.0
    %1639 = vmatpush1.msra.mxu0 0.0
    %1640 = vmatprep.subr.mxu0 0.0
    %1641 = vmatpush1.msra.mxu0 0.0
    %1642 = vmatprep.subr.mxu0 0.0
    %1643 = vmatpush1.msra.mxu0 0.0
    %1644 = vmatprep.subr.mxu0 0.0
    %1645 = vmatpush1.msra.mxu0 %v573
    %1646 = vmatprep.subr.mxu0 0.0
    %1647 = vmatpush1.msra.mxu0 %v572
    %1648 = vmatprep.subr.mxu0 0.0
    %1649 = vmatpush1.msra.mxu0 %v571
    %1650 = vmatprep.subr.mxu0 0.0
    %1651 = vmatpush1.msra.mxu0 %v570
    %1652 = vmatprep.subr.mxu0 0.0
    %1653 = vmatpush2.msra.mxu0 0.0
    %1654 = vmatprep.subr.mxu0 0.0
    %1655 = vmatpush2.msra.mxu0 0.0
    %1656 = vmatprep.subr.mxu0 0.0
    %1657 = vmatpush2.msra.mxu0 0.0
    %1658 = vmatprep.subr.mxu0 0.0
    %1659 = vmatpush2.msra.mxu0 0.0
    %1660 = vmatprep.subr.mxu0 0.0
    %1661 = vmatpush2.msra.mxu0 0.0
    %1662 = vmatprep.subr.mxu0 0.0
    %1663 = vmatpush2.msra.mxu0 0.0
    %1664 = vmatprep.subr.mxu0 0.0
    %1665 = vmatpush2.msra.mxu0 0.0
    %1666 = vmatprep.subr.mxu0 0.0
    %1667 = vmatpush2.msra.mxu0 0.0
    %1668 = vmatprep.subr.mxu0 0.0
    %1669 = vmatpush2.msra.mxu0 0.0
    %1670 = vmatprep.subr.mxu0 0.0
    %1671 = vmatpush2.msra.mxu0 0.0
    %1672 = vmatprep.subr.mxu0 0.0
    %1673 = vmatpush2.msra.mxu0 0.0
    %1674 = vmatprep.subr.mxu0 0.0
    %1675 = vmatpush2.msra.mxu0 0.0
    %1676 = vmatprep.subr.mxu0 0.0
    %1677 = vmatpush2.msra.mxu0 0.0
    %1678 = vmatprep.subr.mxu0 0.0
    %1679 = vmatpush2.msra.mxu0 0.0
    %1680 = vmatprep.subr.mxu0 0.0
    %1681 = vmatpush2.msra.mxu0 0.0
    %1682 = vmatprep.subr.mxu0 0.0
    %1683 = vmatpush2.msra.mxu0 0.0
    %1684 = vmatprep.mubr.f32.mxu0 0.0
    %1685 = vmatmul.mubr.f32.gmra.mxu0 %v1545
    %v1686 = vpop.f32.mrf.mxu0
    %v1687 = vadd.f32 0.0, %v1686
    %v1688 = vpop.f32.mrf.mxu0
    %1689 = vdwg.mxu0
    %v1690 = vadd.f32 %v1619, %v1687
    %s1691 = scalar_lea.vmem [#allocation2], 152
    %v1692 = vld [vmem:[%s1691] sm:$0xff]
    %1693 = vmatprep.subr.mxu0 0.0
    %1694 = vmatpush1.msra.mxu0 0.0
    %1695 = vmatprep.subr.mxu0 0.0
    %1696 = vmatpush1.msra.mxu0 0.0
    %1697 = vmatprep.subr.mxu0 0.0
    %1698 = vmatpush1.msra.mxu0 0.0
    %1699 = vmatprep.subr.mxu0 0.0
    %1700 = vmatpush1.msra.mxu0 0.0
    %1701 = vmatprep.subr.mxu0 0.0
    %1702 = vmatpush1.msra.mxu0 0.0
    %1703 = vmatprep.subr.mxu0 0.0
    %1704 = vmatpush1.msra.mxu0 0.0
    %1705 = vmatprep.subr.mxu0 0.0
    %1706 = vmatpush1.msra.mxu0 0.0
    %1707 = vmatprep.subr.mxu0 0.0
    %1708 = vmatpush1.msra.mxu0 0.0
    %1709 = vmatprep.subr.mxu0 0.0
    %1710 = vmatpush1.msra.mxu0 0.0
    %1711 = vmatprep.subr.mxu0 0.0
    %1712 = vmatpush1.msra.mxu0 0.0
    %1713 = vmatprep.subr.mxu0 0.0
    %1714 = vmatpush1.msra.mxu0 0.0
    %1715 = vmatprep.subr.mxu0 0.0
    %1716 = vmatpush1.msra.mxu0 0.0
    %1717 = vmatprep.subr.mxu0 0.0
    %1718 = vmatpush1.msra.mxu0 %v578
    %1719 = vmatprep.subr.mxu0 0.0
    %1720 = vmatpush1.msra.mxu0 %v577
    %1721 = vmatprep.subr.mxu0 0.0
    %1722 = vmatpush1.msra.mxu0 %v576
    %1723 = vmatprep.subr.mxu0 0.0
    %1724 = vmatpush1.msra.mxu0 %v575
    %1725 = vmatprep.subr.mxu0 0.0
    %1726 = vmatpush2.msra.mxu0 0.0
    %1727 = vmatprep.subr.mxu0 0.0
    %1728 = vmatpush2.msra.mxu0 0.0
    %1729 = vmatprep.subr.mxu0 0.0
    %1730 = vmatpush2.msra.mxu0 0.0
    %1731 = vmatprep.subr.mxu0 0.0
    %1732 = vmatpush2.msra.mxu0 0.0
    %1733 = vmatprep.subr.mxu0 0.0
    %1734 = vmatpush2.msra.mxu0 0.0
    %1735 = vmatprep.subr.mxu0 0.0
    %1736 = vmatpush2.msra.mxu0 0.0
    %1737 = vmatprep.subr.mxu0 0.0
    %1738 = vmatpush2.msra.mxu0 0.0
    %1739 = vmatprep.subr.mxu0 0.0
    %1740 = vmatpush2.msra.mxu0 0.0
    %1741 = vmatprep.subr.mxu0 0.0
    %1742 = vmatpush2.msra.mxu0 0.0
    %1743 = vmatprep.subr.mxu0 0.0
    %1744 = vmatpush2.msra.mxu0 0.0
    %1745 = vmatprep.subr.mxu0 0.0
    %1746 = vmatpush2.msra.mxu0 0.0
    %1747 = vmatprep.subr.mxu0 0.0
    %1748 = vmatpush2.msra.mxu0 0.0
    %1749 = vmatprep.subr.mxu0 0.0
    %1750 = vmatpush2.msra.mxu0 0.0
    %1751 = vmatprep.subr.mxu0 0.0
    %1752 = vmatpush2.msra.mxu0 0.0
    %1753 = vmatprep.subr.mxu0 0.0
    %1754 = vmatpush2.msra.mxu0 0.0
    %1755 = vmatprep.subr.mxu0 0.0
    %1756 = vmatpush2.msra.mxu0 0.0
    %1757 = vmatprep.mubr.f32.mxu0 0.0
    %1758 = vmatmul.mubr.f32.gmra.mxu0 %v1545
    %v1759 = vpop.f32.mrf.mxu0
    %v1760 = vadd.f32 0.0, %v1759
    %v1761 = vpop.f32.mrf.mxu0
    %1762 = vdwg.mxu0
    %v1763 = vadd.f32 %v1692, %v1760
    %s1764 = scalar_lea.vmem [#allocation2], 216
    %v1765 = vld [vmem:[%s1764] sm:$0xff]
    %1766 = vmatprep.subr.mxu0 0.0
    %1767 = vmatpush1.msra.mxu0 0.0
    %1768 = vmatprep.subr.mxu0 0.0
    %1769 = vmatpush1.msra.mxu0 0.0
    %1770 = vmatprep.subr.mxu0 0.0
    %1771 = vmatpush1.msra.mxu0 0.0
    %1772 = vmatprep.subr.mxu0 0.0
    %1773 = vmatpush1.msra.mxu0 0.0
    %1774 = vmatprep.subr.mxu0 0.0
    %1775 = vmatpush1.msra.mxu0 0.0
    %1776 = vmatprep.subr.mxu0 0.0
    %1777 = vmatpush1.msra.mxu0 0.0
    %1778 = vmatprep.subr.mxu0 0.0
    %1779 = vmatpush1.msra.mxu0 0.0
    %1780 = vmatprep.subr.mxu0 0.0
    %1781 = vmatpush1.msra.mxu0 0.0
    %1782 = vmatprep.subr.mxu0 0.0
    %1783 = vmatpush1.msra.mxu0 0.0
    %1784 = vmatprep.subr.mxu0 0.0
    %1785 = vmatpush1.msra.mxu0 0.0
    %1786 = vmatprep.subr.mxu0 0.0
    %1787 = vmatpush1.msra.mxu0 0.0
    %1788 = vmatprep.subr.mxu0 0.0
    %1789 = vmatpush1.msra.mxu0 0.0
    %1790 = vmatprep.subr.mxu0 0.0
    %1791 = vmatpush1.msra.mxu0 %v583
    %1792 = vmatprep.subr.mxu0 0.0
    %1793 = vmatpush1.msra.mxu0 %v582
    %1794 = vmatprep.subr.mxu0 0.0
    %1795 = vmatpush1.msra.mxu0 %v581
    %1796 = vmatprep.subr.mxu0 0.0
    %1797 = vmatpush1.msra.mxu0 %v580
    %1798 = vmatprep.subr.mxu0 0.0
    %1799 = vmatpush2.msra.mxu0 0.0
    %1800 = vmatprep.subr.mxu0 0.0
    %1801 = vmatpush2.msra.mxu0 0.0
    %1802 = vmatprep.subr.mxu0 0.0
    %1803 = vmatpush2.msra.mxu0 0.0
    %1804 = vmatprep.subr.mxu0 0.0
    %1805 = vmatpush2.msra.mxu0 0.0
    %1806 = vmatprep.subr.mxu0 0.0
    %1807 = vmatpush2.msra.mxu0 0.0
    %1808 = vmatprep.subr.mxu0 0.0
    %1809 = vmatpush2.msra.mxu0 0.0
    %1810 = vmatprep.subr.mxu0 0.0
    %1811 = vmatpush2.msra.mxu0 0.0
    %1812 = vmatprep.subr.mxu0 0.0
    %1813 = vmatpush2.msra.mxu0 0.0
    %1814 = vmatprep.subr.mxu0 0.0
    %1815 = vmatpush2.msra.mxu0 0.0
    %1816 = vmatprep.subr.mxu0 0.0
    %1817 = vmatpush2.msra.mxu0 0.0
    %1818 = vmatprep.subr.mxu0 0.0
    %1819 = vmatpush2.msra.mxu0 0.0
    %1820 = vmatprep.subr.mxu0 0.0
    %1821 = vmatpush2.msra.mxu0 0.0
    %1822 = vmatprep.subr.mxu0 0.0
    %1823 = vmatpush2.msra.mxu0 0.0
    %1824 = vmatprep.subr.mxu0 0.0
    %1825 = vmatpush2.msra.mxu0 0.0
    %1826 = vmatprep.subr.mxu0 0.0
    %1827 = vmatpush2.msra.mxu0 0.0
    %1828 = vmatprep.subr.mxu0 0.0
    %1829 = vmatpush2.msra.mxu0 0.0
    %1830 = vmatprep.mubr.f32.mxu0 0.0
    %1831 = vmatmul.mubr.f32.gmra.mxu0 %v1545
    %v1832 = vpop.f32.mrf.mxu0
    %v1833 = vadd.f32 0.0, %v1832
    %v1834 = vpop.f32.mrf.mxu0
    %1835 = vdwg.mxu0
    %v1836 = vadd.f32 %v1765, %v1833
    %v1837 = vxor.u32 %v1617, 2147483648
    %v1838 = vmul.f32 %v1837, 1.442695
    %v1839 = vpow.pop %v1838
    %v1840 = vadd.f32 %v1839, 1.0
    %v1841 = vrcp.pop %v1840
    %v1842 = vmul.f32 1.0, %v1841
    %v1843 = vxor.u32 %v1690, 2147483648
    %v1844 = vmul.f32 %v1843, 1.442695
    %v1845 = vpow.pop %v1844
    %v1846 = vadd.f32 %v1845, 1.0
    %v1847 = vrcp.pop %v1846
    %v1848 = vmul.f32 1.0, %v1847
    %v1849 = vtanh.pop %v1763
    %v1850 = vxor.u32 %v1836, 2147483648
    %v1851 = vmul.f32 %v1850, 1.442695
    %v1852 = vpow.pop %v1851
    %v1853 = vadd.f32 %v1852, 1.0
    %v1854 = vrcp.pop %v1853
    %v1855 = vmul.f32 1.0, %v1854
    %v1856 = vmul.f32 %v1848, %v1537
    %v1857 = vmul.f32 %v1842, %v1849
    %v1858 = vadd.f32 %v1856, %v1857
    %v1859 = vtanh.pop %v1858
    %v1860 = vmul.f32 %v1855, %v1859
    %s1861 = scalar_lea.vmem %s8, 24
    %1862 = vst.msk [vmem:[%s1861] sm:$0xff] %vm181, %v1860
    %s1863 = scalar_lea.vmem [#allocation2], 32
    %v1864 = vld [vmem:[%s1863] sm:$0xff]
    %v1866 = vsel %vm181, %v1860, 0
    %1868 = vmatprep.subr.mxu0 0.0
    %1869 = vmatpush1.msra.mxu0 0.0
    %1870 = vmatprep.subr.mxu0 0.0
    %1871 = vmatpush1.msra.mxu0 0.0
    %1872 = vmatprep.subr.mxu0 0.0
    %1873 = vmatpush1.msra.mxu0 0.0
    %1874 = vmatprep.subr.mxu0 0.0
    %1875 = vmatpush1.msra.mxu0 0.0
    %1876 = vmatprep.subr.mxu0 0.0
    %1877 = vmatpush1.msra.mxu0 0.0
    %1878 = vmatprep.subr.mxu0 0.0
    %1879 = vmatpush1.msra.mxu0 0.0
    %1880 = vmatprep.subr.mxu0 0.0
    %1881 = vmatpush1.msra.mxu0 0.0
    %1882 = vmatprep.subr.mxu0 0.0
    %1883 = vmatpush1.msra.mxu0 0.0
    %1884 = vmatprep.subr.mxu0 0.0
    %1885 = vmatpush1.msra.mxu0 0.0
    %1886 = vmatprep.subr.mxu0 0.0
    %1887 = vmatpush1.msra.mxu0 0.0
    %1888 = vmatprep.subr.mxu0 0.0
    %1889 = vmatpush1.msra.mxu0 0.0
    %1890 = vmatprep.subr.mxu0 0.0
    %1891 = vmatpush1.msra.mxu0 0.0
    %1892 = vmatprep.subr.mxu0 0.0
    %1893 = vmatpush1.msra.mxu0 %v568
    %1894 = vmatprep.subr.mxu0 0.0
    %1895 = vmatpush1.msra.mxu0 %v567
    %1896 = vmatprep.subr.mxu0 0.0
    %1897 = vmatpush1.msra.mxu0 %v566
    %1898 = vmatprep.subr.mxu0 0.0
    %1899 = vmatpush1.msra.mxu0 %v565
    %1900 = vmatprep.subr.mxu0 0.0
    %1901 = vmatpush2.msra.mxu0 0.0
    %1902 = vmatprep.subr.mxu0 0.0
    %1903 = vmatpush2.msra.mxu0 0.0
    %1904 = vmatprep.subr.mxu0 0.0
    %1905 = vmatpush2.msra.mxu0 0.0
    %1906 = vmatprep.subr.mxu0 0.0
    %1907 = vmatpush2.msra.mxu0 0.0
    %1908 = vmatprep.subr.mxu0 0.0
    %1909 = vmatpush2.msra.mxu0 0.0
    %1910 = vmatprep.subr.mxu0 0.0
    %1911 = vmatpush2.msra.mxu0 0.0
    %1912 = vmatprep.subr.mxu0 0.0
    %1913 = vmatpush2.msra.mxu0 0.0
    %1914 = vmatprep.subr.mxu0 0.0
    %1915 = vmatpush2.msra.mxu0 0.0
    %1916 = vmatprep.subr.mxu0 0.0
    %1917 = vmatpush2.msra.mxu0 0.0
    %1918 = vmatprep.subr.mxu0 0.0
    %1919 = vmatpush2.msra.mxu0 0.0
    %1920 = vmatprep.subr.mxu0 0.0
    %1921 = vmatpush2.msra.mxu0 0.0
    %1922 = vmatprep.subr.mxu0 0.0
    %1923 = vmatpush2.msra.mxu0 0.0
    %1924 = vmatprep.subr.mxu0 0.0
    %1925 = vmatpush2.msra.mxu0 0.0
    %1926 = vmatprep.subr.mxu0 0.0
    %1927 = vmatpush2.msra.mxu0 0.0
    %1928 = vmatprep.subr.mxu0 0.0
    %1929 = vmatpush2.msra.mxu0 0.0
    %1930 = vmatprep.subr.mxu0 0.0
    %1931 = vmatpush2.msra.mxu0 0.0
    %1932 = vmatprep.mubr.f32.mxu0 0.0
    %1933 = vmatmul.mubr.f32.gmra.mxu0 %v1866
    %v1934 = vpop.f32.mrf.mxu0
    %v1935 = vadd.f32 0.0, %v1934
    %v1936 = vpop.f32.mrf.mxu0
    %1937 = vdwg.mxu0
    %v1938 = vadd.f32 %v1864, %v1935
    %s1939 = scalar_lea.vmem [#allocation2], 96
    %v1940 = vld [vmem:[%s1939] sm:$0xff]
    %1941 = vmatprep.subr.mxu0 0.0
    %1942 = vmatpush1.msra.mxu0 0.0
    %1943 = vmatprep.subr.mxu0 0.0
    %1944 = vmatpush1.msra.mxu0 0.0
    %1945 = vmatprep.subr.mxu0 0.0
    %1946 = vmatpush1.msra.mxu0 0.0
    %1947 = vmatprep.subr.mxu0 0.0
    %1948 = vmatpush1.msra.mxu0 0.0
    %1949 = vmatprep.subr.mxu0 0.0
    %1950 = vmatpush1.msra.mxu0 0.0
    %1951 = vmatprep.subr.mxu0 0.0
    %1952 = vmatpush1.msra.mxu0 0.0
    %1953 = vmatprep.subr.mxu0 0.0
    %1954 = vmatpush1.msra.mxu0 0.0
    %1955 = vmatprep.subr.mxu0 0.0
    %1956 = vmatpush1.msra.mxu0 0.0
    %1957 = vmatprep.subr.mxu0 0.0
    %1958 = vmatpush1.msra.mxu0 0.0
    %1959 = vmatprep.subr.mxu0 0.0
    %1960 = vmatpush1.msra.mxu0 0.0
    %1961 = vmatprep.subr.mxu0 0.0
    %1962 = vmatpush1.msra.mxu0 0.0
    %1963 = vmatprep.subr.mxu0 0.0
    %1964 = vmatpush1.msra.mxu0 0.0
    %1965 = vmatprep.subr.mxu0 0.0
    %1966 = vmatpush1.msra.mxu0 %v573
    %1967 = vmatprep.subr.mxu0 0.0
    %1968 = vmatpush1.msra.mxu0 %v572
    %1969 = vmatprep.subr.mxu0 0.0
    %1970 = vmatpush1.msra.mxu0 %v571
    %1971 = vmatprep.subr.mxu0 0.0
    %1972 = vmatpush1.msra.mxu0 %v570
    %1973 = vmatprep.subr.mxu0 0.0
    %1974 = vmatpush2.msra.mxu0 0.0
    %1975 = vmatprep.subr.mxu0 0.0
    %1976 = vmatpush2.msra.mxu0 0.0
    %1977 = vmatprep.subr.mxu0 0.0
    %1978 = vmatpush2.msra.mxu0 0.0
    %1979 = vmatprep.subr.mxu0 0.0
    %1980 = vmatpush2.msra.mxu0 0.0
    %1981 = vmatprep.subr.mxu0 0.0
    %1982 = vmatpush2.msra.mxu0 0.0
    %1983 = vmatprep.subr.mxu0 0.0
    %1984 = vmatpush2.msra.mxu0 0.0
    %1985 = vmatprep.subr.mxu0 0.0
    %1986 = vmatpush2.msra.mxu0 0.0
    %1987 = vmatprep.subr.mxu0 0.0
    %1988 = vmatpush2.msra.mxu0 0.0
    %1989 = vmatprep.subr.mxu0 0.0
    %1990 = vmatpush2.msra.mxu0 0.0
    %1991 = vmatprep.subr.mxu0 0.0
    %1992 = vmatpush2.msra.mxu0 0.0
    %1993 = vmatprep.subr.mxu0 0.0
    %1994 = vmatpush2.msra.mxu0 0.0
    %1995 = vmatprep.subr.mxu0 0.0
    %1996 = vmatpush2.msra.mxu0 0.0
    %1997 = vmatprep.subr.mxu0 0.0
    %1998 = vmatpush2.msra.mxu0 0.0
    %1999 = vmatprep.subr.mxu0 0.0
    %2000 = vmatpush2.msra.mxu0 0.0
    %2001 = vmatprep.subr.mxu0 0.0
    %2002 = vmatpush2.msra.mxu0 0.0
    %2003 = vmatprep.subr.mxu0 0.0
    %2004 = vmatpush2.msra.mxu0 0.0
    %2005 = vmatprep.mubr.f32.mxu0 0.0
    %2006 = vmatmul.mubr.f32.gmra.mxu0 %v1866
    %v2007 = vpop.f32.mrf.mxu0
    %v2008 = vadd.f32 0.0, %v2007
    %v2009 = vpop.f32.mrf.mxu0
    %2010 = vdwg.mxu0
    %v2011 = vadd.f32 %v1940, %v2008
    %s2012 = scalar_lea.vmem [#allocation2], 160
    %v2013 = vld [vmem:[%s2012] sm:$0xff]
    %2014 = vmatprep.subr.mxu0 0.0
    %2015 = vmatpush1.msra.mxu0 0.0
    %2016 = vmatprep.subr.mxu0 0.0
    %2017 = vmatpush1.msra.mxu0 0.0
    %2018 = vmatprep.subr.mxu0 0.0
    %2019 = vmatpush1.msra.mxu0 0.0
    %2020 = vmatprep.subr.mxu0 0.0
    %2021 = vmatpush1.msra.mxu0 0.0
    %2022 = vmatprep.subr.mxu0 0.0
    %2023 = vmatpush1.msra.mxu0 0.0
    %2024 = vmatprep.subr.mxu0 0.0
    %2025 = vmatpush1.msra.mxu0 0.0
    %2026 = vmatprep.subr.mxu0 0.0
    %2027 = vmatpush1.msra.mxu0 0.0
    %2028 = vmatprep.subr.mxu0 0.0
    %2029 = vmatpush1.msra.mxu0 0.0
    %2030 = vmatprep.subr.mxu0 0.0
    %2031 = vmatpush1.msra.mxu0 0.0
    %2032 = vmatprep.subr.mxu0 0.0
    %2033 = vmatpush1.msra.mxu0 0.0
    %2034 = vmatprep.subr.mxu0 0.0
    %2035 = vmatpush1.msra.mxu0 0.0
    %2036 = vmatprep.subr.mxu0 0.0
    %2037 = vmatpush1.msra.mxu0 0.0
    %2038 = vmatprep.subr.mxu0 0.0
    %2039 = vmatpush1.msra.mxu0 %v578
    %2040 = vmatprep.subr.mxu0 0.0
    %2041 = vmatpush1.msra.mxu0 %v577
    %2042 = vmatprep.subr.mxu0 0.0
    %2043 = vmatpush1.msra.mxu0 %v576
    %2044 = vmatprep.subr.mxu0 0.0
    %2045 = vmatpush1.msra.mxu0 %v575
    %2046 = vmatprep.subr.mxu0 0.0
    %2047 = vmatpush2.msra.mxu0 0.0
    %2048 = vmatprep.subr.mxu0 0.0
    %2049 = vmatpush2.msra.mxu0 0.0
    %2050 = vmatprep.subr.mxu0 0.0
    %2051 = vmatpush2.msra.mxu0 0.0
    %2052 = vmatprep.subr.mxu0 0.0
    %2053 = vmatpush2.msra.mxu0 0.0
    %2054 = vmatprep.subr.mxu0 0.0
    %2055 = vmatpush2.msra.mxu0 0.0
    %2056 = vmatprep.subr.mxu0 0.0
    %2057 = vmatpush2.msra.mxu0 0.0
    %2058 = vmatprep.subr.mxu0 0.0
    %2059 = vmatpush2.msra.mxu0 0.0
    %2060 = vmatprep.subr.mxu0 0.0
    %2061 = vmatpush2.msra.mxu0 0.0
    %2062 = vmatprep.subr.mxu0 0.0
    %2063 = vmatpush2.msra.mxu0 0.0
    %2064 = vmatprep.subr.mxu0 0.0
    %2065 = vmatpush2.msra.mxu0 0.0
    %2066 = vmatprep.subr.mxu0 0.0
    %2067 = vmatpush2.msra.mxu0 0.0
    %2068 = vmatprep.subr.mxu0 0.0
    %2069 = vmatpush2.msra.mxu0 0.0
    %2070 = vmatprep.subr.mxu0 0.0
    %2071 = vmatpush2.msra.mxu0 0.0
    %2072 = vmatprep.subr.mxu0 0.0
    %2073 = vmatpush2.msra.mxu0 0.0
    %2074 = vmatprep.subr.mxu0 0.0
    %2075 = vmatpush2.msra.mxu0 0.0
    %2076 = vmatprep.subr.mxu0 0.0
    %2077 = vmatpush2.msra.mxu0 0.0
    %2078 = vmatprep.mubr.f32.mxu0 0.0
    %2079 = vmatmul.mubr.f32.gmra.mxu0 %v1866
    %v2080 = vpop.f32.mrf.mxu0
    %v2081 = vadd.f32 0.0, %v2080
    %v2082 = vpop.f32.mrf.mxu0
    %2083 = vdwg.mxu0
    %v2084 = vadd.f32 %v2013, %v2081
    %s2085 = scalar_lea.vmem [#allocation2], 224
    %v2086 = vld [vmem:[%s2085] sm:$0xff]
    %2087 = vmatprep.subr.mxu0 0.0
    %2088 = vmatpush1.msra.mxu0 0.0
    %2089 = vmatprep.subr.mxu0 0.0
    %2090 = vmatpush1.msra.mxu0 0.0
    %2091 = vmatprep.subr.mxu0 0.0
    %2092 = vmatpush1.msra.mxu0 0.0
    %2093 = vmatprep.subr.mxu0 0.0
    %2094 = vmatpush1.msra.mxu0 0.0
    %2095 = vmatprep.subr.mxu0 0.0
    %2096 = vmatpush1.msra.mxu0 0.0
    %2097 = vmatprep.subr.mxu0 0.0
    %2098 = vmatpush1.msra.mxu0 0.0
    %2099 = vmatprep.subr.mxu0 0.0
    %2100 = vmatpush1.msra.mxu0 0.0
    %2101 = vmatprep.subr.mxu0 0.0
    %2102 = vmatpush1.msra.mxu0 0.0
    %2103 = vmatprep.subr.mxu0 0.0
    %2104 = vmatpush1.msra.mxu0 0.0
    %2105 = vmatprep.subr.mxu0 0.0
    %2106 = vmatpush1.msra.mxu0 0.0
    %2107 = vmatprep.subr.mxu0 0.0
    %2108 = vmatpush1.msra.mxu0 0.0
    %2109 = vmatprep.subr.mxu0 0.0
    %2110 = vmatpush1.msra.mxu0 0.0
    %2111 = vmatprep.subr.mxu0 0.0
    %2112 = vmatpush1.msra.mxu0 %v583
    %2113 = vmatprep.subr.mxu0 0.0
    %2114 = vmatpush1.msra.mxu0 %v582
    %2115 = vmatprep.subr.mxu0 0.0
    %2116 = vmatpush1.msra.mxu0 %v581
    %2117 = vmatprep.subr.mxu0 0.0
    %2118 = vmatpush1.msra.mxu0 %v580
    %2119 = vmatprep.subr.mxu0 0.0
    %2120 = vmatpush2.msra.mxu0 0.0
    %2121 = vmatprep.subr.mxu0 0.0
    %2122 = vmatpush2.msra.mxu0 0.0
    %2123 = vmatprep.subr.mxu0 0.0
    %2124 = vmatpush2.msra.mxu0 0.0
    %2125 = vmatprep.subr.mxu0 0.0
    %2126 = vmatpush2.msra.mxu0 0.0
    %2127 = vmatprep.subr.mxu0 0.0
    %2128 = vmatpush2.msra.mxu0 0.0
    %2129 = vmatprep.subr.mxu0 0.0
    %2130 = vmatpush2.msra.mxu0 0.0
    %2131 = vmatprep.subr.mxu0 0.0
    %2132 = vmatpush2.msra.mxu0 0.0
    %2133 = vmatprep.subr.mxu0 0.0
    %2134 = vmatpush2.msra.mxu0 0.0
    %2135 = vmatprep.subr.mxu0 0.0
    %2136 = vmatpush2.msra.mxu0 0.0
    %2137 = vmatprep.subr.mxu0 0.0
    %2138 = vmatpush2.msra.mxu0 0.0
    %2139 = vmatprep.subr.mxu0 0.0
    %2140 = vmatpush2.msra.mxu0 0.0
    %2141 = vmatprep.subr.mxu0 0.0
    %2142 = vmatpush2.msra.mxu0 0.0
    %2143 = vmatprep.subr.mxu0 0.0
    %2144 = vmatpush2.msra.mxu0 0.0
    %2145 = vmatprep.subr.mxu0 0.0
    %2146 = vmatpush2.msra.mxu0 0.0
    %2147 = vmatprep.subr.mxu0 0.0
    %2148 = vmatpush2.msra.mxu0 0.0
    %2149 = vmatprep.subr.mxu0 0.0
    %2150 = vmatpush2.msra.mxu0 0.0
    %2151 = vmatprep.mubr.f32.mxu0 0.0
    %2152 = vmatmul.mubr.f32.gmra.mxu0 %v1866
    %v2153 = vpop.f32.mrf.mxu0
    %v2154 = vadd.f32 0.0, %v2153
    %v2155 = vpop.f32.mrf.mxu0
    %2156 = vdwg.mxu0
    %v2157 = vadd.f32 %v2086, %v2154
    %v2158 = vxor.u32 %v1938, 2147483648
    %v2159 = vmul.f32 %v2158, 1.442695
    %v2160 = vpow.pop %v2159
    %v2161 = vadd.f32 %v2160, 1.0
    %v2162 = vrcp.pop %v2161
    %v2163 = vmul.f32 1.0, %v2162
    %v2164 = vxor.u32 %v2011, 2147483648
    %v2165 = vmul.f32 %v2164, 1.442695
    %v2166 = vpow.pop %v2165
    %v2167 = vadd.f32 %v2166, 1.0
    %v2168 = vrcp.pop %v2167
    %v2169 = vmul.f32 1.0, %v2168
    %v2170 = vtanh.pop %v2084
    %v2171 = vxor.u32 %v2157, 2147483648
    %v2172 = vmul.f32 %v2171, 1.442695
    %v2173 = vpow.pop %v2172
    %v2174 = vadd.f32 %v2173, 1.0
    %v2175 = vrcp.pop %v2174
    %v2176 = vmul.f32 1.0, %v2175
    %v2177 = vmul.f32 %v2169, %v1858
    %v2178 = vmul.f32 %v2163, %v2170
    %v2179 = vadd.f32 %v2177, %v2178
    %v2180 = vtanh.pop %v2179
    %v2181 = vmul.f32 %v2176, %v2180
    %s2182 = scalar_lea.vmem %s8, 32
    %2183 = vst.msk [vmem:[%s2182] sm:$0xff] %vm181, %v2181
    %s2184 = scalar_lea.vmem [#allocation2], 40
    %v2185 = vld [vmem:[%s2184] sm:$0xff]
    %v2187 = vsel %vm181, %v2181, 0
    %2189 = vmatprep.subr.mxu0 0.0
    %2190 = vmatpush1.msra.mxu0 0.0
    %2191 = vmatprep.subr.mxu0 0.0
    %2192 = vmatpush1.msra.mxu0 0.0
    %2193 = vmatprep.subr.mxu0 0.0
    %2194 = vmatpush1.msra.mxu0 0.0
    %2195 = vmatprep.subr.mxu0 0.0
    %2196 = vmatpush1.msra.mxu0 0.0
    %2197 = vmatprep.subr.mxu0 0.0
    %2198 = vmatpush1.msra.mxu0 0.0
    %2199 = vmatprep.subr.mxu0 0.0
    %2200 = vmatpush1.msra.mxu0 0.0
    %2201 = vmatprep.subr.mxu0 0.0
    %2202 = vmatpush1.msra.mxu0 0.0
    %2203 = vmatprep.subr.mxu0 0.0
    %2204 = vmatpush1.msra.mxu0 0.0
    %2205 = vmatprep.subr.mxu0 0.0
    %2206 = vmatpush1.msra.mxu0 0.0
    %2207 = vmatprep.subr.mxu0 0.0
    %2208 = vmatpush1.msra.mxu0 0.0
    %2209 = vmatprep.subr.mxu0 0.0
    %2210 = vmatpush1.msra.mxu0 0.0
    %2211 = vmatprep.subr.mxu0 0.0
    %2212 = vmatpush1.msra.mxu0 0.0
    %2213 = vmatprep.subr.mxu0 0.0
    %2214 = vmatpush1.msra.mxu0 %v568
    %2215 = vmatprep.subr.mxu0 0.0
    %2216 = vmatpush1.msra.mxu0 %v567
    %2217 = vmatprep.subr.mxu0 0.0
    %2218 = vmatpush1.msra.mxu0 %v566
    %2219 = vmatprep.subr.mxu0 0.0
    %2220 = vmatpush1.msra.mxu0 %v565
    %2221 = vmatprep.subr.mxu0 0.0
    %2222 = vmatpush2.msra.mxu0 0.0
    %2223 = vmatprep.subr.mxu0 0.0
    %2224 = vmatpush2.msra.mxu0 0.0
    %2225 = vmatprep.subr.mxu0 0.0
    %2226 = vmatpush2.msra.mxu0 0.0
    %2227 = vmatprep.subr.mxu0 0.0
    %2228 = vmatpush2.msra.mxu0 0.0
    %2229 = vmatprep.subr.mxu0 0.0
    %2230 = vmatpush2.msra.mxu0 0.0
    %2231 = vmatprep.subr.mxu0 0.0
    %2232 = vmatpush2.msra.mxu0 0.0
    %2233 = vmatprep.subr.mxu0 0.0
    %2234 = vmatpush2.msra.mxu0 0.0
    %2235 = vmatprep.subr.mxu0 0.0
    %2236 = vmatpush2.msra.mxu0 0.0
    %2237 = vmatprep.subr.mxu0 0.0
    %2238 = vmatpush2.msra.mxu0 0.0
    %2239 = vmatprep.subr.mxu0 0.0
    %2240 = vmatpush2.msra.mxu0 0.0
    %2241 = vmatprep.subr.mxu0 0.0
    %2242 = vmatpush2.msra.mxu0 0.0
    %2243 = vmatprep.subr.mxu0 0.0
    %2244 = vmatpush2.msra.mxu0 0.0
    %2245 = vmatprep.subr.mxu0 0.0
    %2246 = vmatpush2.msra.mxu0 0.0
    %2247 = vmatprep.subr.mxu0 0.0
    %2248 = vmatpush2.msra.mxu0 0.0
    %2249 = vmatprep.subr.mxu0 0.0
    %2250 = vmatpush2.msra.mxu0 0.0
    %2251 = vmatprep.subr.mxu0 0.0
    %2252 = vmatpush2.msra.mxu0 0.0
    %2253 = vmatprep.mubr.f32.mxu0 0.0
    %2254 = vmatmul.mubr.f32.gmra.mxu0 %v2187
    %v2255 = vpop.f32.mrf.mxu0
    %v2256 = vadd.f32 0.0, %v2255
    %v2257 = vpop.f32.mrf.mxu0
    %2258 = vdwg.mxu0
    %v2259 = vadd.f32 %v2185, %v2256
    %s2260 = scalar_lea.vmem [#allocation2], 104
    %v2261 = vld [vmem:[%s2260] sm:$0xff]
    %2262 = vmatprep.subr.mxu0 0.0
    %2263 = vmatpush1.msra.mxu0 0.0
    %2264 = vmatprep.subr.mxu0 0.0
    %2265 = vmatpush1.msra.mxu0 0.0
    %2266 = vmatprep.subr.mxu0 0.0
    %2267 = vmatpush1.msra.mxu0 0.0
    %2268 = vmatprep.subr.mxu0 0.0
    %2269 = vmatpush1.msra.mxu0 0.0
    %2270 = vmatprep.subr.mxu0 0.0
    %2271 = vmatpush1.msra.mxu0 0.0
    %2272 = vmatprep.subr.mxu0 0.0
    %2273 = vmatpush1.msra.mxu0 0.0
    %2274 = vmatprep.subr.mxu0 0.0
    %2275 = vmatpush1.msra.mxu0 0.0
    %2276 = vmatprep.subr.mxu0 0.0
    %2277 = vmatpush1.msra.mxu0 0.0
    %2278 = vmatprep.subr.mxu0 0.0
    %2279 = vmatpush1.msra.mxu0 0.0
    %2280 = vmatprep.subr.mxu0 0.0
    %2281 = vmatpush1.msra.mxu0 0.0
    %2282 = vmatprep.subr.mxu0 0.0
    %2283 = vmatpush1.msra.mxu0 0.0
    %2284 = vmatprep.subr.mxu0 0.0
    %2285 = vmatpush1.msra.mxu0 0.0
    %2286 = vmatprep.subr.mxu0 0.0
    %2287 = vmatpush1.msra.mxu0 %v573
    %2288 = vmatprep.subr.mxu0 0.0
    %2289 = vmatpush1.msra.mxu0 %v572
    %2290 = vmatprep.subr.mxu0 0.0
    %2291 = vmatpush1.msra.mxu0 %v571
    %2292 = vmatprep.subr.mxu0 0.0
    %2293 = vmatpush1.msra.mxu0 %v570
    %2294 = vmatprep.subr.mxu0 0.0
    %2295 = vmatpush2.msra.mxu0 0.0
    %2296 = vmatprep.subr.mxu0 0.0
    %2297 = vmatpush2.msra.mxu0 0.0
    %2298 = vmatprep.subr.mxu0 0.0
    %2299 = vmatpush2.msra.mxu0 0.0
    %2300 = vmatprep.subr.mxu0 0.0
    %2301 = vmatpush2.msra.mxu0 0.0
    %2302 = vmatprep.subr.mxu0 0.0
    %2303 = vmatpush2.msra.mxu0 0.0
    %2304 = vmatprep.subr.mxu0 0.0
    %2305 = vmatpush2.msra.mxu0 0.0
    %2306 = vmatprep.subr.mxu0 0.0
    %2307 = vmatpush2.msra.mxu0 0.0
    %2308 = vmatprep.subr.mxu0 0.0
    %2309 = vmatpush2.msra.mxu0 0.0
    %2310 = vmatprep.subr.mxu0 0.0
    %2311 = vmatpush2.msra.mxu0 0.0
    %2312 = vmatprep.subr.mxu0 0.0
    %2313 = vmatpush2.msra.mxu0 0.0
    %2314 = vmatprep.subr.mxu0 0.0
    %2315 = vmatpush2.msra.mxu0 0.0
    %2316 = vmatprep.subr.mxu0 0.0
    %2317 = vmatpush2.msra.mxu0 0.0
    %2318 = vmatprep.subr.mxu0 0.0
    %2319 = vmatpush2.msra.mxu0 0.0
    %2320 = vmatprep.subr.mxu0 0.0
    %2321 = vmatpush2.msra.mxu0 0.0
    %2322 = vmatprep.subr.mxu0 0.0
    %2323 = vmatpush2.msra.mxu0 0.0
    %2324 = vmatprep.subr.mxu0 0.0
    %2325 = vmatpush2.msra.mxu0 0.0
    %2326 = vmatprep.mubr.f32.mxu0 0.0
    %2327 = vmatmul.mubr.f32.gmra.mxu0 %v2187
    %v2328 = vpop.f32.mrf.mxu0
    %v2329 = vadd.f32 0.0, %v2328
    %v2330 = vpop.f32.mrf.mxu0
    %2331 = vdwg.mxu0
    %v2332 = vadd.f32 %v2261, %v2329
    %s2333 = scalar_lea.vmem [#allocation2], 168
    %v2334 = vld [vmem:[%s2333] sm:$0xff]
    %2335 = vmatprep.subr.mxu0 0.0
    %2336 = vmatpush1.msra.mxu0 0.0
    %2337 = vmatprep.subr.mxu0 0.0
    %2338 = vmatpush1.msra.mxu0 0.0
    %2339 = vmatprep.subr.mxu0 0.0
    %2340 = vmatpush1.msra.mxu0 0.0
    %2341 = vmatprep.subr.mxu0 0.0
    %2342 = vmatpush1.msra.mxu0 0.0
    %2343 = vmatprep.subr.mxu0 0.0
    %2344 = vmatpush1.msra.mxu0 0.0
    %2345 = vmatprep.subr.mxu0 0.0
    %2346 = vmatpush1.msra.mxu0 0.0
    %2347 = vmatprep.subr.mxu0 0.0
    %2348 = vmatpush1.msra.mxu0 0.0
    %2349 = vmatprep.subr.mxu0 0.0
    %2350 = vmatpush1.msra.mxu0 0.0
    %2351 = vmatprep.subr.mxu0 0.0
    %2352 = vmatpush1.msra.mxu0 0.0
    %2353 = vmatprep.subr.mxu0 0.0
    %2354 = vmatpush1.msra.mxu0 0.0
    %2355 = vmatprep.subr.mxu0 0.0
    %2356 = vmatpush1.msra.mxu0 0.0
    %2357 = vmatprep.subr.mxu0 0.0
    %2358 = vmatpush1.msra.mxu0 0.0
    %2359 = vmatprep.subr.mxu0 0.0
    %2360 = vmatpush1.msra.mxu0 %v578
    %2361 = vmatprep.subr.mxu0 0.0
    %2362 = vmatpush1.msra.mxu0 %v577
    %2363 = vmatprep.subr.mxu0 0.0
    %2364 = vmatpush1.msra.mxu0 %v576
    %2365 = vmatprep.subr.mxu0 0.0
    %2366 = vmatpush1.msra.mxu0 %v575
    %2367 = vmatprep.subr.mxu0 0.0
    %2368 = vmatpush2.msra.mxu0 0.0
    %2369 = vmatprep.subr.mxu0 0.0
    %2370 = vmatpush2.msra.mxu0 0.0
    %2371 = vmatprep.subr.mxu0 0.0
    %2372 = vmatpush2.msra.mxu0 0.0
    %2373 = vmatprep.subr.mxu0 0.0
    %2374 = vmatpush2.msra.mxu0 0.0
    %2375 = vmatprep.subr.mxu0 0.0
    %2376 = vmatpush2.msra.mxu0 0.0
    %2377 = vmatprep.subr.mxu0 0.0
    %2378 = vmatpush2.msra.mxu0 0.0
    %2379 = vmatprep.subr.mxu0 0.0
    %2380 = vmatpush2.msra.mxu0 0.0
    %2381 = vmatprep.subr.mxu0 0.0
    %2382 = vmatpush2.msra.mxu0 0.0
    %2383 = vmatprep.subr.mxu0 0.0
    %2384 = vmatpush2.msra.mxu0 0.0
    %2385 = vmatprep.subr.mxu0 0.0
    %2386 = vmatpush2.msra.mxu0 0.0
    %2387 = vmatprep.subr.mxu0 0.0
    %2388 = vmatpush2.msra.mxu0 0.0
    %2389 = vmatprep.subr.mxu0 0.0
    %2390 = vmatpush2.msra.mxu0 0.0
    %2391 = vmatprep.subr.mxu0 0.0
    %2392 = vmatpush2.msra.mxu0 0.0
    %2393 = vmatprep.subr.mxu0 0.0
    %2394 = vmatpush2.msra.mxu0 0.0
    %2395 = vmatprep.subr.mxu0 0.0
    %2396 = vmatpush2.msra.mxu0 0.0
    %2397 = vmatprep.subr.mxu0 0.0
    %2398 = vmatpush2.msra.mxu0 0.0
    %2399 = vmatprep.mubr.f32.mxu0 0.0
    %2400 = vmatmul.mubr.f32.gmra.mxu0 %v2187
    %v2401 = vpop.f32.mrf.mxu0
    %v2402 = vadd.f32 0.0, %v2401
    %v2403 = vpop.f32.mrf.mxu0
    %2404 = vdwg.mxu0
    %v2405 = vadd.f32 %v2334, %v2402
    %s2406 = scalar_lea.vmem [#allocation2], 232
    %v2407 = vld [vmem:[%s2406] sm:$0xff]
    %2408 = vmatprep.subr.mxu0 0.0
    %2409 = vmatpush1.msra.mxu0 0.0
    %2410 = vmatprep.subr.mxu0 0.0
    %2411 = vmatpush1.msra.mxu0 0.0
    %2412 = vmatprep.subr.mxu0 0.0
    %2413 = vmatpush1.msra.mxu0 0.0
    %2414 = vmatprep.subr.mxu0 0.0
    %2415 = vmatpush1.msra.mxu0 0.0
    %2416 = vmatprep.subr.mxu0 0.0
    %2417 = vmatpush1.msra.mxu0 0.0
    %2418 = vmatprep.subr.mxu0 0.0
    %2419 = vmatpush1.msra.mxu0 0.0
    %2420 = vmatprep.subr.mxu0 0.0
    %2421 = vmatpush1.msra.mxu0 0.0
    %2422 = vmatprep.subr.mxu0 0.0
    %2423 = vmatpush1.msra.mxu0 0.0
    %2424 = vmatprep.subr.mxu0 0.0
    %2425 = vmatpush1.msra.mxu0 0.0
    %2426 = vmatprep.subr.mxu0 0.0
    %2427 = vmatpush1.msra.mxu0 0.0
    %2428 = vmatprep.subr.mxu0 0.0
    %2429 = vmatpush1.msra.mxu0 0.0
    %2430 = vmatprep.subr.mxu0 0.0
    %2431 = vmatpush1.msra.mxu0 0.0
    %2432 = vmatprep.subr.mxu0 0.0
    %2433 = vmatpush1.msra.mxu0 %v583
    %2434 = vmatprep.subr.mxu0 0.0
    %2435 = vmatpush1.msra.mxu0 %v582
    %2436 = vmatprep.subr.mxu0 0.0
    %2437 = vmatpush1.msra.mxu0 %v581
    %2438 = vmatprep.subr.mxu0 0.0
    %2439 = vmatpush1.msra.mxu0 %v580
    %2440 = vmatprep.subr.mxu0 0.0
    %2441 = vmatpush2.msra.mxu0 0.0
    %2442 = vmatprep.subr.mxu0 0.0
    %2443 = vmatpush2.msra.mxu0 0.0
    %2444 = vmatprep.subr.mxu0 0.0
    %2445 = vmatpush2.msra.mxu0 0.0
    %2446 = vmatprep.subr.mxu0 0.0
    %2447 = vmatpush2.msra.mxu0 0.0
    %2448 = vmatprep.subr.mxu0 0.0
    %2449 = vmatpush2.msra.mxu0 0.0
    %2450 = vmatprep.subr.mxu0 0.0
    %2451 = vmatpush2.msra.mxu0 0.0
    %2452 = vmatprep.subr.mxu0 0.0
    %2453 = vmatpush2.msra.mxu0 0.0
    %2454 = vmatprep.subr.mxu0 0.0
    %2455 = vmatpush2.msra.mxu0 0.0
    %2456 = vmatprep.subr.mxu0 0.0
    %2457 = vmatpush2.msra.mxu0 0.0
    %2458 = vmatprep.subr.mxu0 0.0
    %2459 = vmatpush2.msra.mxu0 0.0
    %2460 = vmatprep.subr.mxu0 0.0
    %2461 = vmatpush2.msra.mxu0 0.0
    %2462 = vmatprep.subr.mxu0 0.0
    %2463 = vmatpush2.msra.mxu0 0.0
    %2464 = vmatprep.subr.mxu0 0.0
    %2465 = vmatpush2.msra.mxu0 0.0
    %2466 = vmatprep.subr.mxu0 0.0
    %2467 = vmatpush2.msra.mxu0 0.0
    %2468 = vmatprep.subr.mxu0 0.0
    %2469 = vmatpush2.msra.mxu0 0.0
    %2470 = vmatprep.subr.mxu0 0.0
    %2471 = vmatpush2.msra.mxu0 0.0
    %2472 = vmatprep.mubr.f32.mxu0 0.0
    %2473 = vmatmul.mubr.f32.gmra.mxu0 %v2187
    %v2474 = vpop.f32.mrf.mxu0
    %v2475 = vadd.f32 0.0, %v2474
    %v2476 = vpop.f32.mrf.mxu0
    %2477 = vdwg.mxu0
    %v2478 = vadd.f32 %v2407, %v2475
    %v2479 = vxor.u32 %v2259, 2147483648
    %v2480 = vmul.f32 %v2479, 1.442695
    %v2481 = vpow.pop %v2480
    %v2482 = vadd.f32 %v2481, 1.0
    %v2483 = vrcp.pop %v2482
    %v2484 = vmul.f32 1.0, %v2483
    %v2485 = vxor.u32 %v2332, 2147483648
    %v2486 = vmul.f32 %v2485, 1.442695
    %v2487 = vpow.pop %v2486
    %v2488 = vadd.f32 %v2487, 1.0
    %v2489 = vrcp.pop %v2488
    %v2490 = vmul.f32 1.0, %v2489
    %v2491 = vtanh.pop %v2405
    %v2492 = vxor.u32 %v2478, 2147483648
    %v2493 = vmul.f32 %v2492, 1.442695
    %v2494 = vpow.pop %v2493
    %v2495 = vadd.f32 %v2494, 1.0
    %v2496 = vrcp.pop %v2495
    %v2497 = vmul.f32 1.0, %v2496
    %v2498 = vmul.f32 %v2490, %v2179
    %v2499 = vmul.f32 %v2484, %v2491
    %v2500 = vadd.f32 %v2498, %v2499
    %v2501 = vtanh.pop %v2500
    %v2502 = vmul.f32 %v2497, %v2501
    %s2503 = scalar_lea.vmem %s8, 40
    %2504 = vst.msk [vmem:[%s2503] sm:$0xff] %vm181, %v2502
    %s2505 = scalar_lea.vmem [#allocation2], 48
    %v2506 = vld [vmem:[%s2505] sm:$0xff]
    %v2508 = vsel %vm181, %v2502, 0
    %2510 = vmatprep.subr.mxu0 0.0
    %2511 = vmatpush1.msra.mxu0 0.0
    %2512 = vmatprep.subr.mxu0 0.0
    %2513 = vmatpush1.msra.mxu0 0.0
    %2514 = vmatprep.subr.mxu0 0.0
    %2515 = vmatpush1.msra.mxu0 0.0
    %2516 = vmatprep.subr.mxu0 0.0
    %2517 = vmatpush1.msra.mxu0 0.0
    %2518 = vmatprep.subr.mxu0 0.0
    %2519 = vmatpush1.msra.mxu0 0.0
    %2520 = vmatprep.subr.mxu0 0.0
    %2521 = vmatpush1.msra.mxu0 0.0
    %2522 = vmatprep.subr.mxu0 0.0
    %2523 = vmatpush1.msra.mxu0 0.0
    %2524 = vmatprep.subr.mxu0 0.0
    %2525 = vmatpush1.msra.mxu0 0.0
    %2526 = vmatprep.subr.mxu0 0.0
    %2527 = vmatpush1.msra.mxu0 0.0
    %2528 = vmatprep.subr.mxu0 0.0
    %2529 = vmatpush1.msra.mxu0 0.0
    %2530 = vmatprep.subr.mxu0 0.0
    %2531 = vmatpush1.msra.mxu0 0.0
    %2532 = vmatprep.subr.mxu0 0.0
    %2533 = vmatpush1.msra.mxu0 0.0
    %2534 = vmatprep.subr.mxu0 0.0
    %2535 = vmatpush1.msra.mxu0 %v568
    %2536 = vmatprep.subr.mxu0 0.0
    %2537 = vmatpush1.msra.mxu0 %v567
    %2538 = vmatprep.subr.mxu0 0.0
    %2539 = vmatpush1.msra.mxu0 %v566
    %2540 = vmatprep.subr.mxu0 0.0
    %2541 = vmatpush1.msra.mxu0 %v565
    %2542 = vmatprep.subr.mxu0 0.0
    %2543 = vmatpush2.msra.mxu0 0.0
    %2544 = vmatprep.subr.mxu0 0.0
    %2545 = vmatpush2.msra.mxu0 0.0
    %2546 = vmatprep.subr.mxu0 0.0
    %2547 = vmatpush2.msra.mxu0 0.0
    %2548 = vmatprep.subr.mxu0 0.0
    %2549 = vmatpush2.msra.mxu0 0.0
    %2550 = vmatprep.subr.mxu0 0.0
    %2551 = vmatpush2.msra.mxu0 0.0
    %2552 = vmatprep.subr.mxu0 0.0
    %2553 = vmatpush2.msra.mxu0 0.0
    %2554 = vmatprep.subr.mxu0 0.0
    %2555 = vmatpush2.msra.mxu0 0.0
    %2556 = vmatprep.subr.mxu0 0.0
    %2557 = vmatpush2.msra.mxu0 0.0
    %2558 = vmatprep.subr.mxu0 0.0
    %2559 = vmatpush2.msra.mxu0 0.0
    %2560 = vmatprep.subr.mxu0 0.0
    %2561 = vmatpush2.msra.mxu0 0.0
    %2562 = vmatprep.subr.mxu0 0.0
    %2563 = vmatpush2.msra.mxu0 0.0
    %2564 = vmatprep.subr.mxu0 0.0
    %2565 = vmatpush2.msra.mxu0 0.0
    %2566 = vmatprep.subr.mxu0 0.0
    %2567 = vmatpush2.msra.mxu0 0.0
    %2568 = vmatprep.subr.mxu0 0.0
    %2569 = vmatpush2.msra.mxu0 0.0
    %2570 = vmatprep.subr.mxu0 0.0
    %2571 = vmatpush2.msra.mxu0 0.0
    %2572 = vmatprep.subr.mxu0 0.0
    %2573 = vmatpush2.msra.mxu0 0.0
    %2574 = vmatprep.mubr.f32.mxu0 0.0
    %2575 = vmatmul.mubr.f32.gmra.mxu0 %v2508
    %v2576 = vpop.f32.mrf.mxu0
    %v2577 = vadd.f32 0.0, %v2576
    %v2578 = vpop.f32.mrf.mxu0
    %2579 = vdwg.mxu0
    %v2580 = vadd.f32 %v2506, %v2577
    %s2581 = scalar_lea.vmem [#allocation2], 112
    %v2582 = vld [vmem:[%s2581] sm:$0xff]
    %2583 = vmatprep.subr.mxu0 0.0
    %2584 = vmatpush1.msra.mxu0 0.0
    %2585 = vmatprep.subr.mxu0 0.0
    %2586 = vmatpush1.msra.mxu0 0.0
    %2587 = vmatprep.subr.mxu0 0.0
    %2588 = vmatpush1.msra.mxu0 0.0
    %2589 = vmatprep.subr.mxu0 0.0
    %2590 = vmatpush1.msra.mxu0 0.0
    %2591 = vmatprep.subr.mxu0 0.0
    %2592 = vmatpush1.msra.mxu0 0.0
    %2593 = vmatprep.subr.mxu0 0.0
    %2594 = vmatpush1.msra.mxu0 0.0
    %2595 = vmatprep.subr.mxu0 0.0
    %2596 = vmatpush1.msra.mxu0 0.0
    %2597 = vmatprep.subr.mxu0 0.0
    %2598 = vmatpush1.msra.mxu0 0.0
    %2599 = vmatprep.subr.mxu0 0.0
    %2600 = vmatpush1.msra.mxu0 0.0
    %2601 = vmatprep.subr.mxu0 0.0
    %2602 = vmatpush1.msra.mxu0 0.0
    %2603 = vmatprep.subr.mxu0 0.0
    %2604 = vmatpush1.msra.mxu0 0.0
    %2605 = vmatprep.subr.mxu0 0.0
    %2606 = vmatpush1.msra.mxu0 0.0
    %2607 = vmatprep.subr.mxu0 0.0
    %2608 = vmatpush1.msra.mxu0 %v573
    %2609 = vmatprep.subr.mxu0 0.0
    %2610 = vmatpush1.msra.mxu0 %v572
    %2611 = vmatprep.subr.mxu0 0.0
    %2612 = vmatpush1.msra.mxu0 %v571
    %2613 = vmatprep.subr.mxu0 0.0
    %2614 = vmatpush1.msra.mxu0 %v570
    %2615 = vmatprep.subr.mxu0 0.0
    %2616 = vmatpush2.msra.mxu0 0.0
    %2617 = vmatprep.subr.mxu0 0.0
    %2618 = vmatpush2.msra.mxu0 0.0
    %2619 = vmatprep.subr.mxu0 0.0
    %2620 = vmatpush2.msra.mxu0 0.0
    %2621 = vmatprep.subr.mxu0 0.0
    %2622 = vmatpush2.msra.mxu0 0.0
    %2623 = vmatprep.subr.mxu0 0.0
    %2624 = vmatpush2.msra.mxu0 0.0
    %2625 = vmatprep.subr.mxu0 0.0
    %2626 = vmatpush2.msra.mxu0 0.0
    %2627 = vmatprep.subr.mxu0 0.0
    %2628 = vmatpush2.msra.mxu0 0.0
    %2629 = vmatprep.subr.mxu0 0.0
    %2630 = vmatpush2.msra.mxu0 0.0
    %2631 = vmatprep.subr.mxu0 0.0
    %2632 = vmatpush2.msra.mxu0 0.0
    %2633 = vmatprep.subr.mxu0 0.0
    %2634 = vmatpush2.msra.mxu0 0.0
    %2635 = vmatprep.subr.mxu0 0.0
    %2636 = vmatpush2.msra.mxu0 0.0
    %2637 = vmatprep.subr.mxu0 0.0
    %2638 = vmatpush2.msra.mxu0 0.0
    %2639 = vmatprep.subr.mxu0 0.0
    %2640 = vmatpush2.msra.mxu0 0.0
    %2641 = vmatprep.subr.mxu0 0.0
    %2642 = vmatpush2.msra.mxu0 0.0
    %2643 = vmatprep.subr.mxu0 0.0
    %2644 = vmatpush2.msra.mxu0 0.0
    %2645 = vmatprep.subr.mxu0 0.0
    %2646 = vmatpush2.msra.mxu0 0.0
    %2647 = vmatprep.mubr.f32.mxu0 0.0
    %2648 = vmatmul.mubr.f32.gmra.mxu0 %v2508
    %v2649 = vpop.f32.mrf.mxu0
    %v2650 = vadd.f32 0.0, %v2649
    %v2651 = vpop.f32.mrf.mxu0
    %2652 = vdwg.mxu0
    %v2653 = vadd.f32 %v2582, %v2650
    %s2654 = scalar_lea.vmem [#allocation2], 176
    %v2655 = vld [vmem:[%s2654] sm:$0xff]
    %2656 = vmatprep.subr.mxu0 0.0
    %2657 = vmatpush1.msra.mxu0 0.0
    %2658 = vmatprep.subr.mxu0 0.0
    %2659 = vmatpush1.msra.mxu0 0.0
    %2660 = vmatprep.subr.mxu0 0.0
    %2661 = vmatpush1.msra.mxu0 0.0
    %2662 = vmatprep.subr.mxu0 0.0
    %2663 = vmatpush1.msra.mxu0 0.0
    %2664 = vmatprep.subr.mxu0 0.0
    %2665 = vmatpush1.msra.mxu0 0.0
    %2666 = vmatprep.subr.mxu0 0.0
    %2667 = vmatpush1.msra.mxu0 0.0
    %2668 = vmatprep.subr.mxu0 0.0
    %2669 = vmatpush1.msra.mxu0 0.0
    %2670 = vmatprep.subr.mxu0 0.0
    %2671 = vmatpush1.msra.mxu0 0.0
    %2672 = vmatprep.subr.mxu0 0.0
    %2673 = vmatpush1.msra.mxu0 0.0
    %2674 = vmatprep.subr.mxu0 0.0
    %2675 = vmatpush1.msra.mxu0 0.0
    %2676 = vmatprep.subr.mxu0 0.0
    %2677 = vmatpush1.msra.mxu0 0.0
    %2678 = vmatprep.subr.mxu0 0.0
    %2679 = vmatpush1.msra.mxu0 0.0
    %2680 = vmatprep.subr.mxu0 0.0
    %2681 = vmatpush1.msra.mxu0 %v578
    %2682 = vmatprep.subr.mxu0 0.0
    %2683 = vmatpush1.msra.mxu0 %v577
    %2684 = vmatprep.subr.mxu0 0.0
    %2685 = vmatpush1.msra.mxu0 %v576
    %2686 = vmatprep.subr.mxu0 0.0
    %2687 = vmatpush1.msra.mxu0 %v575
    %2688 = vmatprep.subr.mxu0 0.0
    %2689 = vmatpush2.msra.mxu0 0.0
    %2690 = vmatprep.subr.mxu0 0.0
    %2691 = vmatpush2.msra.mxu0 0.0
    %2692 = vmatprep.subr.mxu0 0.0
    %2693 = vmatpush2.msra.mxu0 0.0
    %2694 = vmatprep.subr.mxu0 0.0
    %2695 = vmatpush2.msra.mxu0 0.0
    %2696 = vmatprep.subr.mxu0 0.0
    %2697 = vmatpush2.msra.mxu0 0.0
    %2698 = vmatprep.subr.mxu0 0.0
    %2699 = vmatpush2.msra.mxu0 0.0
    %2700 = vmatprep.subr.mxu0 0.0
    %2701 = vmatpush2.msra.mxu0 0.0
    %2702 = vmatprep.subr.mxu0 0.0
    %2703 = vmatpush2.msra.mxu0 0.0
    %2704 = vmatprep.subr.mxu0 0.0
    %2705 = vmatpush2.msra.mxu0 0.0
    %2706 = vmatprep.subr.mxu0 0.0
    %2707 = vmatpush2.msra.mxu0 0.0
    %2708 = vmatprep.subr.mxu0 0.0
    %2709 = vmatpush2.msra.mxu0 0.0
    %2710 = vmatprep.subr.mxu0 0.0
    %2711 = vmatpush2.msra.mxu0 0.0
    %2712 = vmatprep.subr.mxu0 0.0
    %2713 = vmatpush2.msra.mxu0 0.0
    %2714 = vmatprep.subr.mxu0 0.0
    %2715 = vmatpush2.msra.mxu0 0.0
    %2716 = vmatprep.subr.mxu0 0.0
    %2717 = vmatpush2.msra.mxu0 0.0
    %2718 = vmatprep.subr.mxu0 0.0
    %2719 = vmatpush2.msra.mxu0 0.0
    %2720 = vmatprep.mubr.f32.mxu0 0.0
    %2721 = vmatmul.mubr.f32.gmra.mxu0 %v2508
    %v2722 = vpop.f32.mrf.mxu0
    %v2723 = vadd.f32 0.0, %v2722
    %v2724 = vpop.f32.mrf.mxu0
    %2725 = vdwg.mxu0
    %v2726 = vadd.f32 %v2655, %v2723
    %s2727 = scalar_lea.vmem [#allocation2], 240
    %v2728 = vld [vmem:[%s2727] sm:$0xff]
    %2729 = vmatprep.subr.mxu0 0.0
    %2730 = vmatpush1.msra.mxu0 0.0
    %2731 = vmatprep.subr.mxu0 0.0
    %2732 = vmatpush1.msra.mxu0 0.0
    %2733 = vmatprep.subr.mxu0 0.0
    %2734 = vmatpush1.msra.mxu0 0.0
    %2735 = vmatprep.subr.mxu0 0.0
    %2736 = vmatpush1.msra.mxu0 0.0
    %2737 = vmatprep.subr.mxu0 0.0
    %2738 = vmatpush1.msra.mxu0 0.0
    %2739 = vmatprep.subr.mxu0 0.0
    %2740 = vmatpush1.msra.mxu0 0.0
    %2741 = vmatprep.subr.mxu0 0.0
    %2742 = vmatpush1.msra.mxu0 0.0
    %2743 = vmatprep.subr.mxu0 0.0
    %2744 = vmatpush1.msra.mxu0 0.0
    %2745 = vmatprep.subr.mxu0 0.0
    %2746 = vmatpush1.msra.mxu0 0.0
    %2747 = vmatprep.subr.mxu0 0.0
    %2748 = vmatpush1.msra.mxu0 0.0
    %2749 = vmatprep.subr.mxu0 0.0
    %2750 = vmatpush1.msra.mxu0 0.0
    %2751 = vmatprep.subr.mxu0 0.0
    %2752 = vmatpush1.msra.mxu0 0.0
    %2753 = vmatprep.subr.mxu0 0.0
    %2754 = vmatpush1.msra.mxu0 %v583
    %2755 = vmatprep.subr.mxu0 0.0
    %2756 = vmatpush1.msra.mxu0 %v582
    %2757 = vmatprep.subr.mxu0 0.0
    %2758 = vmatpush1.msra.mxu0 %v581
    %2759 = vmatprep.subr.mxu0 0.0
    %2760 = vmatpush1.msra.mxu0 %v580
    %2761 = vmatprep.subr.mxu0 0.0
    %2762 = vmatpush2.msra.mxu0 0.0
    %2763 = vmatprep.subr.mxu0 0.0
    %2764 = vmatpush2.msra.mxu0 0.0
    %2765 = vmatprep.subr.mxu0 0.0
    %2766 = vmatpush2.msra.mxu0 0.0
    %2767 = vmatprep.subr.mxu0 0.0
    %2768 = vmatpush2.msra.mxu0 0.0
    %2769 = vmatprep.subr.mxu0 0.0
    %2770 = vmatpush2.msra.mxu0 0.0
    %2771 = vmatprep.subr.mxu0 0.0
    %2772 = vmatpush2.msra.mxu0 0.0
    %2773 = vmatprep.subr.mxu0 0.0
    %2774 = vmatpush2.msra.mxu0 0.0
    %2775 = vmatprep.subr.mxu0 0.0
    %2776 = vmatpush2.msra.mxu0 0.0
    %2777 = vmatprep.subr.mxu0 0.0
    %2778 = vmatpush2.msra.mxu0 0.0
    %2779 = vmatprep.subr.mxu0 0.0
    %2780 = vmatpush2.msra.mxu0 0.0
    %2781 = vmatprep.subr.mxu0 0.0
    %2782 = vmatpush2.msra.mxu0 0.0
    %2783 = vmatprep.subr.mxu0 0.0
    %2784 = vmatpush2.msra.mxu0 0.0
    %2785 = vmatprep.subr.mxu0 0.0
    %2786 = vmatpush2.msra.mxu0 0.0
    %2787 = vmatprep.subr.mxu0 0.0
    %2788 = vmatpush2.msra.mxu0 0.0
    %2789 = vmatprep.subr.mxu0 0.0
    %2790 = vmatpush2.msra.mxu0 0.0
    %2791 = vmatprep.subr.mxu0 0.0
    %2792 = vmatpush2.msra.mxu0 0.0
    %2793 = vmatprep.mubr.f32.mxu0 0.0
    %2794 = vmatmul.mubr.f32.gmra.mxu0 %v2508
    %v2795 = vpop.f32.mrf.mxu0
    %v2796 = vadd.f32 0.0, %v2795
    %v2797 = vpop.f32.mrf.mxu0
    %2798 = vdwg.mxu0
    %v2799 = vadd.f32 %v2728, %v2796
    %v2800 = vxor.u32 %v2580, 2147483648
    %v2801 = vmul.f32 %v2800, 1.442695
    %v2802 = vpow.pop %v2801
    %v2803 = vadd.f32 %v2802, 1.0
    %v2804 = vrcp.pop %v2803
    %v2805 = vmul.f32 1.0, %v2804
    %v2806 = vxor.u32 %v2653, 2147483648
    %v2807 = vmul.f32 %v2806, 1.442695
    %v2808 = vpow.pop %v2807
    %v2809 = vadd.f32 %v2808, 1.0
    %v2810 = vrcp.pop %v2809
    %v2811 = vmul.f32 1.0, %v2810
    %v2812 = vtanh.pop %v2726
    %v2813 = vxor.u32 %v2799, 2147483648
    %v2814 = vmul.f32 %v2813, 1.442695
    %v2815 = vpow.pop %v2814
    %v2816 = vadd.f32 %v2815, 1.0
    %v2817 = vrcp.pop %v2816
    %v2818 = vmul.f32 1.0, %v2817
    %v2819 = vmul.f32 %v2811, %v2500
    %v2820 = vmul.f32 %v2805, %v2812
    %v2821 = vadd.f32 %v2819, %v2820
    %v2822 = vtanh.pop %v2821
    %v2823 = vmul.f32 %v2818, %v2822
    %s2824 = scalar_lea.vmem %s8, 48
    %2825 = vst.msk [vmem:[%s2824] sm:$0xff] %vm181, %v2823
    %s2826 = scalar_lea.vmem [#allocation2], 56
    %v2827 = vld [vmem:[%s2826] sm:$0xff]
    %v2829 = vsel %vm181, %v2823, 0
    %2831 = vmatprep.subr.mxu0 0.0
    %2832 = vmatpush1.msra.mxu0 0.0
    %2833 = vmatprep.subr.mxu0 0.0
    %2834 = vmatpush1.msra.mxu0 0.0
    %2835 = vmatprep.subr.mxu0 0.0
    %2836 = vmatpush1.msra.mxu0 0.0
    %2837 = vmatprep.subr.mxu0 0.0
    %2838 = vmatpush1.msra.mxu0 0.0
    %2839 = vmatprep.subr.mxu0 0.0
    %2840 = vmatpush1.msra.mxu0 0.0
    %2841 = vmatprep.subr.mxu0 0.0
    %2842 = vmatpush1.msra.mxu0 0.0
    %2843 = vmatprep.subr.mxu0 0.0
    %2844 = vmatpush1.msra.mxu0 0.0
    %2845 = vmatprep.subr.mxu0 0.0
    %2846 = vmatpush1.msra.mxu0 0.0
    %2847 = vmatprep.subr.mxu0 0.0
    %2848 = vmatpush1.msra.mxu0 0.0
    %2849 = vmatprep.subr.mxu0 0.0
    %2850 = vmatpush1.msra.mxu0 0.0
    %2851 = vmatprep.subr.mxu0 0.0
    %2852 = vmatpush1.msra.mxu0 0.0
    %2853 = vmatprep.subr.mxu0 0.0
    %2854 = vmatpush1.msra.mxu0 0.0
    %2855 = vmatprep.subr.mxu0 0.0
    %2856 = vmatpush1.msra.mxu0 %v568
    %2857 = vmatprep.subr.mxu0 0.0
    %2858 = vmatpush1.msra.mxu0 %v567
    %2859 = vmatprep.subr.mxu0 0.0
    %2860 = vmatpush1.msra.mxu0 %v566
    %2861 = vmatprep.subr.mxu0 0.0
    %2862 = vmatpush1.msra.mxu0 %v565
    %2863 = vmatprep.subr.mxu0 0.0
    %2864 = vmatpush2.msra.mxu0 0.0
    %2865 = vmatprep.subr.mxu0 0.0
    %2866 = vmatpush2.msra.mxu0 0.0
    %2867 = vmatprep.subr.mxu0 0.0
    %2868 = vmatpush2.msra.mxu0 0.0
    %2869 = vmatprep.subr.mxu0 0.0
    %2870 = vmatpush2.msra.mxu0 0.0
    %2871 = vmatprep.subr.mxu0 0.0
    %2872 = vmatpush2.msra.mxu0 0.0
    %2873 = vmatprep.subr.mxu0 0.0
    %2874 = vmatpush2.msra.mxu0 0.0
    %2875 = vmatprep.subr.mxu0 0.0
    %2876 = vmatpush2.msra.mxu0 0.0
    %2877 = vmatprep.subr.mxu0 0.0
    %2878 = vmatpush2.msra.mxu0 0.0
    %2879 = vmatprep.subr.mxu0 0.0
    %2880 = vmatpush2.msra.mxu0 0.0
    %2881 = vmatprep.subr.mxu0 0.0
    %2882 = vmatpush2.msra.mxu0 0.0
    %2883 = vmatprep.subr.mxu0 0.0
    %2884 = vmatpush2.msra.mxu0 0.0
    %2885 = vmatprep.subr.mxu0 0.0
    %2886 = vmatpush2.msra.mxu0 0.0
    %2887 = vmatprep.subr.mxu0 0.0
    %2888 = vmatpush2.msra.mxu0 0.0
    %2889 = vmatprep.subr.mxu0 0.0
    %2890 = vmatpush2.msra.mxu0 0.0
    %2891 = vmatprep.subr.mxu0 0.0
    %2892 = vmatpush2.msra.mxu0 0.0
    %2893 = vmatprep.subr.mxu0 0.0
    %2894 = vmatpush2.msra.mxu0 0.0
    %2895 = vmatprep.mubr.f32.mxu0 0.0
    %2896 = vmatmul.mubr.f32.gmra.mxu0 %v2829
    %v2897 = vpop.f32.mrf.mxu0
    %v2898 = vadd.f32 0.0, %v2897
    %v2899 = vpop.f32.mrf.mxu0
    %2900 = vdwg.mxu0
    %v2901 = vadd.f32 %v2827, %v2898
    %s2902 = scalar_lea.vmem [#allocation2], 120
    %v2903 = vld [vmem:[%s2902] sm:$0xff]
    %2904 = vmatprep.subr.mxu0 0.0
    %2905 = vmatpush1.msra.mxu0 0.0
    %2906 = vmatprep.subr.mxu0 0.0
    %2907 = vmatpush1.msra.mxu0 0.0
    %2908 = vmatprep.subr.mxu0 0.0
    %2909 = vmatpush1.msra.mxu0 0.0
    %2910 = vmatprep.subr.mxu0 0.0
    %2911 = vmatpush1.msra.mxu0 0.0
    %2912 = vmatprep.subr.mxu0 0.0
    %2913 = vmatpush1.msra.mxu0 0.0
    %2914 = vmatprep.subr.mxu0 0.0
    %2915 = vmatpush1.msra.mxu0 0.0
    %2916 = vmatprep.subr.mxu0 0.0
    %2917 = vmatpush1.msra.mxu0 0.0
    %2918 = vmatprep.subr.mxu0 0.0
    %2919 = vmatpush1.msra.mxu0 0.0
    %2920 = vmatprep.subr.mxu0 0.0
    %2921 = vmatpush1.msra.mxu0 0.0
    %2922 = vmatprep.subr.mxu0 0.0
    %2923 = vmatpush1.msra.mxu0 0.0
    %2924 = vmatprep.subr.mxu0 0.0
    %2925 = vmatpush1.msra.mxu0 0.0
    %2926 = vmatprep.subr.mxu0 0.0
    %2927 = vmatpush1.msra.mxu0 0.0
    %2928 = vmatprep.subr.mxu0 0.0
    %2929 = vmatpush1.msra.mxu0 %v573
    %2930 = vmatprep.subr.mxu0 0.0
    %2931 = vmatpush1.msra.mxu0 %v572
    %2932 = vmatprep.subr.mxu0 0.0
    %2933 = vmatpush1.msra.mxu0 %v571
    %2934 = vmatprep.subr.mxu0 0.0
    %2935 = vmatpush1.msra.mxu0 %v570
    %2936 = vmatprep.subr.mxu0 0.0
    %2937 = vmatpush2.msra.mxu0 0.0
    %2938 = vmatprep.subr.mxu0 0.0
    %2939 = vmatpush2.msra.mxu0 0.0
    %2940 = vmatprep.subr.mxu0 0.0
    %2941 = vmatpush2.msra.mxu0 0.0
    %2942 = vmatprep.subr.mxu0 0.0
    %2943 = vmatpush2.msra.mxu0 0.0
    %2944 = vmatprep.subr.mxu0 0.0
    %2945 = vmatpush2.msra.mxu0 0.0
    %2946 = vmatprep.subr.mxu0 0.0
    %2947 = vmatpush2.msra.mxu0 0.0
    %2948 = vmatprep.subr.mxu0 0.0
    %2949 = vmatpush2.msra.mxu0 0.0
    %2950 = vmatprep.subr.mxu0 0.0
    %2951 = vmatpush2.msra.mxu0 0.0
    %2952 = vmatprep.subr.mxu0 0.0
    %2953 = vmatpush2.msra.mxu0 0.0
    %2954 = vmatprep.subr.mxu0 0.0
    %2955 = vmatpush2.msra.mxu0 0.0
    %2956 = vmatprep.subr.mxu0 0.0
    %2957 = vmatpush2.msra.mxu0 0.0
    %2958 = vmatprep.subr.mxu0 0.0
    %2959 = vmatpush2.msra.mxu0 0.0
    %2960 = vmatprep.subr.mxu0 0.0
    %2961 = vmatpush2.msra.mxu0 0.0
    %2962 = vmatprep.subr.mxu0 0.0
    %2963 = vmatpush2.msra.mxu0 0.0
    %2964 = vmatprep.subr.mxu0 0.0
    %2965 = vmatpush2.msra.mxu0 0.0
    %2966 = vmatprep.subr.mxu0 0.0
    %2967 = vmatpush2.msra.mxu0 0.0
    %2968 = vmatprep.mubr.f32.mxu0 0.0
    %2969 = vmatmul.mubr.f32.gmra.mxu0 %v2829
    %v2970 = vpop.f32.mrf.mxu0
    %v2971 = vadd.f32 0.0, %v2970
    %v2972 = vpop.f32.mrf.mxu0
    %2973 = vdwg.mxu0
    %v2974 = vadd.f32 %v2903, %v2971
    %s2975 = scalar_lea.vmem [#allocation2], 184
    %v2976 = vld [vmem:[%s2975] sm:$0xff]
    %2977 = vmatprep.subr.mxu0 0.0
    %2978 = vmatpush1.msra.mxu0 0.0
    %2979 = vmatprep.subr.mxu0 0.0
    %2980 = vmatpush1.msra.mxu0 0.0
    %2981 = vmatprep.subr.mxu0 0.0
    %2982 = vmatpush1.msra.mxu0 0.0
    %2983 = vmatprep.subr.mxu0 0.0
    %2984 = vmatpush1.msra.mxu0 0.0
    %2985 = vmatprep.subr.mxu0 0.0
    %2986 = vmatpush1.msra.mxu0 0.0
    %2987 = vmatprep.subr.mxu0 0.0
    %2988 = vmatpush1.msra.mxu0 0.0
    %2989 = vmatprep.subr.mxu0 0.0
    %2990 = vmatpush1.msra.mxu0 0.0
    %2991 = vmatprep.subr.mxu0 0.0
    %2992 = vmatpush1.msra.mxu0 0.0
    %2993 = vmatprep.subr.mxu0 0.0
    %2994 = vmatpush1.msra.mxu0 0.0
    %2995 = vmatprep.subr.mxu0 0.0
    %2996 = vmatpush1.msra.mxu0 0.0
    %2997 = vmatprep.subr.mxu0 0.0
    %2998 = vmatpush1.msra.mxu0 0.0
    %2999 = vmatprep.subr.mxu0 0.0
    %3000 = vmatpush1.msra.mxu0 0.0
    %3001 = vmatprep.subr.mxu0 0.0
    %3002 = vmatpush1.msra.mxu0 %v578
    %3003 = vmatprep.subr.mxu0 0.0
    %3004 = vmatpush1.msra.mxu0 %v577
    %3005 = vmatprep.subr.mxu0 0.0
    %3006 = vmatpush1.msra.mxu0 %v576
    %3007 = vmatprep.subr.mxu0 0.0
    %3008 = vmatpush1.msra.mxu0 %v575
    %3009 = vmatprep.subr.mxu0 0.0
    %3010 = vmatpush2.msra.mxu0 0.0
    %3011 = vmatprep.subr.mxu0 0.0
    %3012 = vmatpush2.msra.mxu0 0.0
    %3013 = vmatprep.subr.mxu0 0.0
    %3014 = vmatpush2.msra.mxu0 0.0
    %3015 = vmatprep.subr.mxu0 0.0
    %3016 = vmatpush2.msra.mxu0 0.0
    %3017 = vmatprep.subr.mxu0 0.0
    %3018 = vmatpush2.msra.mxu0 0.0
    %3019 = vmatprep.subr.mxu0 0.0
    %3020 = vmatpush2.msra.mxu0 0.0
    %3021 = vmatprep.subr.mxu0 0.0
    %3022 = vmatpush2.msra.mxu0 0.0
    %3023 = vmatprep.subr.mxu0 0.0
    %3024 = vmatpush2.msra.mxu0 0.0
    %3025 = vmatprep.subr.mxu0 0.0
    %3026 = vmatpush2.msra.mxu0 0.0
    %3027 = vmatprep.subr.mxu0 0.0
    %3028 = vmatpush2.msra.mxu0 0.0
    %3029 = vmatprep.subr.mxu0 0.0
    %3030 = vmatpush2.msra.mxu0 0.0
    %3031 = vmatprep.subr.mxu0 0.0
    %3032 = vmatpush2.msra.mxu0 0.0
    %3033 = vmatprep.subr.mxu0 0.0
    %3034 = vmatpush2.msra.mxu0 0.0
    %3035 = vmatprep.subr.mxu0 0.0
    %3036 = vmatpush2.msra.mxu0 0.0
    %3037 = vmatprep.subr.mxu0 0.0
    %3038 = vmatpush2.msra.mxu0 0.0
    %3039 = vmatprep.subr.mxu0 0.0
    %3040 = vmatpush2.msra.mxu0 0.0
    %3041 = vmatprep.mubr.f32.mxu0 0.0
    %3042 = vmatmul.mubr.f32.gmra.mxu0 %v2829
    %v3043 = vpop.f32.mrf.mxu0
    %v3044 = vadd.f32 0.0, %v3043
    %v3045 = vpop.f32.mrf.mxu0
    %3046 = vdwg.mxu0
    %v3047 = vadd.f32 %v2976, %v3044
    %s3048 = scalar_lea.vmem [#allocation2], 248
    %v3049 = vld [vmem:[%s3048] sm:$0xff]
    %3050 = vmatprep.subr.mxu0 0.0
    %3051 = vmatpush1.msra.mxu0 0.0
    %3052 = vmatprep.subr.mxu0 0.0
    %3053 = vmatpush1.msra.mxu0 0.0
    %3054 = vmatprep.subr.mxu0 0.0
    %3055 = vmatpush1.msra.mxu0 0.0
    %3056 = vmatprep.subr.mxu0 0.0
    %3057 = vmatpush1.msra.mxu0 0.0
    %3058 = vmatprep.subr.mxu0 0.0
    %3059 = vmatpush1.msra.mxu0 0.0
    %3060 = vmatprep.subr.mxu0 0.0
    %3061 = vmatpush1.msra.mxu0 0.0
    %3062 = vmatprep.subr.mxu0 0.0
    %3063 = vmatpush1.msra.mxu0 0.0
    %3064 = vmatprep.subr.mxu0 0.0
    %3065 = vmatpush1.msra.mxu0 0.0
    %3066 = vmatprep.subr.mxu0 0.0
    %3067 = vmatpush1.msra.mxu0 0.0
    %3068 = vmatprep.subr.mxu0 0.0
    %3069 = vmatpush1.msra.mxu0 0.0
    %3070 = vmatprep.subr.mxu0 0.0
    %3071 = vmatpush1.msra.mxu0 0.0
    %3072 = vmatprep.subr.mxu0 0.0
    %3073 = vmatpush1.msra.mxu0 0.0
    %3074 = vmatprep.subr.mxu0 0.0
    %3075 = vmatpush1.msra.mxu0 %v583
    %3076 = vmatprep.subr.mxu0 0.0
    %3077 = vmatpush1.msra.mxu0 %v582
    %3078 = vmatprep.subr.mxu0 0.0
    %3079 = vmatpush1.msra.mxu0 %v581
    %3080 = vmatprep.subr.mxu0 0.0
    %3081 = vmatpush1.msra.mxu0 %v580
    %3082 = vmatprep.subr.mxu0 0.0
    %3083 = vmatpush2.msra.mxu0 0.0
    %3084 = vmatprep.subr.mxu0 0.0
    %3085 = vmatpush2.msra.mxu0 0.0
    %3086 = vmatprep.subr.mxu0 0.0
    %3087 = vmatpush2.msra.mxu0 0.0
    %3088 = vmatprep.subr.mxu0 0.0
    %3089 = vmatpush2.msra.mxu0 0.0
    %3090 = vmatprep.subr.mxu0 0.0
    %3091 = vmatpush2.msra.mxu0 0.0
    %3092 = vmatprep.subr.mxu0 0.0
    %3093 = vmatpush2.msra.mxu0 0.0
    %3094 = vmatprep.subr.mxu0 0.0
    %3095 = vmatpush2.msra.mxu0 0.0
    %3096 = vmatprep.subr.mxu0 0.0
    %3097 = vmatpush2.msra.mxu0 0.0
    %3098 = vmatprep.subr.mxu0 0.0
    %3099 = vmatpush2.msra.mxu0 0.0
    %3100 = vmatprep.subr.mxu0 0.0
    %3101 = vmatpush2.msra.mxu0 0.0
    %3102 = vmatprep.subr.mxu0 0.0
    %3103 = vmatpush2.msra.mxu0 0.0
    %3104 = vmatprep.subr.mxu0 0.0
    %3105 = vmatpush2.msra.mxu0 0.0
    %3106 = vmatprep.subr.mxu0 0.0
    %3107 = vmatpush2.msra.mxu0 0.0
    %3108 = vmatprep.subr.mxu0 0.0
    %3109 = vmatpush2.msra.mxu0 0.0
    %3110 = vmatprep.subr.mxu0 0.0
    %3111 = vmatpush2.msra.mxu0 0.0
    %3112 = vmatprep.subr.mxu0 0.0
    %3113 = vmatpush2.msra.mxu0 0.0
    %3114 = vmatprep.mubr.f32.mxu0 0.0
    %3115 = vmatmul.mubr.f32.gmra.mxu0 %v2829
    %v3116 = vpop.f32.mrf.mxu0
    %v3117 = vadd.f32 0.0, %v3116
    %v3118 = vpop.f32.mrf.mxu0
    %3119 = vdwg.mxu0
    %v3120 = vadd.f32 %v3049, %v3117
    %v3121 = vxor.u32 %v2901, 2147483648
    %v3122 = vmul.f32 %v3121, 1.442695
    %v3123 = vpow.pop %v3122
    %v3124 = vadd.f32 %v3123, 1.0
    %v3125 = vrcp.pop %v3124
    %v3126 = vmul.f32 1.0, %v3125
    %v3127 = vxor.u32 %v2974, 2147483648
    %v3128 = vmul.f32 %v3127, 1.442695
    %v3129 = vpow.pop %v3128
    %v3130 = vadd.f32 %v3129, 1.0
    %v3131 = vrcp.pop %v3130
    %v3132 = vmul.f32 1.0, %v3131
    %v3133 = vtanh.pop %v3047
    %v3134 = vxor.u32 %v3120, 2147483648
    %v3135 = vmul.f32 %v3134, 1.442695
    %v3136 = vpow.pop %v3135
    %v3137 = vadd.f32 %v3136, 1.0
    %v3138 = vrcp.pop %v3137
    %v3139 = vmul.f32 1.0, %v3138
    %v3140 = vmul.f32 %v3132, %v2821
    %v3141 = vmul.f32 %v3126, %v3133
    %v3142 = vadd.f32 %v3140, %v3141
    %v3143 = vtanh.pop %v3142
    %v3144 = vmul.f32 %v3139, %v3143
    %s3145 = scalar_lea.vmem %s8, 56
    %3146 = vst.msk [vmem:[%s3145] sm:$0xff] %vm181, %v3144
    %3147 = vst.msk [vmem:[#allocation3] sm:$0xff] %vm181, %v3144
    %3148 = vst.msk [vmem:[#allocation5] sm:$0xff] %vm181, %v3142
    %v3149 = vld [vmem:[%s8] sm:$0xff]
    %v3150 = vld [vmem:[%s8 + $0x8] sm:$0xff]
    %v3151 = vld [vmem:[%s8 + $0x10] sm:$0xff]
    %v3152 = vld [vmem:[%s8 + $0x18] sm:$0xff]
    %v3153 = vld [vmem:[%s8 + $0x20] sm:$0xff]
    %v3154 = vld [vmem:[%s8 + $0x28] sm:$0xff]
    %v3155 = vld [vmem:[%s8 + $0x30] sm:$0xff]
    %v3156 = vld [vmem:[%s8 + $0x38] sm:$0xff]
    %v3157 = vld [vmem:[%s4] sm:$0xff]
    %v3158 = vld [vmem:[%s4 + $0x8] sm:$0xff]
    %v3159 = vld [vmem:[%s4 + $0x10] sm:$0xff]
    %v3160 = vld [vmem:[%s4 + $0x18] sm:$0xff]
    %v3161 = vld [vmem:[%s5] sm:$0x1]
    %v3163 = vlaneseq
    %v3164 = vshrl.u32 %v3163, 7
    %v3165 = vsub.s32 0, %v3164
    %v3166 = vrot.slane %v3161, %v3165
    %v3169 = vsel %vm181, %v3149, 0
    %v3172 = vsel %vm181, %v3150, 0
    %v3175 = vsel %vm181, %v3151, 0
    %v3178 = vsel %vm181, %v3152, 0
    %v3181 = vsel %vm181, %v3153, 0
    %v3184 = vsel %vm181, %v3154, 0
    %v3187 = vsel %vm181, %v3155, 0
    %v3190 = vsel %vm181, %v3156, 0
    %3192 = vmatprep.subr.mxu0 0.0
    %3193 = vmatpush1.msra.mxu0 0.0
    %3194 = vmatprep.subr.mxu0 0.0
    %3195 = vmatpush1.msra.mxu0 0.0
    %3196 = vmatprep.subr.mxu0 0.0
    %3197 = vmatpush1.msra.mxu0 0.0
    %3198 = vmatprep.subr.mxu0 0.0
    %3199 = vmatpush1.msra.mxu0 0.0
    %3200 = vmatprep.subr.mxu0 0.0
    %3201 = vmatpush1.msra.mxu0 0.0
    %3202 = vmatprep.subr.mxu0 0.0
    %3203 = vmatpush1.msra.mxu0 0.0
    %3204 = vmatprep.subr.mxu0 0.0
    %3205 = vmatpush1.msra.mxu0 0.0
    %3206 = vmatprep.subr.mxu0 0.0
    %3207 = vmatpush1.msra.mxu0 0.0
    %3208 = vmatprep.subr.mxu0 0.0
    %3209 = vmatpush1.msra.mxu0 0.0
    %3210 = vmatprep.subr.mxu0 0.0
    %3211 = vmatpush1.msra.mxu0 0.0
    %3212 = vmatprep.subr.mxu0 0.0
    %3213 = vmatpush1.msra.mxu0 0.0
    %3214 = vmatprep.subr.mxu0 0.0
    %3215 = vmatpush1.msra.mxu0 0.0
    %3216 = vmatprep.subr.mxu0 0.0
    %3217 = vmatpush1.msra.mxu0 %v3160
    %3218 = vmatprep.subr.mxu0 0.0
    %3219 = vmatpush1.msra.mxu0 %v3159
    %3220 = vmatprep.subr.mxu0 0.0
    %3221 = vmatpush1.msra.mxu0 %v3158
    %3222 = vmatprep.subr.mxu0 0.0
    %3223 = vmatpush1.msra.mxu0 %v3157
    %3224 = vmatprep.subr.mxu0 0.0
    %3225 = vmatpush2.msra.mxu0 0.0
    %3226 = vmatprep.subr.mxu0 0.0
    %3227 = vmatpush2.msra.mxu0 0.0
    %3228 = vmatprep.subr.mxu0 0.0
    %3229 = vmatpush2.msra.mxu0 0.0
    %3230 = vmatprep.subr.mxu0 0.0
    %3231 = vmatpush2.msra.mxu0 0.0
    %3232 = vmatprep.subr.mxu0 0.0
    %3233 = vmatpush2.msra.mxu0 0.0
    %3234 = vmatprep.subr.mxu0 0.0
    %3235 = vmatpush2.msra.mxu0 0.0
    %3236 = vmatprep.subr.mxu0 0.0
    %3237 = vmatpush2.msra.mxu0 0.0
    %3238 = vmatprep.subr.mxu0 0.0
    %3239 = vmatpush2.msra.mxu0 0.0
    %3240 = vmatprep.subr.mxu0 0.0
    %3241 = vmatpush2.msra.mxu0 0.0
    %3242 = vmatprep.subr.mxu0 0.0
    %3243 = vmatpush2.msra.mxu0 0.0
    %3244 = vmatprep.subr.mxu0 0.0
    %3245 = vmatpush2.msra.mxu0 0.0
    %3246 = vmatprep.subr.mxu0 0.0
    %3247 = vmatpush2.msra.mxu0 0.0
    %3248 = vmatprep.subr.mxu0 0.0
    %3249 = vmatpush2.msra.mxu0 0.0
    %3250 = vmatprep.subr.mxu0 0.0
    %3251 = vmatpush2.msra.mxu0 0.0
    %3252 = vmatprep.subr.mxu0 0.0
    %3253 = vmatpush2.msra.mxu0 0.0
    %3254 = vmatprep.subr.mxu0 0.0
    %3255 = vmatpush2.msra.mxu0 0.0
    %3256 = vmatprep.mubr.f32.mxu0 0.0
    %3257 = vmatmul.mubr.f32.gmra.mxu0 %v3169
    %v3258 = vpop.f32.mrf.mxu0
    %v3259 = vadd.f32 %v3166, %v3258
    %v3260 = vpop.f32.mrf.mxu0
    %3261 = vmatprep.mubr.f32.mxu0 0.0
    %3262 = vmatmul.mubr.f32.gmra.mxu0 %v3172
    %v3263 = vpop.f32.mrf.mxu0
    %v3264 = vadd.f32 %v3166, %v3263
    %v3265 = vpop.f32.mrf.mxu0
    %3266 = vmatprep.mubr.f32.mxu0 0.0
    %3267 = vmatmul.mubr.f32.gmra.mxu0 %v3175
    %v3268 = vpop.f32.mrf.mxu0
    %v3269 = vadd.f32 %v3166, %v3268
    %v3270 = vpop.f32.mrf.mxu0
    %3271 = vmatprep.mubr.f32.mxu0 0.0
    %3272 = vmatmul.mubr.f32.gmra.mxu0 %v3178
    %v3273 = vpop.f32.mrf.mxu0
    %v3274 = vadd.f32 %v3166, %v3273
    %v3275 = vpop.f32.mrf.mxu0
    %3276 = vmatprep.mubr.f32.mxu0 0.0
    %3277 = vmatmul.mubr.f32.gmra.mxu0 %v3181
    %v3278 = vpop.f32.mrf.mxu0
    %v3279 = vadd.f32 %v3166, %v3278
    %v3280 = vpop.f32.mrf.mxu0
    %3281 = vmatprep.mubr.f32.mxu0 0.0
    %3282 = vmatmul.mubr.f32.gmra.mxu0 %v3184
    %v3283 = vpop.f32.mrf.mxu0
    %v3284 = vadd.f32 %v3166, %v3283
    %v3285 = vpop.f32.mrf.mxu0
    %3286 = vmatprep.mubr.f32.mxu0 0.0
    %3287 = vmatmul.mubr.f32.gmra.mxu0 %v3187
    %v3288 = vpop.f32.mrf.mxu0
    %v3289 = vadd.f32 %v3166, %v3288
    %v3290 = vpop.f32.mrf.mxu0
    %3291 = vmatprep.mubr.f32.mxu0 0.0
    %3292 = vmatmul.mubr.f32.gmra.mxu0 %v3190
    %v3293 = vpop.f32.mrf.mxu0
    %v3294 = vadd.f32 %v3166, %v3293
    %v3295 = vpop.f32.mrf.mxu0
    %3296 = vdwg.mxu0
    %v3297 = vsel %vm181, %v3259, 0.0
    %3298 = vadd.xlane.f32.xlu0 %v3297
    %v3299 = vpop.xlane.xlu0 %3298
    %v3300 = vsel %vm181, %v3264, 0.0
    %3301 = vadd.xlane.f32.xlu0 %v3300
    %v3302 = vpop.xlane.xlu0 %3301
    %v3303 = vsel %vm181, %v3269, 0.0
    %3304 = vadd.xlane.f32.xlu0 %v3303
    %v3305 = vpop.xlane.xlu0 %3304
    %v3306 = vsel %vm181, %v3274, 0.0
    %3307 = vadd.xlane.f32.xlu0 %v3306
    %v3308 = vpop.xlane.xlu0 %3307
    %v3309 = vsel %vm181, %v3279, 0.0
    %3310 = vadd.xlane.f32.xlu0 %v3309
    %v3311 = vpop.xlane.xlu0 %3310
    %v3312 = vsel %vm181, %v3284, 0.0
    %3313 = vadd.xlane.f32.xlu0 %v3312
    %v3314 = vpop.xlane.xlu0 %3313
    %v3315 = vsel %vm181, %v3289, 0.0
    %3316 = vadd.xlane.f32.xlu0 %v3315
    %v3317 = vpop.xlane.xlu0 %3316
    %v3318 = vsel %vm181, %v3294, 0.0
    %3319 = vadd.xlane.f32.xlu0 %v3318
    %v3320 = vpop.xlane.xlu0 %3319
    %v3321 = vrcp.pop 32.0
    %v3322 = vmul.f32 %v3299, %v3321
    %v3323 = vmul.f32 %v3302, %v3321
    %v3324 = vmul.f32 %v3305, %v3321
    %v3325 = vmul.f32 %v3308, %v3321
    %v3326 = vmul.f32 %v3311, %v3321
    %v3327 = vmul.f32 %v3314, %v3321
    %v3328 = vmul.f32 %v3317, %v3321
    %v3329 = vmul.f32 %v3320, %v3321
    %v3330 = vsub.f32 %v3259, %v3322
    %v3331 = vsub.f32 %v3264, %v3323
    %v3332 = vsub.f32 %v3269, %v3324
    %v3333 = vsub.f32 %v3274, %v3325
    %v3334 = vsub.f32 %v3279, %v3326
    %v3335 = vsub.f32 %v3284, %v3327
    %v3336 = vsub.f32 %v3289, %v3328
    %v3337 = vsub.f32 %v3294, %v3329
    %v3338 = vmul.f32 %v3330, %v3330
    %v3339 = vmul.f32 %v3331, %v3331
    %v3340 = vmul.f32 %v3332, %v3332
    %v3341 = vmul.f32 %v3333, %v3333
    %v3342 = vmul.f32 %v3334, %v3334
    %v3343 = vmul.f32 %v3335, %v3335
    %v3344 = vmul.f32 %v3336, %v3336
    %v3345 = vmul.f32 %v3337, %v3337
    %v3346 = vsel %vm181, %v3338, 0.0
    %3347 = vadd.xlane.f32.xlu0 %v3346
    %v3348 = vpop.xlane.xlu0 %3347
    %v3349 = vsel %vm181, %v3339, 0.0
    %3350 = vadd.xlane.f32.xlu0 %v3349
    %v3351 = vpop.xlane.xlu0 %3350
    %v3352 = vsel %vm181, %v3340, 0.0
    %3353 = vadd.xlane.f32.xlu0 %v3352
    %v3354 = vpop.xlane.xlu0 %3353
    %v3355 = vsel %vm181, %v3341, 0.0
    %3356 = vadd.xlane.f32.xlu0 %v3355
    %v3357 = vpop.xlane.xlu0 %3356
    %v3358 = vsel %vm181, %v3342, 0.0
    %3359 = vadd.xlane.f32.xlu0 %v3358
    %v3360 = vpop.xlane.xlu0 %3359
    %v3361 = vsel %vm181, %v3343, 0.0
    %3362 = vadd.xlane.f32.xlu0 %v3361
    %v3363 = vpop.xlane.xlu0 %3362
    %v3364 = vsel %vm181, %v3344, 0.0
    %3365 = vadd.xlane.f32.xlu0 %v3364
    %v3366 = vpop.xlane.xlu0 %3365
    %v3367 = vsel %vm181, %v3345, 0.0
    %3368 = vadd.xlane.f32.xlu0 %v3367
    %v3369 = vpop.xlane.xlu0 %3368
    %v3370 = vmul.f32 %v3348, %v3321
    %v3371 = vmul.f32 %v3351, %v3321
    %v3372 = vmul.f32 %v3354, %v3321
    %v3373 = vmul.f32 %v3357, %v3321
    %v3374 = vmul.f32 %v3360, %v3321
    %v3375 = vmul.f32 %v3363, %v3321
    %v3376 = vmul.f32 %v3366, %v3321
    %v3377 = vmul.f32 %v3369, %v3321
    %v3378 = vadd.f32 %v3370, 1e-05
    %v3379 = vadd.f32 %v3371, 1e-05
    %v3380 = vadd.f32 %v3372, 1e-05
    %v3381 = vadd.f32 %v3373, 1e-05
    %v3382 = vadd.f32 %v3374, 1e-05
    %v3383 = vadd.f32 %v3375, 1e-05
    %v3384 = vadd.f32 %v3376, 1e-05
    %v3385 = vadd.f32 %v3377, 1e-05
    %v3386 = vrsqrt.pop %v3378
    %v3387 = vrsqrt.pop %v3379
    %v3388 = vrsqrt.pop %v3380
    %v3389 = vrsqrt.pop %v3381
    %v3390 = vrsqrt.pop %v3382
    %v3391 = vrsqrt.pop %v3383
    %v3392 = vrsqrt.pop %v3384
    %v3393 = vrsqrt.pop %v3385
    %v3394 = vmul.f32 %v3330, %v3386
    %v3395 = vmul.f32 %v3331, %v3387
    %v3396 = vmul.f32 %v3332, %v3388
    %v3397 = vmul.f32 %v3333, %v3389
    %v3398 = vmul.f32 %v3334, %v3390
    %v3399 = vmul.f32 %v3335, %v3391
    %v3400 = vmul.f32 %v3336, %v3392
    %v3401 = vmul.f32 %v3337, %v3393
    %v3402 = vld [vmem:[%s6] sm:$0x1]
    %v3404 = vlaneseq
    %v3405 = vshrl.u32 %v3404, 7
    %v3406 = vsub.s32 0, %v3405
    %v3407 = vrot.slane %v3402, %v3406
    %v3409 = vmul.f32 %v3394, %v3407
    %v3410 = vmul.f32 %v3395, %v3407
    %v3411 = vmul.f32 %v3396, %v3407
    %v3412 = vmul.f32 %v3397, %v3407
    %v3413 = vmul.f32 %v3398, %v3407
    %v3414 = vmul.f32 %v3399, %v3407
    %v3415 = vmul.f32 %v3400, %v3407
    %v3416 = vmul.f32 %v3401, %v3407
    %v3417 = vld [vmem:[%s7] sm:$0x1]
    %v3419 = vlaneseq
    %v3420 = vshrl.u32 %v3419, 7
    %v3421 = vsub.s32 0, %v3420
    %v3422 = vrot.slane %v3417, %v3421
    %v3424 = vadd.f32 %v3409, %v3422
    %v3425 = vadd.f32 %v3410, %v3422
    %v3426 = vadd.f32 %v3411, %v3422
    %v3427 = vadd.f32 %v3412, %v3422
    %v3428 = vadd.f32 %v3413, %v3422
    %v3429 = vadd.f32 %v3414, %v3422
    %v3430 = vadd.f32 %v3415, %v3422
    %v3431 = vadd.f32 %v3416, %v3422
    %3432 = vst.msk [vmem:[%s8] sm:$0xff] %vm181, %v3424
    %3433 = vst.msk [vmem:[%s8 + $0x8] sm:$0xff] %vm181, %v3425
    %3434 = vst.msk [vmem:[%s8 + $0x10] sm:$0xff] %vm181, %v3426
    %3435 = vst.msk [vmem:[%s8 + $0x18] sm:$0xff] %vm181, %v3427
    %3436 = vst.msk [vmem:[%s8 + $0x20] sm:$0xff] %vm181, %v3428
    %3437 = vst.msk [vmem:[%s8 + $0x28] sm:$0xff] %vm181, %v3429
    %3438 = vst.msk [vmem:[%s8 + $0x30] sm:$0xff] %vm181, %v3430
    %3439 = vst.msk [vmem:[%s8 + $0x38] sm:$0xff] %vm181, %v3431
    // Predicated region
    $region34: #{sequence_encoder_forward.1} parent=1 // pred_check
      _
    $region35: #{sequence_encoder_forward.1} parent=1 // pred_check_branch
      %3441 = sbr.rel (0) target = $region37
    $region36: #{sequence_encoder_forward.1} parent=1 // pred_region
      _
    $region37: #{sequence_encoder_forward.1} parent=1 // pred_fallthru
      _
    // Predicated region
    $region38: #{sequence_encoder_forward.1} parent=1 // pred_check
      _
    $region39: #{sequence_encoder_forward.1} parent=1 // pred_check_branch
      %3443 = sbr.rel (0) target = $region41
    $region40: #{sequence_encoder_forward.1} parent=1 // pred_region
      %s3445 = ssub.s32 128, 128
      %3446 = vsyncadd [#allocation4], %s3445
      %s3448 = sshll.u32 [#allocation3], 4
      %s3449 = int_to_ptr.vmem [resolvable:$true] %s3448
      %3451 = dma.vmem_to_hbm [thread:$0]  %s3449, 128, %s9, [#allocation4]
    $region41: #{sequence_encoder_forward.1} parent=1 // pred_fallthru
      _
    // Predicated region
    $region42: #{sequence_encoder_forward.1} parent=1 // pred_check
      _
    $region43: #{sequence_encoder_forward.1} parent=1 // pred_check_branch
      %3453 = sbr.rel (0) target = $region45
    $region44: #{sequence_encoder_forward.1} parent=1 // pred_region
      %s3455 = ssub.s32 128, 128
      %3456 = vsyncadd [#allocation6], %s3455
      %s3458 = sshll.u32 [#allocation5], 4
      %s3459 = int_to_ptr.vmem [resolvable:$true] %s3458
      %3461 = dma.vmem_to_hbm [thread:$0]  %s3459, 128, %s10, [#allocation6]
    $region45: #{sequence_encoder_forward.1} parent=1 // pred_fallthru
      _
    // Predicated region
    $region46: #{sequence_encoder_forward.1} parent=1 // pred_check
      _
    $region47: #{sequence_encoder_forward.1} parent=1 // pred_check_branch
      %3463 = sbr.rel (0) target = $region49
    $region48: #{sequence_encoder_forward.1} parent=1 // pred_region
      _
    $region49: #{sequence_encoder_forward.1} parent=1 // pred_fallthru
      _
    // Predicated region
    $region50: #{sequence_encoder_forward.1} parent=1 // pred_check
      _
    $region51: #{sequence_encoder_forward.1} parent=1 // pred_check_branch
      %3465 = sbr.rel (0) target = $region53
    $region52: #{sequence_encoder_forward.1} parent=1 // pred_region
      %3466 = dma.done [#allocation4], 128
    $region53: #{sequence_encoder_forward.1} parent=1 // pred_fallthru
      _
    // Predicated region
    $region54: #{sequence_encoder_forward.1} parent=1 // pred_check
      _
    $region55: #{sequence_encoder_forward.1} parent=1 // pred_check_branch
      %3468 = sbr.rel (0) target = $region57
    $region56: #{sequence_encoder_forward.1} parent=1 // pred_region
      %3469 = dma.done [#allocation6], 128
    $region57: #{sequence_encoder_forward.1} parent=1 // pred_fallthru
      _
    %3470 = vsyncpa [#allocation4], 1
    %3471 = vsyncpa [#allocation6], 1

</llo_original>
